<compile_context>
chip_gen: v7x
topology: tpu7x:2x2x1
jax: 0.10.0
libtpu: 0.0.40
codegen_flags: <defaults>
</compile_context>

<pallas_src>
import math
import jax
import jax.numpy as jnp
from jax.experimental import pallas as pl
from jax.experimental.pallas import tpu as pltpu

# ---- config (small, consistent with monfig: d_model % num_heads == 0) ------
D_MODEL = 32
NUM_HEADS = 4
HEAD_DIM = D_MODEL // NUM_HEADS
NUM_LAYERS = 8
EPS = 1e-5           # nn.LayerNorm default
DROPOUT_RATE = 0.0   # TODO(synk): dropout_rate is 0.0 in the config -> no-op.

# rows of the packed (NUM_ROWS, 128) f32 small-parameter slab
(ROW_N1G, ROW_N1B, ROW_N2G, ROW_N2B, ROW_N3G, ROW_N3B,
 ROW_BO_S, ROW_BO_C, ROW_FB1, ROW_FB2, NUM_ROWS) = range(11)
PACK_W = 128


def _gelu_tanh(x):
    # matches nn.GELU(approximate='tanh')
    c = 0.7978845608028654  # sqrt(2/pi)
    return 0.5 * x * (1.0 + jnp.tanh(c * (x + 0.044715 * x * x * x)))


# ============================ fused layer kernel =============================

def _make_kernel(*, Bg, T, Nc, D, H, hd, has_cond, has_mask, mask_per_batch):
    """Bg batch elements per grid step; all intermediates stay in VMEM/vregs."""

    def kernel(*refs):
        it = iter(refs)
        x_ref = next(it)                                   # (Bg*T, D) f32
        cond_ref = next(it) if has_cond else None          # (Bg*Nc, D) f32
        mask_ref = next(it) if has_mask else None          # (Bg|1, T, T) f32
        pk_ref = next(it)                                  # (NUM_ROWS, 128) f32
        wqkv_s_ref, bqkv_s_ref, wo_s_ref = next(it), next(it), next(it)
        if has_cond:
            wq_c_ref, bq_c_ref = next(it), next(it)
            wkv_c_ref, bkv_c_ref, wo_c_ref = next(it), next(it), next(it)
        w1_ref, w2_ref = next(it), next(it)
        o_ref = next(it)

        def row(i, width):                                 # (1, width) f32
            return pk_ref[i:i + 1, :width]

        def ln(x, ig, ib):
            mu = jnp.mean(x, axis=-1, keepdims=True)
            xc = x - mu
            var = jnp.mean(xc * xc, axis=-1, keepdims=True)  # biased, like torch
            return xc * jax.lax.rsqrt(var + EPS) * row(ig, D) + row(ib, D)

        def proj_heads(x_bf, w, b):
            # x_bf: (rows, D) bf16, w: (nb, D, hd) bf16, b: (nb, 1, hd) f32
            # head/qkv axis stays LEADING -> no lane slicing downstream.
            nb = w.shape[0]
            xb = jnp.broadcast_to(x_bf[None], (nb,) + x_bf.shape)
            y = jnp.einsum("std,sdk->stk", xb, w,
                           preferred_element_type=jnp.float32)
            return (y + b).astype(jnp.bfloat16)            # (nb, rows, hd)

        def mha(q, k, v, wo, bo, mask_b):
            # q: (H, T, hd) bf16 (scale pre-folded), k/v: (H, Nk, hd) bf16
            # wo: (H, hd, D) bf16, bo: (1, D) f32, mask_b: (T, Nk) f32 or None
            s = jnp.einsum("htd,hnd->htn", q, k,
                           preferred_element_type=jnp.float32)
            if mask_b is not None:
                s = s + mask_b                              # broadcast over H
            # one softmax pass for all heads of this batch element
            s = s - jnp.max(s, axis=-1, keepdims=True)
            p = jnp.exp(s)
            p = p * pl.reciprocal(jnp.sum(p, axis=-1, keepdims=True),
                                  approx=True)
            o = jnp.einsum("htn,hnd->htd", p.astype(jnp.bfloat16), v,
                           preferred_element_type=jnp.float32)
            y = jnp.einsum("htd,hde->hte", o.astype(jnp.bfloat16), wo,
                           preferred_element_type=jnp.float32)
            return jnp.sum(y, axis=0) + bo                  # (T, D) f32

        x = x_ref[...].astype(jnp.float32)                  # (Bg*T, D)

        # --- self-attention: pre-LN -> per-head QKV -> MHA -> +residual ------
        wqkv, bqkv = wqkv_s_ref[...], bqkv_s_ref[...]
        wo_s, bo_s = wo_s_ref[...], row(ROW_BO_S, D)
        h1 = ln(x, ROW_N1G, ROW_N1B).astype(jnp.bfloat16)
        outs = []
        for b in range(Bg):                                 # static, tiny
            xb = h1[b * T:(b + 1) * T, :]                   # sublane-aligned
            qkv = proj_heads(xb, wqkv, bqkv)                # (3H, T, hd)
            q, k, v = qkv[:H], qkv[H:2 * H], qkv[2 * H:]    # leading-axis split
            mb = None
            if has_mask:
                mb = mask_ref[b] if mask_per_batch else mask_ref[0]
            outs.append(mha(q, k, v, wo_s, bo_s, mb))
        att = outs[0] if Bg == 1 else jnp.concatenate(outs, axis=0)
        x = x + att

        # --- cross-attention: pre-LN(q) -> per-head Q / fused KV -> +residual
        if has_cond:
            cond = cond_ref[...].astype(jnp.bfloat16)       # (Bg*Nc, D)
            wq_c, bq_c = wq_c_ref[...], bq_c_ref[...]
            wkv_c, bkv_c = wkv_c_ref[...], bkv_c_ref[...]
            wo_c, bo_c = wo_c_ref[...], row(ROW_BO_C, D)
            h2 = ln(x, ROW_N2G, ROW_N2B).astype(jnp.bfloat16)
            outs = []
            for b in range(Bg):
                xb = h2[b * T:(b + 1) * T, :]
                cb = cond[b * Nc:(b + 1) * Nc, :]
                q = proj_heads(xb, wq_c, bq_c)              # (H, T, hd)
                kv = proj_heads(cb, wkv_c, bkv_c)           # (2H, Nc, hd)
                outs.append(mha(q, kv[:H], kv[H:], wo_c, bo_c, None))
            att = outs[0] if Bg == 1 else jnp.concatenate(outs, axis=0)
            x = x + att

        # --- FFN: pre-LN -> W1 + tanh-GELU -> W2 -> +residual ----------------
        h3 = ln(x, ROW_N3G, ROW_N3B).astype(jnp.bfloat16)
        z = jnp.dot(h3, w1_ref[...], preferred_element_type=jnp.float32)
        z = _gelu_tanh(z + row(ROW_FB1, 4 * D))             # (Bg*T, 4D) f32
        y = jnp.dot(z.astype(jnp.bfloat16), w2_ref[...],
                    preferred_element_type=jnp.float32)
        x = x + y + row(ROW_FB2, D)

        o_ref[...] = x.astype(o_ref.dtype)

    return kernel


# ======================= one-time parameter preparation ======================

def prepare_params(p):
    """Prepare parameters ONCE (per review): bf16 MXU weights with the head
    axis leading, per-head biases, 1/sqrt(hd) folded into the Q projection,
    and all tiny vectors packed into one (NUM_ROWS, 128) f32 slab."""
    D, H, hd = D_MODEL, NUM_HEADS, HEAD_DIM
    scale = 1.0 / math.sqrt(hd)

    def heads_in(w):        # (D, D) -> (H, D, hd)   [out col h*hd+e -> [h,:,e]]
        return w.reshape(D, H, hd).transpose(1, 0, 2)

    def heads_bias(b):      # (D,)   -> (H, 1, hd)
        return b.reshape(H, 1, hd)

    def heads_out(w):       # (D, D) -> (H, hd, D)   [in row h*hd+d -> [h,d,:]]
        return w.reshape(H, hd, D)

    sa, ca = p["satt"], p["catt"]
    wq, wk, wv = jnp.split(sa["wqkv"], 3, axis=1)
    bq, bk, bv = jnp.split(sa["bqkv"], 3)
    wqkv_s = jnp.concatenate([heads_in(wq) * scale, heads_in(wk), heads_in(wv)],
                             axis=0)                        # (3H, D, hd)
    bqkv_s = jnp.concatenate([heads_bias(bq) * scale, heads_bias(bk),
                              heads_bias(bv)], axis=0)      # (3H, 1, hd)

    wkc, wvc = jnp.split(ca["wkv"], 2, axis=1)
    bkc, bvc = jnp.split(ca["bkv"], 2)
    wq_c = heads_in(ca["wq"]) * scale                       # (H, D, hd)
    bq_c = heads_bias(ca["bq"]) * scale                     # (H, 1, hd)
    wkv_c = jnp.concatenate([heads_in(wkc), heads_in(wvc)], axis=0)
    bkv_c = jnp.concatenate([heads_bias(bkc), heads_bias(bvc)], axis=0)

    def pad_row(v):
        v = jnp.asarray(v, jnp.float32).reshape(-1)
        return jnp.pad(v, (0, PACK_W - v.shape[0]))

    rows = [None] * NUM_ROWS
    rows[ROW_N1G] = pad_row(p["norm1_g"]); rows[ROW_N1B] = pad_row(p["norm1_b"])
    rows[ROW_N2G] = pad_row(p["norm2_g"]); rows[ROW_N2B] = pad_row(p["norm2_b"])
    rows[ROW_N3G] = pad_row(p["norm3_g"]); rows[ROW_N3B] = pad_row(p["norm3_b"])
    rows[ROW_BO_S] = pad_row(sa["bo"]);    rows[ROW_BO_C] = pad_row(ca["bo"])
    rows[ROW_FB1] = pad_row(p["ffn_b1"]);  rows[ROW_FB2] = pad_row(p["ffn_b2"])

    bf = jnp.bfloat16
    return {
        "packed": jnp.stack(rows),                          # (NUM_ROWS, 128) f32
        "wqkv_s": wqkv_s.astype(bf), "bqkv_s": bqkv_s.astype(jnp.float32),
        "wo_s": heads_out(sa["wo"]).astype(bf),
        "wq_c": wq_c.astype(bf), "bq_c": bq_c.astype(jnp.float32),
        "wkv_c": wkv_c.astype(bf), "bkv_c": bkv_c.astype(jnp.float32),
        "wo_c": heads_out(ca["wo"]).astype(bf),
        "ffn_w1": p["ffn_w1"].astype(bf), "ffn_w2": p["ffn_w2"].astype(bf),
    }


# ============================ module wrapper =================================

def transformer_layer(xrc, conditioning_tensor, xrc_att_mask, prep, *,
                      batch_shards=1):
    """One TransformerLayer forward as a single fused pallas_call.

    batch_shards: grid size over the batch.  Keep 1 on single-TensorCore chips
    (v5e / v6e); set 2 on v7x so both TensorCores each take half the batch.
    # TODO(synk): at production sequence lengths, switch self-attention to a
    # flash (online-softmax) KV-tiled form; re-derive tile sizes for v7x's
    # 64 MiB VMEM (BlockSpec double-buffers every input).
    """
    B, T, D = xrc.shape
    assert D == D_MODEL
    G = batch_shards
    assert B % G == 0
    Bg = B // G
    has_cond = conditioning_tensor is not None
    has_mask = xrc_att_mask is not None

    inputs, in_specs = [], []

    def add(a, spec):
        inputs.append(a)
        in_specs.append(spec)

    def rep(a):  # replicated (weight) input: full block, constant index map
        nd = a.ndim
        return pl.BlockSpec(a.shape, lambda g: (0,) * nd)

    add(xrc.reshape(B * T, D).astype(jnp.float32),
        pl.BlockSpec((Bg * T, D), lambda g: (g, 0)))

    Nc = T
    if has_cond:
        Nc = conditioning_tensor.shape[1]
        add(conditioning_tensor.reshape(B * Nc, D).astype(jnp.float32),
            pl.BlockSpec((Bg * Nc, D), lambda g: (g, 0)))

    mask_per_batch = False
    if has_mask:
        m = xrc_att_mask
        if m.ndim == 2:
            m = m[None, None]
        # TODO(synk): only head-invariant additive float masks (B|1, 1, T, T)
        # are supported (the module's banded window mask is head-invariant).
        assert m.ndim == 4 and m.shape[1] == 1
        m = m[:, 0].astype(jnp.float32)                      # (Bm, T, T)
        mask_per_batch = m.shape[0] > 1
        if mask_per_batch:
            assert m.shape[0] == B
            add(m, pl.BlockSpec((Bg, T, m.shape[-1]), lambda g: (g, 0, 0)))
        else:
            add(m, pl.BlockSpec((1, T, m.shape[-1]), lambda g: (0, 0, 0)))

    add(prep["packed"], rep(prep["packed"]))
    for name in ("wqkv_s", "bqkv_s", "wo_s"):
        add(prep[name], rep(prep[name]))
    if has_cond:
        for name in ("wq_c", "bq_c", "wkv_c", "bkv_c", "wo_c"):
            add(prep[name], rep(prep[name]))
    for name in ("ffn_w1", "ffn_w2"):
        add(prep[name], rep(prep[name]))

    kernel = _make_kernel(Bg=Bg, T=T, Nc=Nc, D=D, H=NUM_HEADS, hd=HEAD_DIM,
                          has_cond=has_cond, has_mask=has_mask,
                          mask_per_batch=mask_per_batch)

    out = pl.pallas_call(
        kernel,
        out_shape=jax.ShapeDtypeStruct((B * T, D), xrc.dtype),
        grid=(G,),
        in_specs=in_specs,
        out_specs=pl.BlockSpec((Bg * T, D), lambda g: (g, 0)),
        compiler_params=pltpu.CompilerParams(
            dimension_semantics=("parallel",)),
    )(*inputs)
    return out.reshape(B, T, D)        # wrapper reshape: free (contiguous)


# ============================ pure-JAX reference =============================

def _ref_ln(x, g, b):
    m = x.mean(-1, keepdims=True)
    v = ((x - m) ** 2).mean(-1, keepdims=True)
    return (x - m) / jnp.sqrt(v + EPS) * g + b


def _ref_attn(x_q, x_kv, wq, bq, wk, bk, wv, bv, wo, bo, mask):
    q = x_q @ wq + bq
    k = x_kv @ wk + bk
    v = x_kv @ wv + bv
    B, T, D = q.shape
    N = k.shape[1]
    qh = q.reshape(B, T, NUM_HEADS, HEAD_DIM).transpose(0, 2, 1, 3)
    kh = k.reshape(B, N, NUM_HEADS, HEAD_DIM).transpose(0, 2, 1, 3)
    vh = v.reshape(B, N, NUM_HEADS, HEAD_DIM).transpose(0, 2, 1, 3)
    s = jnp.einsum("bhtd,bhnd->bhtn", qh, kh) / math.sqrt(HEAD_DIM)
    if mask is not None:
        s = s + mask
    pw = jax.nn.softmax(s, axis=-1)
    att = jnp.einsum("bhtn,bhnd->bhtd", pw, vh)
    att = att.transpose(0, 2, 1, 3).reshape(B, T, D)
    return att @ wo + bo


def ref_transformer_layer(xrc, cond, mask, p):
    sa = p["satt"]
    wq, wk, wv = jnp.split(sa["wqkv"], 3, axis=1)
    bq, bk, bv = jnp.split(sa["bqkv"], 3)
    s_in = _ref_ln(xrc, p["norm1_g"], p["norm1_b"])
    xrc = xrc + _ref_attn(s_in, s_in, wq, bq, wk, bk, wv, bv,
                          sa["wo"], sa["bo"], mask)
    if cond is not None:
        ca = p["catt"]
        wkc, wvc = jnp.split(ca["wkv"], 2, axis=1)
        bkc, bvc = jnp.split(ca["bkv"], 2)
        c_in = _ref_ln(xrc, p["norm2_g"], p["norm2_b"])
        xrc = xrc + _ref_attn(c_in, cond, ca["wq"], ca["bq"], wkc, bkc,
                              wvc, bvc, ca["wo"], ca["bo"], None)
    y = _ref_ln(xrc, p["norm3_g"], p["norm3_b"])
    h = jax.nn.gelu(y @ p["ffn_w1"] + p["ffn_b1"], approximate=True)
    return xrc + (h @ p["ffn_w2"] + p["ffn_b2"])


# =============================== params ======================================

def init_params(key):
    ks = jax.random.split(key, 8)
    scale = 0.02
    res_scale = NUM_LAYERS ** (-0.5)  # RESIDUAL_CONNECTION_SPECIAL_INIT

    def w(k, shape, s=scale):
        return jax.random.normal(k, shape, jnp.float32) * s

    satt = {
        "wqkv": w(ks[0], (D_MODEL, 3 * D_MODEL)),          # fused Wq|Wk|Wv
        "bqkv": jnp.zeros((3 * D_MODEL,), jnp.float32),
        "wo": w(ks[1], (D_MODEL, D_MODEL)) * res_scale,
        "bo": jnp.zeros((D_MODEL,), jnp.float32),
    }
    catt = {
        "wq": w(ks[2], (D_MODEL, D_MODEL)),
        "bq": jnp.zeros((D_MODEL,), jnp.float32),
        "wkv": w(ks[3], (D_MODEL, 2 * D_MODEL)),           # fused Wk|Wv
        "bkv": jnp.zeros((2 * D_MODEL,), jnp.float32),
        "wo": w(ks[4], (D_MODEL, D_MODEL)) * res_scale,
        "bo": jnp.zeros((D_MODEL,), jnp.float32),
    }
    return {
        "norm1_g": jnp.ones((D_MODEL,), jnp.float32),
        "norm1_b": jnp.zeros((D_MODEL,), jnp.float32),
        "norm2_g": jnp.ones((D_MODEL,), jnp.float32),
        "norm2_b": jnp.zeros((D_MODEL,), jnp.float32),
        "norm3_g": jnp.ones((D_MODEL,), jnp.float32),
        "norm3_b": jnp.zeros((D_MODEL,), jnp.float32),
        "satt": satt,
        "catt": catt,
        "ffn_w1": w(ks[5], (D_MODEL, 4 * D_MODEL)),
        "ffn_b1": jnp.zeros((4 * D_MODEL,), jnp.float32),
        "ffn_w2": w(ks[6], (4 * D_MODEL, D_MODEL)) * res_scale,
        "ffn_b2": jnp.zeros((D_MODEL,), jnp.float32),
    }


# ================================ main =======================================

if __name__ == "__main__":
    key = jax.random.PRNGKey(0)
    kx, kc, kp = jax.random.split(key, 3)

    B, T, N = 2, 8, 8
    xrc = jax.random.normal(kx, (B, T, D_MODEL), jnp.float32)
    cond = jax.random.normal(kc, (B, N, D_MODEL), jnp.float32)

    # banded additive float mask (attn_window = 5 -> |i-j| <= 2), (B, 1, T, T)
    idx = jnp.arange(T)
    band = jnp.abs(idx[:, None] - idx[None, :]) <= 2
    mask2d = jnp.where(band, 0.0, -1e9).astype(jnp.float32)
    xrc_att_mask = jnp.broadcast_to(mask2d, (B, 1, T, T))

    params = init_params(kp)
    prep = prepare_params(params)   # one-time prep: bf16 / head-major / packed

    out = transformer_layer(xrc, cond, xrc_att_mask, prep, batch_shards=1)
    out = jax.block_until_ready(out)

    ref = ref_transformer_layer(xrc, cond, xrc_att_mask, params)
    assert out.shape == (B, T, D_MODEL)
    max_err = float(jnp.max(jnp.abs(out - ref)))
    assert jnp.allclose(out, ref, atol=2e-3, rtol=2e-3), \
        f"mismatch vs JAX reference (max abs err {max_err})"

    print("KERNEL_OK")
</pallas_src>

<mosaic_0001>
module attributes {stable_mosaic.version = 11 : i64} {
  func.func @kernel(%arg0: i32, %arg1: memref<16x32xf32, #tpu.memory_space<vmem>>, %arg2: memref<16x32xf32, #tpu.memory_space<vmem>>, %arg3: memref<2x8x8xf32, #tpu.memory_space<vmem>>, %arg4: memref<10x128xf32, #tpu.memory_space<vmem>>, %arg5: memref<12x32x8xbf16, #tpu.memory_space<vmem>>, %arg6: memref<12x1x8xf32, #tpu.memory_space<vmem>>, %arg7: memref<4x8x32xbf16, #tpu.memory_space<vmem>>, %arg8: memref<4x32x8xbf16, #tpu.memory_space<vmem>>, %arg9: memref<4x1x8xf32, #tpu.memory_space<vmem>>, %arg10: memref<8x32x8xbf16, #tpu.memory_space<vmem>>, %arg11: memref<8x1x8xf32, #tpu.memory_space<vmem>>, %arg12: memref<4x8x32xbf16, #tpu.memory_space<vmem>>, %arg13: memref<32x128xbf16, #tpu.memory_space<vmem>>, %arg14: memref<128x32xbf16, #tpu.memory_space<vmem>>, %arg15: memref<16x32xf32, #tpu.memory_space<vmem>>) attributes {dimension_semantics = [#tpu.dimension_semantics<parallel>], iteration_bounds = array<i64: 1>, scalar_prefetch = 0 : i64, scratch_operands = 0 : i64, tpu.core_type = #tpu.core_type<tc>, window_params = [{transform_indices = @transform_0, window_bounds = array<i64: 16, 32>}, {transform_indices = @transform_1, window_bounds = array<i64: 16, 32>}, {transform_indices = @transform_2, window_bounds = array<i64: 2, 8, 8>}, {pipeline_mode = #tpu.pipeline_mode<synchronous>, transform_indices = @transform_3, window_bounds = array<i64: 10, 128>}, {pipeline_mode = #tpu.pipeline_mode<synchronous>, transform_indices = @transform_4, window_bounds = array<i64: 12, 32, 8>}, {pipeline_mode = #tpu.pipeline_mode<synchronous>, transform_indices = @transform_5, window_bounds = array<i64: 12, 1, 8>}, {pipeline_mode = #tpu.pipeline_mode<synchronous>, transform_indices = @transform_6, window_bounds = array<i64: 4, 8, 32>}, {pipeline_mode = #tpu.pipeline_mode<synchronous>, transform_indices = @transform_7, window_bounds = array<i64: 4, 32, 8>}, {pipeline_mode = #tpu.pipeline_mode<synchronous>, transform_indices = @transform_8, window_bounds = array<i64: 4, 1, 8>}, {pipeline_mode = #tpu.pipeline_mode<synchronous>, transform_indices = @transform_9, window_bounds = array<i64: 8, 32, 8>}, {pipeline_mode = #tpu.pipeline_mode<synchronous>, transform_indices = @transform_10, window_bounds = array<i64: 8, 1, 8>}, {pipeline_mode = #tpu.pipeline_mode<synchronous>, transform_indices = @transform_11, window_bounds = array<i64: 4, 8, 32>}, {pipeline_mode = #tpu.pipeline_mode<synchronous>, transform_indices = @transform_12, window_bounds = array<i64: 32, 128>}, {pipeline_mode = #tpu.pipeline_mode<synchronous>, transform_indices = @transform_13, window_bounds = array<i64: 128, 32>}, {transform_indices = @transform_14, window_bounds = array<i64: 16, 32>}]} {
    %c0 = arith.constant 0 : index
    %c0_0 = arith.constant 0 : index
    %0 = vector.load %arg1[%c0, %c0_0] : memref<16x32xf32, #tpu.memory_space<vmem>>, vector<16x32xf32>
    %c0_1 = arith.constant 0 : index
    %c0_2 = arith.constant 0 : index
    %c0_3 = arith.constant 0 : index
    %1 = vector.load %arg5[%c0_1, %c0_2, %c0_3] : memref<12x32x8xbf16, #tpu.memory_space<vmem>>, vector<12x32x8xbf16>
    %c0_4 = arith.constant 0 : index
    %c0_5 = arith.constant 0 : index
    %c0_6 = arith.constant 0 : index
    %2 = vector.load %arg6[%c0_4, %c0_5, %c0_6] : memref<12x1x8xf32, #tpu.memory_space<vmem>>, vector<12x1x8xf32>
    %c0_7 = arith.constant 0 : index
    %c0_8 = arith.constant 0 : index
    %c0_9 = arith.constant 0 : index
    %3 = vector.load %arg7[%c0_7, %c0_8, %c0_9] : memref<4x8x32xbf16, #tpu.memory_space<vmem>>, vector<4x8x32xbf16>
    %c6 = arith.constant 6 : index
    %c0_10 = arith.constant 0 : index
    %4 = vector.load %arg4[%c6, %c0_10] : memref<10x128xf32, #tpu.memory_space<vmem>>, vector<1x32xf32>
    %cst = arith.constant dense<0.000000e+00> : vector<16xf32>
    %5 = vector.multi_reduction <add>, %0, %cst [1] : vector<16x32xf32> to vector<16xf32>
    %6 = vector.shape_cast %5 : vector<16xf32> to vector<16x1xf32>
    %cst_11 = arith.constant 3.200000e+01 : f32
    %7 = vector.broadcast %cst_11 : f32 to vector<16x1xf32>
    %8 = arith.divf %6, %7 : vector<16x1xf32>
    %9 = vector.broadcast %8 : vector<16x1xf32> to vector<16x32xf32>
    %10 = arith.subf %0, %9 : vector<16x32xf32>
    %11 = arith.mulf %10, %10 : vector<16x32xf32>
    %cst_12 = arith.constant dense<0.000000e+00> : vector<16xf32>
    %12 = vector.multi_reduction <add>, %11, %cst_12 [1] : vector<16x32xf32> to vector<16xf32>
    %13 = vector.shape_cast %12 : vector<16xf32> to vector<16x1xf32>
    %cst_13 = arith.constant 3.200000e+01 : f32
    %14 = vector.broadcast %cst_13 : f32 to vector<16x1xf32>
    %15 = arith.divf %13, %14 : vector<16x1xf32>
    %cst_14 = arith.constant 9.99999974E-6 : f32
    %16 = vector.broadcast %cst_14 : f32 to vector<16x1xf32>
    %17 = arith.addf %15, %16 : vector<16x1xf32>
    %18 = math.rsqrt %17 : vector<16x1xf32>
    %19 = vector.broadcast %18 : vector<16x1xf32> to vector<16x32xf32>
    %20 = arith.mulf %10, %19 : vector<16x32xf32>
    %c0_15 = arith.constant 0 : index
    %c0_16 = arith.constant 0 : index
    %21 = vector.load %arg4[%c0_15, %c0_16] : memref<10x128xf32, #tpu.memory_space<vmem>>, vector<1x32xf32>
    %22 = vector.broadcast %21 : vector<1x32xf32> to vector<16x32xf32>
    %23 = arith.mulf %20, %22 : vector<16x32xf32>
    %c1 = arith.constant 1 : index
    %c0_17 = arith.constant 0 : index
    %24 = vector.load %arg4[%c1, %c0_17] : memref<10x128xf32, #tpu.memory_space<vmem>>, vector<1x32xf32>
    %25 = vector.broadcast %24 : vector<1x32xf32> to vector<16x32xf32>
    %26 = arith.addf %23, %25 : vector<16x32xf32>
    %27 = arith.truncf %26 : vector<16x32xf32> to vector<16x32xbf16>
    %28 = vector.extract_strided_slice %27 {offsets = [0, 0], sizes = [8, 32], strides = [1, 1]} : vector<16x32xbf16> to vector<8x32xbf16>
    %29 = vector.shape_cast %28 : vector<8x32xbf16> to vector<1x8x32xbf16>
    %30 = vector.shape_cast %29 : vector<1x8x32xbf16> to vector<1x8x32xbf16>
    %31 = vector.broadcast %30 : vector<1x8x32xbf16> to vector<12x8x32xbf16>
    "tpu.trace_start"() <{level = 10 : i32, message = "std,sdk->stk"}> : () -> ()
    %cst_18 = arith.constant dense<0.000000e+00> : vector<12x8x8xf32>
    %32 = tpu.matmul %31, %1, %cst_18 {dimension_numbers = #tpu.dot_dimension_numbers<[2], [1], [1], [2], [0, 0, 0, 1, 1, 2], [0], [0]>} : vector<12x8x32xbf16>, vector<12x32x8xbf16>, vector<12x8x8xf32> -> vector<12x8x8xf32>
    "tpu.trace_stop"() : () -> ()
    %33 = vector.broadcast %2 : vector<12x1x8xf32> to vector<12x8x8xf32>
    %34 = arith.addf %32, %33 : vector<12x8x8xf32>
    %35 = arith.truncf %34 : vector<12x8x8xf32> to vector<12x8x8xbf16>
    %36 = vector.extract_strided_slice %35 {offsets = [0, 0, 0], sizes = [4, 8, 8], strides = [1, 1, 1]} : vector<12x8x8xbf16> to vector<4x8x8xbf16>
    %37 = vector.extract_strided_slice %35 {offsets = [4, 0, 0], sizes = [4, 8, 8], strides = [1, 1, 1]} : vector<12x8x8xbf16> to vector<4x8x8xbf16>
    %38 = vector.extract_strided_slice %35 {offsets = [8, 0, 0], sizes = [4, 8, 8], strides = [1, 1, 1]} : vector<12x8x8xbf16> to vector<4x8x8xbf16>
    %c0_19 = arith.constant 0 : index
    %c0_20 = arith.constant 0 : index
    %c0_21 = arith.constant 0 : index
    %39 = vector.load %arg3[%c0_19, %c0_20, %c0_21] : memref<2x8x8xf32, #tpu.memory_space<vmem>>, vector<1x8x8xf32>
    %40 = vector.shape_cast %39 : vector<1x8x8xf32> to vector<8x8xf32>
    "tpu.trace_start"() <{level = 10 : i32, message = "htd,hnd->htn"}> : () -> ()
    %cst_22 = arith.constant dense<0.000000e+00> : vector<4x8x8xf32>
    %41 = tpu.matmul %36, %37, %cst_22 {dimension_numbers = #tpu.dot_dimension_numbers<[2], [2], [1], [1], [0, 0, 0, 1, 1, 1], [0], [0]>} : vector<4x8x8xbf16>, vector<4x8x8xbf16>, vector<4x8x8xf32> -> vector<4x8x8xf32>
    "tpu.trace_stop"() : () -> ()
    %42 = vector.shape_cast %40 : vector<8x8xf32> to vector<1x8x8xf32>
    %43 = vector.broadcast %42 : vector<1x8x8xf32> to vector<4x8x8xf32>
    %44 = arith.addf %41, %43 : vector<4x8x8xf32>
    %cst_23 = arith.constant dense<0xFF800000> : vector<4x8xf32>
    %45 = vector.multi_reduction <maximumf>, %44, %cst_23 [2] : vector<4x8x8xf32> to vector<4x8xf32>
    %46 = vector.shape_cast %45 : vector<4x8xf32> to vector<4x8x1xf32>
    %47 = vector.broadcast %46 : vector<4x8x1xf32> to vector<4x8x8xf32>
    %48 = arith.subf %44, %47 : vector<4x8x8xf32>
    %49 = math.exp %48 : vector<4x8x8xf32>
    %cst_24 = arith.constant dense<0.000000e+00> : vector<4x8xf32>
    %50 = vector.multi_reduction <add>, %49, %cst_24 [2] : vector<4x8x8xf32> to vector<4x8xf32>
    %51 = vector.shape_cast %50 : vector<4x8xf32> to vector<4x8x1xf32>
    %52 = tpu.reciprocal %51 {approx = true} : vector<4x8x1xf32> -> vector<4x8x1xf32>
    %53 = vector.broadcast %52 : vector<4x8x1xf32> to vector<4x8x8xf32>
    %54 = arith.mulf %49, %53 : vector<4x8x8xf32>
    %55 = arith.truncf %54 : vector<4x8x8xf32> to vector<4x8x8xbf16>
    "tpu.trace_start"() <{level = 10 : i32, message = "htn,hnd->htd"}> : () -> ()
    %cst_25 = arith.constant dense<0.000000e+00> : vector<4x8x8xf32>
    %56 = tpu.matmul %55, %38, %cst_25 {dimension_numbers = #tpu.dot_dimension_numbers<[2], [1], [1], [2], [0, 0, 0, 1, 1, 2], [0], [0]>} : vector<4x8x8xbf16>, vector<4x8x8xbf16>, vector<4x8x8xf32> -> vector<4x8x8xf32>
    "tpu.trace_stop"() : () -> ()
    %57 = arith.truncf %56 : vector<4x8x8xf32> to vector<4x8x8xbf16>
    "tpu.trace_start"() <{level = 10 : i32, message = "htd,hde->hte"}> : () -> ()
    %cst_26 = arith.constant dense<0.000000e+00> : vector<4x8x32xf32>
    %58 = tpu.matmul %57, %3, %cst_26 {dimension_numbers = #tpu.dot_dimension_numbers<[2], [1], [1], [2], [0, 0, 0, 1, 1, 2], [0], [0]>} : vector<4x8x8xbf16>, vector<4x8x32xbf16>, vector<4x8x32xf32> -> vector<4x8x32xf32>
    "tpu.trace_stop"() : () -> ()
    %cst_27 = arith.constant dense<0.000000e+00> : vector<8x32xf32>
    %59 = vector.multi_reduction <add>, %58, %cst_27 [0] : vector<4x8x32xf32> to vector<8x32xf32>
    %60 = vector.broadcast %4 : vector<1x32xf32> to vector<8x32xf32>
    %61 = arith.addf %59, %60 : vector<8x32xf32>
    %62 = vector.extract_strided_slice %27 {offsets = [8, 0], sizes = [8, 32], strides = [1, 1]} : vector<16x32xbf16> to vector<8x32xbf16>
    %63 = vector.shape_cast %62 : vector<8x32xbf16> to vector<1x8x32xbf16>
    %64 = vector.shape_cast %63 : vector<1x8x32xbf16> to vector<1x8x32xbf16>
    %65 = vector.broadcast %64 : vector<1x8x32xbf16> to vector<12x8x32xbf16>
    "tpu.trace_start"() <{level = 10 : i32, message = "std,sdk->stk"}> : () -> ()
    %cst_28 = arith.constant dense<0.000000e+00> : vector<12x8x8xf32>
    %66 = tpu.matmul %65, %1, %cst_28 {dimension_numbers = #tpu.dot_dimension_numbers<[2], [1], [1], [2], [0, 0, 0, 1, 1, 2], [0], [0]>} : vector<12x8x32xbf16>, vector<12x32x8xbf16>, vector<12x8x8xf32> -> vector<12x8x8xf32>
    "tpu.trace_stop"() : () -> ()
    %67 = vector.broadcast %2 : vector<12x1x8xf32> to vector<12x8x8xf32>
    %68 = arith.addf %66, %67 : vector<12x8x8xf32>
    %69 = arith.truncf %68 : vector<12x8x8xf32> to vector<12x8x8xbf16>
    %70 = vector.extract_strided_slice %69 {offsets = [0, 0, 0], sizes = [4, 8, 8], strides = [1, 1, 1]} : vector<12x8x8xbf16> to vector<4x8x8xbf16>
    %71 = vector.extract_strided_slice %69 {offsets = [4, 0, 0], sizes = [4, 8, 8], strides = [1, 1, 1]} : vector<12x8x8xbf16> to vector<4x8x8xbf16>
    %72 = vector.extract_strided_slice %69 {offsets = [8, 0, 0], sizes = [4, 8, 8], strides = [1, 1, 1]} : vector<12x8x8xbf16> to vector<4x8x8xbf16>
    %c1_29 = arith.constant 1 : index
    %c0_30 = arith.constant 0 : index
    %c0_31 = arith.constant 0 : index
    %73 = vector.load %arg3[%c1_29, %c0_30, %c0_31] : memref<2x8x8xf32, #tpu.memory_space<vmem>>, vector<1x8x8xf32>
    %74 = vector.shape_cast %73 : vector<1x8x8xf32> to vector<8x8xf32>
    "tpu.trace_start"() <{level = 10 : i32, message = "htd,hnd->htn"}> : () -> ()
    %cst_32 = arith.constant dense<0.000000e+00> : vector<4x8x8xf32>
    %75 = tpu.matmul %70, %71, %cst_32 {dimension_numbers = #tpu.dot_dimension_numbers<[2], [2], [1], [1], [0, 0, 0, 1, 1, 1], [0], [0]>} : vector<4x8x8xbf16>, vector<4x8x8xbf16>, vector<4x8x8xf32> -> vector<4x8x8xf32>
    "tpu.trace_stop"() : () -> ()
    %76 = vector.shape_cast %74 : vector<8x8xf32> to vector<1x8x8xf32>
    %77 = vector.broadcast %76 : vector<1x8x8xf32> to vector<4x8x8xf32>
    %78 = arith.addf %75, %77 : vector<4x8x8xf32>
    %cst_33 = arith.constant dense<0xFF800000> : vector<4x8xf32>
    %79 = vector.multi_reduction <maximumf>, %78, %cst_33 [2] : vector<4x8x8xf32> to vector<4x8xf32>
    %80 = vector.shape_cast %79 : vector<4x8xf32> to vector<4x8x1xf32>
    %81 = vector.broadcast %80 : vector<4x8x1xf32> to vector<4x8x8xf32>
    %82 = arith.subf %78, %81 : vector<4x8x8xf32>
    %83 = math.exp %82 : vector<4x8x8xf32>
    %cst_34 = arith.constant dense<0.000000e+00> : vector<4x8xf32>
    %84 = vector.multi_reduction <add>, %83, %cst_34 [2] : vector<4x8x8xf32> to vector<4x8xf32>
    %85 = vector.shape_cast %84 : vector<4x8xf32> to vector<4x8x1xf32>
    %86 = tpu.reciprocal %85 {approx = true} : vector<4x8x1xf32> -> vector<4x8x1xf32>
    %87 = vector.broadcast %86 : vector<4x8x1xf32> to vector<4x8x8xf32>
    %88 = arith.mulf %83, %87 : vector<4x8x8xf32>
    %89 = arith.truncf %88 : vector<4x8x8xf32> to vector<4x8x8xbf16>
    "tpu.trace_start"() <{level = 10 : i32, message = "htn,hnd->htd"}> : () -> ()
    %cst_35 = arith.constant dense<0.000000e+00> : vector<4x8x8xf32>
    %90 = tpu.matmul %89, %72, %cst_35 {dimension_numbers = #tpu.dot_dimension_numbers<[2], [1], [1], [2], [0, 0, 0, 1, 1, 2], [0], [0]>} : vector<4x8x8xbf16>, vector<4x8x8xbf16>, vector<4x8x8xf32> -> vector<4x8x8xf32>
    "tpu.trace_stop"() : () -> ()
    %91 = arith.truncf %90 : vector<4x8x8xf32> to vector<4x8x8xbf16>
    "tpu.trace_start"() <{level = 10 : i32, message = "htd,hde->hte"}> : () -> ()
    %cst_36 = arith.constant dense<0.000000e+00> : vector<4x8x32xf32>
    %92 = tpu.matmul %91, %3, %cst_36 {dimension_numbers = #tpu.dot_dimension_numbers<[2], [1], [1], [2], [0, 0, 0, 1, 1, 2], [0], [0]>} : vector<4x8x8xbf16>, vector<4x8x32xbf16>, vector<4x8x32xf32> -> vector<4x8x32xf32>
    "tpu.trace_stop"() : () -> ()
    %cst_37 = arith.constant dense<0.000000e+00> : vector<8x32xf32>
    %93 = vector.multi_reduction <add>, %92, %cst_37 [0] : vector<4x8x32xf32> to vector<8x32xf32>
    %94 = vector.broadcast %4 : vector<1x32xf32> to vector<8x32xf32>
    %95 = arith.addf %93, %94 : vector<8x32xf32>
    %96 = tpu.concatenate %61, %95 in 0 : vector<8x32xf32>, vector<8x32xf32> -> vector<16x32xf32>
    %97 = arith.addf %0, %96 : vector<16x32xf32>
    %c0_38 = arith.constant 0 : index
    %c0_39 = arith.constant 0 : index
    %98 = vector.load %arg2[%c0_38, %c0_39] : memref<16x32xf32, #tpu.memory_space<vmem>>, vector<16x32xf32>
    %99 = arith.truncf %98 : vector<16x32xf32> to vector<16x32xbf16>
    %c0_40 = arith.constant 0 : index
    %c0_41 = arith.constant 0 : index
    %c0_42 = arith.constant 0 : index
    %100 = vector.load %arg8[%c0_40, %c0_41, %c0_42] : memref<4x32x8xbf16, #tpu.memory_space<vmem>>, vector<4x32x8xbf16>
    %c0_43 = arith.constant 0 : index
    %c0_44 = arith.constant 0 : index
    %c0_45 = arith.constant 0 : index
    %101 = vector.load %arg9[%c0_43, %c0_44, %c0_45] : memref<4x1x8xf32, #tpu.memory_space<vmem>>, vector<4x1x8xf32>
    %c0_46 = arith.constant 0 : index
    %c0_47 = arith.constant 0 : index
    %c0_48 = arith.constant 0 : index
    %102 = vector.load %arg10[%c0_46, %c0_47, %c0_48] : memref<8x32x8xbf16, #tpu.memory_space<vmem>>, vector<8x32x8xbf16>
    %c0_49 = arith.constant 0 : index
    %c0_50 = arith.constant 0 : index
    %c0_51 = arith.constant 0 : index
    %103 = vector.load %arg11[%c0_49, %c0_50, %c0_51] : memref<8x1x8xf32, #tpu.memory_space<vmem>>, vector<8x1x8xf32>
    %c0_52 = arith.constant 0 : index
    %c0_53 = arith.constant 0 : index
    %c0_54 = arith.constant 0 : index
    %104 = vector.load %arg12[%c0_52, %c0_53, %c0_54] : memref<4x8x32xbf16, #tpu.memory_space<vmem>>, vector<4x8x32xbf16>
    %c7 = arith.constant 7 : index
    %c0_55 = arith.constant 0 : index
    %105 = vector.load %arg4[%c7, %c0_55] : memref<10x128xf32, #tpu.memory_space<vmem>>, vector<1x32xf32>
    %cst_56 = arith.constant dense<0.000000e+00> : vector<16xf32>
    %106 = vector.multi_reduction <add>, %97, %cst_56 [1] : vector<16x32xf32> to vector<16xf32>
    %107 = vector.shape_cast %106 : vector<16xf32> to vector<16x1xf32>
    %cst_57 = arith.constant 3.200000e+01 : f32
    %108 = vector.broadcast %cst_57 : f32 to vector<16x1xf32>
    %109 = arith.divf %107, %108 : vector<16x1xf32>
    %110 = vector.broadcast %109 : vector<16x1xf32> to vector<16x32xf32>
    %111 = arith.subf %97, %110 : vector<16x32xf32>
    %112 = arith.mulf %111, %111 : vector<16x32xf32>
    %cst_58 = arith.constant dense<0.000000e+00> : vector<16xf32>
    %113 = vector.multi_reduction <add>, %112, %cst_58 [1] : vector<16x32xf32> to vector<16xf32>
    %114 = vector.shape_cast %113 : vector<16xf32> to vector<16x1xf32>
    %cst_59 = arith.constant 3.200000e+01 : f32
    %115 = vector.broadcast %cst_59 : f32 to vector<16x1xf32>
    %116 = arith.divf %114, %115 : vector<16x1xf32>
    %cst_60 = arith.constant 9.99999974E-6 : f32
    %117 = vector.broadcast %cst_60 : f32 to vector<16x1xf32>
    %118 = arith.addf %116, %117 : vector<16x1xf32>
    %119 = math.rsqrt %118 : vector<16x1xf32>
    %120 = vector.broadcast %119 : vector<16x1xf32> to vector<16x32xf32>
    %121 = arith.mulf %111, %120 : vector<16x32xf32>
    %c2 = arith.constant 2 : index
    %c0_61 = arith.constant 0 : index
    %122 = vector.load %arg4[%c2, %c0_61] : memref<10x128xf32, #tpu.memory_space<vmem>>, vector<1x32xf32>
    %123 = vector.broadcast %122 : vector<1x32xf32> to vector<16x32xf32>
    %124 = arith.mulf %121, %123 : vector<16x32xf32>
    %c3 = arith.constant 3 : index
    %c0_62 = arith.constant 0 : index
    %125 = vector.load %arg4[%c3, %c0_62] : memref<10x128xf32, #tpu.memory_space<vmem>>, vector<1x32xf32>
    %126 = vector.broadcast %125 : vector<1x32xf32> to vector<16x32xf32>
    %127 = arith.addf %124, %126 : vector<16x32xf32>
    %128 = arith.truncf %127 : vector<16x32xf32> to vector<16x32xbf16>
    %129 = vector.extract_strided_slice %128 {offsets = [0, 0], sizes = [8, 32], strides = [1, 1]} : vector<16x32xbf16> to vector<8x32xbf16>
    %130 = vector.extract_strided_slice %99 {offsets = [0, 0], sizes = [8, 32], strides = [1, 1]} : vector<16x32xbf16> to vector<8x32xbf16>
    %131 = vector.shape_cast %129 : vector<8x32xbf16> to vector<1x8x32xbf16>
    %132 = vector.shape_cast %131 : vector<1x8x32xbf16> to vector<1x8x32xbf16>
    %133 = vector.broadcast %132 : vector<1x8x32xbf16> to vector<4x8x32xbf16>
    "tpu.trace_start"() <{level = 10 : i32, message = "std,sdk->stk"}> : () -> ()
    %cst_63 = arith.constant dense<0.000000e+00> : vector<4x8x8xf32>
    %134 = tpu.matmul %133, %100, %cst_63 {dimension_numbers = #tpu.dot_dimension_numbers<[2], [1], [1], [2], [0, 0, 0, 1, 1, 2], [0], [0]>} : vector<4x8x32xbf16>, vector<4x32x8xbf16>, vector<4x8x8xf32> -> vector<4x8x8xf32>
    "tpu.trace_stop"() : () -> ()
    %135 = vector.broadcast %101 : vector<4x1x8xf32> to vector<4x8x8xf32>
    %136 = arith.addf %134, %135 : vector<4x8x8xf32>
    %137 = arith.truncf %136 : vector<4x8x8xf32> to vector<4x8x8xbf16>
    %138 = vector.shape_cast %130 : vector<8x32xbf16> to vector<1x8x32xbf16>
    %139 = vector.shape_cast %138 : vector<1x8x32xbf16> to vector<1x8x32xbf16>
    %140 = vector.broadcast %139 : vector<1x8x32xbf16> to vector<8x8x32xbf16>
    "tpu.trace_start"() <{level = 10 : i32, message = "std,sdk->stk"}> : () -> ()
    %cst_64 = arith.constant dense<0.000000e+00> : vector<8x8x8xf32>
    %141 = tpu.matmul %140, %102, %cst_64 {dimension_numbers = #tpu.dot_dimension_numbers<[2], [1], [1], [2], [0, 0, 0, 1, 1, 2], [0], [0]>} : vector<8x8x32xbf16>, vector<8x32x8xbf16>, vector<8x8x8xf32> -> vector<8x8x8xf32>
    "tpu.trace_stop"() : () -> ()
    %142 = vector.broadcast %103 : vector<8x1x8xf32> to vector<8x8x8xf32>
    %143 = arith.addf %141, %142 : vector<8x8x8xf32>
    %144 = arith.truncf %143 : vector<8x8x8xf32> to vector<8x8x8xbf16>
    %145 = vector.extract_strided_slice %144 {offsets = [0, 0, 0], sizes = [4, 8, 8], strides = [1, 1, 1]} : vector<8x8x8xbf16> to vector<4x8x8xbf16>
    %146 = vector.extract_strided_slice %144 {offsets = [4, 0, 0], sizes = [4, 8, 8], strides = [1, 1, 1]} : vector<8x8x8xbf16> to vector<4x8x8xbf16>
    "tpu.trace_start"() <{level = 10 : i32, message = "htd,hnd->htn"}> : () -> ()
    %cst_65 = arith.constant dense<0.000000e+00> : vector<4x8x8xf32>
    %147 = tpu.matmul %137, %145, %cst_65 {dimension_numbers = #tpu.dot_dimension_numbers<[2], [2], [1], [1], [0, 0, 0, 1, 1, 1], [0], [0]>} : vector<4x8x8xbf16>, vector<4x8x8xbf16>, vector<4x8x8xf32> -> vector<4x8x8xf32>
    "tpu.trace_stop"() : () -> ()
    %cst_66 = arith.constant dense<0xFF800000> : vector<4x8xf32>
    %148 = vector.multi_reduction <maximumf>, %147, %cst_66 [2] : vector<4x8x8xf32> to vector<4x8xf32>
    %149 = vector.shape_cast %148 : vector<4x8xf32> to vector<4x8x1xf32>
    %150 = vector.broadcast %149 : vector<4x8x1xf32> to vector<4x8x8xf32>
    %151 = arith.subf %147, %150 : vector<4x8x8xf32>
    %152 = math.exp %151 : vector<4x8x8xf32>
    %cst_67 = arith.constant dense<0.000000e+00> : vector<4x8xf32>
    %153 = vector.multi_reduction <add>, %152, %cst_67 [2] : vector<4x8x8xf32> to vector<4x8xf32>
    %154 = vector.shape_cast %153 : vector<4x8xf32> to vector<4x8x1xf32>
    %155 = tpu.reciprocal %154 {approx = true} : vector<4x8x1xf32> -> vector<4x8x1xf32>
    %156 = vector.broadcast %155 : vector<4x8x1xf32> to vector<4x8x8xf32>
    %157 = arith.mulf %152, %156 : vector<4x8x8xf32>
    %158 = arith.truncf %157 : vector<4x8x8xf32> to vector<4x8x8xbf16>
    "tpu.trace_start"() <{level = 10 : i32, message = "htn,hnd->htd"}> : () -> ()
    %cst_68 = arith.constant dense<0.000000e+00> : vector<4x8x8xf32>
    %159 = tpu.matmul %158, %146, %cst_68 {dimension_numbers = #tpu.dot_dimension_numbers<[2], [1], [1], [2], [0, 0, 0, 1, 1, 2], [0], [0]>} : vector<4x8x8xbf16>, vector<4x8x8xbf16>, vector<4x8x8xf32> -> vector<4x8x8xf32>
    "tpu.trace_stop"() : () -> ()
    %160 = arith.truncf %159 : vector<4x8x8xf32> to vector<4x8x8xbf16>
    "tpu.trace_start"() <{level = 10 : i32, message = "htd,hde->hte"}> : () -> ()
    %cst_69 = arith.constant dense<0.000000e+00> : vector<4x8x32xf32>
    %161 = tpu.matmul %160, %104, %cst_69 {dimension_numbers = #tpu.dot_dimension_numbers<[2], [1], [1], [2], [0, 0, 0, 1, 1, 2], [0], [0]>} : vector<4x8x8xbf16>, vector<4x8x32xbf16>, vector<4x8x32xf32> -> vector<4x8x32xf32>
    "tpu.trace_stop"() : () -> ()
    %cst_70 = arith.constant dense<0.000000e+00> : vector<8x32xf32>
    %162 = vector.multi_reduction <add>, %161, %cst_70 [0] : vector<4x8x32xf32> to vector<8x32xf32>
    %163 = vector.broadcast %105 : vector<1x32xf32> to vector<8x32xf32>
    %164 = arith.addf %162, %163 : vector<8x32xf32>
    %165 = vector.extract_strided_slice %128 {offsets = [8, 0], sizes = [8, 32], strides = [1, 1]} : vector<16x32xbf16> to vector<8x32xbf16>
    %166 = vector.extract_strided_slice %99 {offsets = [8, 0], sizes = [8, 32], strides = [1, 1]} : vector<16x32xbf16> to vector<8x32xbf16>
    %167 = vector.shape_cast %165 : vector<8x32xbf16> to vector<1x8x32xbf16>
    %168 = vector.shape_cast %167 : vector<1x8x32xbf16> to vector<1x8x32xbf16>
    %169 = vector.broadcast %168 : vector<1x8x32xbf16> to vector<4x8x32xbf16>
    "tpu.trace_start"() <{level = 10 : i32, message = "std,sdk->stk"}> : () -> ()
    %cst_71 = arith.constant dense<0.000000e+00> : vector<4x8x8xf32>
    %170 = tpu.matmul %169, %100, %cst_71 {dimension_numbers = #tpu.dot_dimension_numbers<[2], [1], [1], [2], [0, 0, 0, 1, 1, 2], [0], [0]>} : vector<4x8x32xbf16>, vector<4x32x8xbf16>, vector<4x8x8xf32> -> vector<4x8x8xf32>
    "tpu.trace_stop"() : () -> ()
    %171 = vector.broadcast %101 : vector<4x1x8xf32> to vector<4x8x8xf32>
    %172 = arith.addf %170, %171 : vector<4x8x8xf32>
    %173 = arith.truncf %172 : vector<4x8x8xf32> to vector<4x8x8xbf16>
    %174 = vector.shape_cast %166 : vector<8x32xbf16> to vector<1x8x32xbf16>
    %175 = vector.shape_cast %174 : vector<1x8x32xbf16> to vector<1x8x32xbf16>
    %176 = vector.broadcast %175 : vector<1x8x32xbf16> to vector<8x8x32xbf16>
    "tpu.trace_start"() <{level = 10 : i32, message = "std,sdk->stk"}> : () -> ()
    %cst_72 = arith.constant dense<0.000000e+00> : vector<8x8x8xf32>
    %177 = tpu.matmul %176, %102, %cst_72 {dimension_numbers = #tpu.dot_dimension_numbers<[2], [1], [1], [2], [0, 0, 0, 1, 1, 2], [0], [0]>} : vector<8x8x32xbf16>, vector<8x32x8xbf16>, vector<8x8x8xf32> -> vector<8x8x8xf32>
    "tpu.trace_stop"() : () -> ()
    %178 = vector.broadcast %103 : vector<8x1x8xf32> to vector<8x8x8xf32>
    %179 = arith.addf %177, %178 : vector<8x8x8xf32>
    %180 = arith.truncf %179 : vector<8x8x8xf32> to vector<8x8x8xbf16>
    %181 = vector.extract_strided_slice %180 {offsets = [0, 0, 0], sizes = [4, 8, 8], strides = [1, 1, 1]} : vector<8x8x8xbf16> to vector<4x8x8xbf16>
    %182 = vector.extract_strided_slice %180 {offsets = [4, 0, 0], sizes = [4, 8, 8], strides = [1, 1, 1]} : vector<8x8x8xbf16> to vector<4x8x8xbf16>
    "tpu.trace_start"() <{level = 10 : i32, message = "htd,hnd->htn"}> : () -> ()
    %cst_73 = arith.constant dense<0.000000e+00> : vector<4x8x8xf32>
    %183 = tpu.matmul %173, %181, %cst_73 {dimension_numbers = #tpu.dot_dimension_numbers<[2], [2], [1], [1], [0, 0, 0, 1, 1, 1], [0], [0]>} : vector<4x8x8xbf16>, vector<4x8x8xbf16>, vector<4x8x8xf32> -> vector<4x8x8xf32>
    "tpu.trace_stop"() : () -> ()
    %cst_74 = arith.constant dense<0xFF800000> : vector<4x8xf32>
    %184 = vector.multi_reduction <maximumf>, %183, %cst_74 [2] : vector<4x8x8xf32> to vector<4x8xf32>
    %185 = vector.shape_cast %184 : vector<4x8xf32> to vector<4x8x1xf32>
    %186 = vector.broadcast %185 : vector<4x8x1xf32> to vector<4x8x8xf32>
    %187 = arith.subf %183, %186 : vector<4x8x8xf32>
    %188 = math.exp %187 : vector<4x8x8xf32>
    %cst_75 = arith.constant dense<0.000000e+00> : vector<4x8xf32>
    %189 = vector.multi_reduction <add>, %188, %cst_75 [2] : vector<4x8x8xf32> to vector<4x8xf32>
    %190 = vector.shape_cast %189 : vector<4x8xf32> to vector<4x8x1xf32>
    %191 = tpu.reciprocal %190 {approx = true} : vector<4x8x1xf32> -> vector<4x8x1xf32>
    %192 = vector.broadcast %191 : vector<4x8x1xf32> to vector<4x8x8xf32>
    %193 = arith.mulf %188, %192 : vector<4x8x8xf32>
    %194 = arith.truncf %193 : vector<4x8x8xf32> to vector<4x8x8xbf16>
    "tpu.trace_start"() <{level = 10 : i32, message = "htn,hnd->htd"}> : () -> ()
    %cst_76 = arith.constant dense<0.000000e+00> : vector<4x8x8xf32>
    %195 = tpu.matmul %194, %182, %cst_76 {dimension_numbers = #tpu.dot_dimension_numbers<[2], [1], [1], [2], [0, 0, 0, 1, 1, 2], [0], [0]>} : vector<4x8x8xbf16>, vector<4x8x8xbf16>, vector<4x8x8xf32> -> vector<4x8x8xf32>
    "tpu.trace_stop"() : () -> ()
    %196 = arith.truncf %195 : vector<4x8x8xf32> to vector<4x8x8xbf16>
    "tpu.trace_start"() <{level = 10 : i32, message = "htd,hde->hte"}> : () -> ()
    %cst_77 = arith.constant dense<0.000000e+00> : vector<4x8x32xf32>
    %197 = tpu.matmul %196, %104, %cst_77 {dimension_numbers = #tpu.dot_dimension_numbers<[2], [1], [1], [2], [0, 0, 0, 1, 1, 2], [0], [0]>} : vector<4x8x8xbf16>, vector<4x8x32xbf16>, vector<4x8x32xf32> -> vector<4x8x32xf32>
    "tpu.trace_stop"() : () -> ()
    %cst_78 = arith.constant dense<0.000000e+00> : vector<8x32xf32>
    %198 = vector.multi_reduction <add>, %197, %cst_78 [0] : vector<4x8x32xf32> to vector<8x32xf32>
    %199 = vector.broadcast %105 : vector<1x32xf32> to vector<8x32xf32>
    %200 = arith.addf %198, %199 : vector<8x32xf32>
    %201 = tpu.concatenate %164, %200 in 0 : vector<8x32xf32>, vector<8x32xf32> -> vector<16x32xf32>
    %202 = arith.addf %97, %201 : vector<16x32xf32>
    %cst_79 = arith.constant dense<0.000000e+00> : vector<16xf32>
    %203 = vector.multi_reduction <add>, %202, %cst_79 [1] : vector<16x32xf32> to vector<16xf32>
    %204 = vector.shape_cast %203 : vector<16xf32> to vector<16x1xf32>
    %cst_80 = arith.constant 3.200000e+01 : f32
    %205 = vector.broadcast %cst_80 : f32 to vector<16x1xf32>
    %206 = arith.divf %204, %205 : vector<16x1xf32>
    %207 = vector.broadcast %206 : vector<16x1xf32> to vector<16x32xf32>
    %208 = arith.subf %202, %207 : vector<16x32xf32>
    %209 = arith.mulf %208, %208 : vector<16x32xf32>
    %cst_81 = arith.constant dense<0.000000e+00> : vector<16xf32>
    %210 = vector.multi_reduction <add>, %209, %cst_81 [1] : vector<16x32xf32> to vector<16xf32>
    %211 = vector.shape_cast %210 : vector<16xf32> to vector<16x1xf32>
    %cst_82 = arith.constant 3.200000e+01 : f32
    %212 = vector.broadcast %cst_82 : f32 to vector<16x1xf32>
    %213 = arith.divf %211, %212 : vector<16x1xf32>
    %cst_83 = arith.constant 9.99999974E-6 : f32
    %214 = vector.broadcast %cst_83 : f32 to vector<16x1xf32>
    %215 = arith.addf %213, %214 : vector<16x1xf32>
    %216 = math.rsqrt %215 : vector<16x1xf32>
    %217 = vector.broadcast %216 : vector<16x1xf32> to vector<16x32xf32>
    %218 = arith.mulf %208, %217 : vector<16x32xf32>
    %c4 = arith.constant 4 : index
    %c0_84 = arith.constant 0 : index
    %219 = vector.load %arg4[%c4, %c0_84] : memref<10x128xf32, #tpu.memory_space<vmem>>, vector<1x32xf32>
    %220 = vector.broadcast %219 : vector<1x32xf32> to vector<16x32xf32>
    %221 = arith.mulf %218, %220 : vector<16x32xf32>
    %c5 = arith.constant 5 : index
    %c0_85 = arith.constant 0 : index
    %222 = vector.load %arg4[%c5, %c0_85] : memref<10x128xf32, #tpu.memory_space<vmem>>, vector<1x32xf32>
    %223 = vector.broadcast %222 : vector<1x32xf32> to vector<16x32xf32>
    %224 = arith.addf %221, %223 : vector<16x32xf32>
    %225 = arith.truncf %224 : vector<16x32xf32> to vector<16x32xbf16>
    %c0_86 = arith.constant 0 : index
    %c0_87 = arith.constant 0 : index
    %226 = vector.load %arg13[%c0_86, %c0_87] : memref<32x128xbf16, #tpu.memory_space<vmem>>, vector<32x128xbf16>
    %cst_88 = arith.constant dense<0.000000e+00> : vector<16x128xf32>
    %227 = tpu.matmul %225, %226, %cst_88 {dimension_numbers = #tpu.dot_dimension_numbers<[1], [0], [0], [1], [0, 0, 1, 1], [], []>} : vector<16x32xbf16>, vector<32x128xbf16>, vector<16x128xf32> -> vector<16x128xf32>
    %c8 = arith.constant 8 : index
    %c0_89 = arith.constant 0 : index
    %228 = vector.load %arg4[%c8, %c0_89] : memref<10x128xf32, #tpu.memory_space<vmem>>, vector<1x128xf32>
    %229 = vector.broadcast %228 : vector<1x128xf32> to vector<16x128xf32>
    %230 = arith.addf %227, %229 : vector<16x128xf32>
    %cst_90 = arith.constant 5.000000e-01 : f32
    %231 = vector.broadcast %cst_90 : f32 to vector<16x128xf32>
    %232 = arith.mulf %231, %230 : vector<16x128xf32>
    %cst_91 = arith.constant 4.471500e-02 : f32
    %233 = vector.broadcast %cst_91 : f32 to vector<16x128xf32>
    %234 = arith.mulf %233, %230 : vector<16x128xf32>
    %235 = arith.mulf %234, %230 : vector<16x128xf32>
    %236 = arith.mulf %235, %230 : vector<16x128xf32>
    %237 = arith.addf %230, %236 : vector<16x128xf32>
    %cst_92 = arith.constant 0.797884583 : f32
    %238 = vector.broadcast %cst_92 : f32 to vector<16x128xf32>
    %239 = arith.mulf %238, %237 : vector<16x128xf32>
    %240 = math.tanh %239 : vector<16x128xf32>
    %cst_93 = arith.constant 1.000000e+00 : f32
    %241 = vector.broadcast %cst_93 : f32 to vector<16x128xf32>
    %242 = arith.addf %241, %240 : vector<16x128xf32>
    %243 = arith.mulf %232, %242 : vector<16x128xf32>
    %244 = arith.truncf %243 : vector<16x128xf32> to vector<16x128xbf16>
    %c0_94 = arith.constant 0 : index
    %c0_95 = arith.constant 0 : index
    %245 = vector.load %arg14[%c0_94, %c0_95] : memref<128x32xbf16, #tpu.memory_space<vmem>>, vector<128x32xbf16>
    %cst_96 = arith.constant dense<0.000000e+00> : vector<16x32xf32>
    %246 = tpu.matmul %244, %245, %cst_96 {dimension_numbers = #tpu.dot_dimension_numbers<[1], [0], [0], [1], [0, 0, 1, 1], [], []>} : vector<16x128xbf16>, vector<128x32xbf16>, vector<16x32xf32> -> vector<16x32xf32>
    %247 = arith.addf %202, %246 : vector<16x32xf32>
    %c9 = arith.constant 9 : index
    %c0_97 = arith.constant 0 : index
    %248 = vector.load %arg4[%c9, %c0_97] : memref<10x128xf32, #tpu.memory_space<vmem>>, vector<1x32xf32>
    %249 = vector.broadcast %248 : vector<1x32xf32> to vector<16x32xf32>
    %250 = arith.addf %247, %249 : vector<16x32xf32>
    %c0_98 = arith.constant 0 : index
    %c0_99 = arith.constant 0 : index
    %251 = vector.load %arg15[%c0_98, %c0_99] : memref<16x32xf32, #tpu.memory_space<vmem>>, vector<16x32xf32>
    tpu.vector_store %arg15[%c0_98, %c0_99], %250 {strides = array<i32>} : memref<16x32xf32, #tpu.memory_space<vmem>>, vector<16x32xf32>,
    return
  }
  func.func @transform_0(%arg0: i32) -> (i32, i32) {
    %c0_i32 = arith.constant 0 : i32
    %c0_i32_0 = arith.constant 0 : i32
    return %arg0, %c0_i32 : i32, i32
  }
  func.func @transform_1(%arg0: i32) -> (i32, i32) {
    %c0_i32 = arith.constant 0 : i32
    %c0_i32_0 = arith.constant 0 : i32
    return %arg0, %c0_i32 : i32, i32
  }
  func.func @transform_2(%arg0: i32) -> (i32, i32, i32) {
    %c0_i32 = arith.constant 0 : i32
    %c0_i32_0 = arith.constant 0 : i32
    %c0_i32_1 = arith.constant 0 : i32
    return %arg0, %c0_i32, %c0_i32_0 : i32, i32, i32
  }
  func.func @transform_3(%arg0: i32) -> (i32, i32) {
    %c0_i32 = arith.constant 0 : i32
    %c0_i32_0 = arith.constant 0 : i32
    %c0_i32_1 = arith.constant 0 : i32
    return %c0_i32, %c0_i32_0 : i32, i32
  }
  func.func @transform_4(%arg0: i32) -> (i32, i32, i32) {
    %c0_i32 = arith.constant 0 : i32
    %c0_i32_0 = arith.constant 0 : i32
    %c0_i32_1 = arith.constant 0 : i32
    %c0_i32_2 = arith.constant 0 : i32
    return %c0_i32, %c0_i32_0, %c0_i32_1 : i32, i32, i32
  }
  func.func @transform_5(%arg0: i32) -> (i32, i32, i32) {
    %c0_i32 = arith.constant 0 : i32
    %c0_i32_0 = arith.constant 0 : i32
    %c0_i32_1 = arith.constant 0 : i32
    %c0_i32_2 = arith.constant 0 : i32
    return %c0_i32, %c0_i32_0, %c0_i32_1 : i32, i32, i32
  }
  func.func @transform_6(%arg0: i32) -> (i32, i32, i32) {
    %c0_i32 = arith.constant 0 : i32
    %c0_i32_0 = arith.constant 0 : i32
    %c0_i32_1 = arith.constant 0 : i32
    %c0_i32_2 = arith.constant 0 : i32
    return %c0_i32, %c0_i32_0, %c0_i32_1 : i32, i32, i32
  }
  func.func @transform_7(%arg0: i32) -> (i32, i32, i32) {
    %c0_i32 = arith.constant 0 : i32
    %c0_i32_0 = arith.constant 0 : i32
    %c0_i32_1 = arith.constant 0 : i32
    %c0_i32_2 = arith.constant 0 : i32
    return %c0_i32, %c0_i32_0, %c0_i32_1 : i32, i32, i32
  }
  func.func @transform_8(%arg0: i32) -> (i32, i32, i32) {
    %c0_i32 = arith.constant 0 : i32
    %c0_i32_0 = arith.constant 0 : i32
    %c0_i32_1 = arith.constant 0 : i32
    %c0_i32_2 = arith.constant 0 : i32
    return %c0_i32, %c0_i32_0, %c0_i32_1 : i32, i32, i32
  }
  func.func @transform_9(%arg0: i32) -> (i32, i32, i32) {
    %c0_i32 = arith.constant 0 : i32
    %c0_i32_0 = arith.constant 0 : i32
    %c0_i32_1 = arith.constant 0 : i32
    %c0_i32_2 = arith.constant 0 : i32
    return %c0_i32, %c0_i32_0, %c0_i32_1 : i32, i32, i32
  }
  func.func @transform_10(%arg0: i32) -> (i32, i32, i32) {
    %c0_i32 = arith.constant 0 : i32
    %c0_i32_0 = arith.constant 0 : i32
    %c0_i32_1 = arith.constant 0 : i32
    %c0_i32_2 = arith.constant 0 : i32
    return %c0_i32, %c0_i32_0, %c0_i32_1 : i32, i32, i32
  }
  func.func @transform_11(%arg0: i32) -> (i32, i32, i32) {
    %c0_i32 = arith.constant 0 : i32
    %c0_i32_0 = arith.constant 0 : i32
    %c0_i32_1 = arith.constant 0 : i32
    %c0_i32_2 = arith.constant 0 : i32
    return %c0_i32, %c0_i32_0, %c0_i32_1 : i32, i32, i32
  }
  func.func @transform_12(%arg0: i32) -> (i32, i32) {
    %c0_i32 = arith.constant 0 : i32
    %c0_i32_0 = arith.constant 0 : i32
    %c0_i32_1 = arith.constant 0 : i32
    return %c0_i32, %c0_i32_0 : i32, i32
  }
  func.func @transform_13(%arg0: i32) -> (i32, i32) {
    %c0_i32 = arith.constant 0 : i32
    %c0_i32_0 = arith.constant 0 : i32
    %c0_i32_1 = arith.constant 0 : i32
    return %c0_i32, %c0_i32_0 : i32, i32
  }
  func.func @transform_14(%arg0: i32) -> (i32, i32) {
    %c0_i32 = arith.constant 0 : i32
    %c0_i32_0 = arith.constant 0 : i32
    return %arg0, %c0_i32 : i32, i32
  }
}

</mosaic_0001>

<llo_original>
// kernel: tpu_custom_call.1
$region0: #{tpu_custom_call.1}
  #allocation0 [shape = 'u32[]', space=smem, size = 0x4, offset = 0x4, fixed_abs, tag = 'smem constant byte address 0x4 - core index']
  #allocation1 [shape = 'u32[144,128]{1,0:T(1,128)}', space=vmem, size = 0x12000, scoped, tag = 'internal scratch']
  %s0 = inlined_call_operand.vmem [shape: f32[16,32], index: 0, kind: input, shape index: {}]
  %s1 = inlined_call_operand.vmem [shape: f32[16,32], index: 1, kind: input, shape index: {}]
  %s2 = inlined_call_operand.vmem [shape: f32[2,8,8], index: 2, kind: input, shape index: {}]
  %s3 = inlined_call_operand.vmem [shape: f32[10,128], index: 3, kind: input, shape index: {}]
  %s4 = inlined_call_operand.vmem [shape: bf16[12,32,8], index: 4, kind: input, shape index: {}]
  %s5 = inlined_call_operand.vmem [shape: f32[12,1,8], index: 5, kind: input, shape index: {}]
  %s6 = inlined_call_operand.vmem [shape: bf16[4,8,32], index: 6, kind: input, shape index: {}]
  %s7 = inlined_call_operand.vmem [shape: bf16[4,32,8], index: 7, kind: input, shape index: {}]
  %s8 = inlined_call_operand.vmem [shape: f32[4,1,8], index: 8, kind: input, shape index: {}]
  %s9 = inlined_call_operand.vmem [shape: bf16[8,32,8], index: 9, kind: input, shape index: {}]
  %s10 = inlined_call_operand.vmem [shape: f32[8,1,8], index: 10, kind: input, shape index: {}]
  %s11 = inlined_call_operand.vmem [shape: bf16[4,8,32], index: 11, kind: input, shape index: {}]
  %s12 = inlined_call_operand.vmem [shape: bf16[32,128], index: 12, kind: input, shape index: {}]
  %s13 = inlined_call_operand.vmem [shape: bf16[128,32], index: 13, kind: input, shape index: {}]
  %s14 = inlined_call_operand.hbm [shape: f32[16,32], index: 14, kind: output, shape index: {}]
  %s15 = sld [smem:[#allocation0]]
  $region66: #{tpu_custom_call.1} parent=0
    _
  %s17 = ssub.s32 1, %s15
  %s18 = scalar_select 0, %s17, %s15
  $region1: #{tpu_custom_call.1} parent=0
    #allocation2 [shape = 'u8[8192]{0}', space=vmem, size = 0x2000, scoped, tag = 'output window, operand 0, single buffered']
    #allocation3 [shape = 's32[1]{0}', space=sflag, size = 0x4, scoped, tag = 'scoped memory for tpu_custom_call.1']
    %19 = vsyncpa [#allocation3], 0
    // Predicated region
    $region2: #{tpu_custom_call.1} parent=1 // pred_check
      _
    $region3: #{tpu_custom_call.1} parent=1 // pred_check_branch
      %21 = sbr.rel (0) target = $region5
    $region4: #{tpu_custom_call.1} parent=1 // pred_region
      _
    $region5: #{tpu_custom_call.1} parent=1 // pred_fallthru
      _
    // Predicated region
    $region6: #{tpu_custom_call.1} parent=1 // pred_check
      _
    $region7: #{tpu_custom_call.1} parent=1 // pred_check_branch
      %23 = sbr.rel (0) target = $region9
    $region8: #{tpu_custom_call.1} parent=1 // pred_region
      _
    $region9: #{tpu_custom_call.1} parent=1 // pred_fallthru
      _
    // Predicated region
    $region10: #{tpu_custom_call.1} parent=1 // pred_check
      _
    $region11: #{tpu_custom_call.1} parent=1 // pred_check_branch
      %25 = sbr.rel (0) target = $region13
    $region12: #{tpu_custom_call.1} parent=1 // pred_region
      _
    $region13: #{tpu_custom_call.1} parent=1 // pred_fallthru
      _
    // Predicated region
    $region14: #{tpu_custom_call.1} parent=1 // pred_check
      _
    $region15: #{tpu_custom_call.1} parent=1 // pred_check_branch
      %27 = sbr.rel (0) target = $region17
    $region16: #{tpu_custom_call.1} parent=1 // pred_region
      _
    $region17: #{tpu_custom_call.1} parent=1 // pred_fallthru
      _
    // Predicated region
    $region18: #{tpu_custom_call.1} parent=1 // pred_check
      _
    $region19: #{tpu_custom_call.1} parent=1 // pred_check_branch
      %29 = sbr.rel (0) target = $region21
    $region20: #{tpu_custom_call.1} parent=1 // pred_region
      _
    $region21: #{tpu_custom_call.1} parent=1 // pred_fallthru
      _
    // Predicated region
    $region22: #{tpu_custom_call.1} parent=1 // pred_check
      _
    $region23: #{tpu_custom_call.1} parent=1 // pred_check_branch
      %31 = sbr.rel (0) target = $region25
    $region24: #{tpu_custom_call.1} parent=1 // pred_region
      _
    $region25: #{tpu_custom_call.1} parent=1 // pred_fallthru
      _
    // Predicated region
    $region26: #{tpu_custom_call.1} parent=1 // pred_check
      _
    $region27: #{tpu_custom_call.1} parent=1 // pred_check_branch
      %33 = sbr.rel (0) target = $region29
    $region28: #{tpu_custom_call.1} parent=1 // pred_region
      _
    $region29: #{tpu_custom_call.1} parent=1 // pred_fallthru
      _
    // Predicated region
    $region30: #{tpu_custom_call.1} parent=1 // pred_check
      _
    $region31: #{tpu_custom_call.1} parent=1 // pred_check_branch
      %35 = sbr.rel (0) target = $region33
    $region32: #{tpu_custom_call.1} parent=1 // pred_region
      _
    $region33: #{tpu_custom_call.1} parent=1 // pred_fallthru
      _
    // Predicated region
    $region34: #{tpu_custom_call.1} parent=1 // pred_check
      _
    $region35: #{tpu_custom_call.1} parent=1 // pred_check_branch
      %37 = sbr.rel (0) target = $region37
    $region36: #{tpu_custom_call.1} parent=1 // pred_region
      _
    $region37: #{tpu_custom_call.1} parent=1 // pred_fallthru
      _
    // Predicated region
    $region38: #{tpu_custom_call.1} parent=1 // pred_check
      _
    $region39: #{tpu_custom_call.1} parent=1 // pred_check_branch
      %39 = sbr.rel (0) target = $region41
    $region40: #{tpu_custom_call.1} parent=1 // pred_region
      _
    $region41: #{tpu_custom_call.1} parent=1 // pred_fallthru
      _
    // Predicated region
    $region42: #{tpu_custom_call.1} parent=1 // pred_check
      _
    $region43: #{tpu_custom_call.1} parent=1 // pred_check_branch
      %41 = sbr.rel (0) target = $region45
    $region44: #{tpu_custom_call.1} parent=1 // pred_region
      _
    $region45: #{tpu_custom_call.1} parent=1 // pred_fallthru
      _
    // Predicated region
    $region46: #{tpu_custom_call.1} parent=1 // pred_check
      _
    $region47: #{tpu_custom_call.1} parent=1 // pred_check_branch
      %43 = sbr.rel (0) target = $region49
    $region48: #{tpu_custom_call.1} parent=1 // pred_region
      _
    $region49: #{tpu_custom_call.1} parent=1 // pred_fallthru
      _
    // Predicated region
    $region50: #{tpu_custom_call.1} parent=1 // pred_check
      _
    $region51: #{tpu_custom_call.1} parent=1 // pred_check_branch
      %45 = sbr.rel (0) target = $region53
    $region52: #{tpu_custom_call.1} parent=1 // pred_region
      _
    $region53: #{tpu_custom_call.1} parent=1 // pred_fallthru
      _
    // Predicated region
    $region54: #{tpu_custom_call.1} parent=1 // pred_check
      _
    $region55: #{tpu_custom_call.1} parent=1 // pred_check_branch
      %47 = sbr.rel (0) target = $region57
    $region56: #{tpu_custom_call.1} parent=1 // pred_region
      _
    $region57: #{tpu_custom_call.1} parent=1 // pred_fallthru
      _
    %v49 = vld [vmem:[%s0] sm:$0xff]
    %v50 = vld [vmem:[%s0 + $0x8] sm:$0xff]
    %v51 = vld [vmem:[%s4] sm:$0xf]
    %v52 = vld [vmem:[%s4 + $0x4] sm:$0xf]
    %v53 = vld [vmem:[%s4 + $0x8] sm:$0xf]
    %v54 = vld [vmem:[%s4 + $0xc] sm:$0xf]
    %v55 = vld [vmem:[%s4 + $0x10] sm:$0xf]
    %v56 = vld [vmem:[%s4 + $0x14] sm:$0xf]
    %v57 = vld [vmem:[%s4 + $0x18] sm:$0xf]
    %v58 = vld [vmem:[%s4 + $0x1c] sm:$0xf]
    %v59 = vld [vmem:[%s4 + $0x20] sm:$0xf]
    %v60 = vld [vmem:[%s4 + $0x24] sm:$0xf]
    %v61 = vld [vmem:[%s4 + $0x28] sm:$0xf]
    %v62 = vld [vmem:[%s4 + $0x2c] sm:$0xf]
    %v63 = vld [vmem:[%s4 + $0x30] sm:$0xf]
    %v64 = vld [vmem:[%s4 + $0x34] sm:$0xf]
    %v65 = vld [vmem:[%s4 + $0x38] sm:$0xf]
    %v66 = vld [vmem:[%s4 + $0x3c] sm:$0xf]
    %v67 = vld [vmem:[%s4 + $0x40] sm:$0xf]
    %v68 = vld [vmem:[%s4 + $0x44] sm:$0xf]
    %v69 = vld [vmem:[%s4 + $0x48] sm:$0xf]
    %v70 = vld [vmem:[%s4 + $0x4c] sm:$0xf]
    %v71 = vld [vmem:[%s4 + $0x50] sm:$0xf]
    %v72 = vld [vmem:[%s4 + $0x54] sm:$0xf]
    %v73 = vld [vmem:[%s4 + $0x58] sm:$0xf]
    %v74 = vld [vmem:[%s4 + $0x5c] sm:$0xf]
    %v75 = vld [vmem:[%s4 + $0x60] sm:$0xf]
    %v76 = vld [vmem:[%s4 + $0x64] sm:$0xf]
    %v77 = vld [vmem:[%s4 + $0x68] sm:$0xf]
    %v78 = vld [vmem:[%s4 + $0x6c] sm:$0xf]
    %v79 = vld [vmem:[%s4 + $0x70] sm:$0xf]
    %v80 = vld [vmem:[%s4 + $0x74] sm:$0xf]
    %v81 = vld [vmem:[%s4 + $0x78] sm:$0xf]
    %v82 = vld [vmem:[%s4 + $0x7c] sm:$0xf]
    %v83 = vld [vmem:[%s4 + $0x80] sm:$0xf]
    %v84 = vld [vmem:[%s4 + $0x84] sm:$0xf]
    %v85 = vld [vmem:[%s4 + $0x88] sm:$0xf]
    %v86 = vld [vmem:[%s4 + $0x8c] sm:$0xf]
    %v87 = vld [vmem:[%s4 + $0x90] sm:$0xf]
    %v88 = vld [vmem:[%s4 + $0x94] sm:$0xf]
    %v89 = vld [vmem:[%s4 + $0x98] sm:$0xf]
    %v90 = vld [vmem:[%s4 + $0x9c] sm:$0xf]
    %v91 = vld [vmem:[%s4 + $0xa0] sm:$0xf]
    %v92 = vld [vmem:[%s4 + $0xa4] sm:$0xf]
    %v93 = vld [vmem:[%s4 + $0xa8] sm:$0xf]
    %v94 = vld [vmem:[%s4 + $0xac] sm:$0xf]
    %v95 = vld [vmem:[%s4 + $0xb0] sm:$0xf]
    %v96 = vld [vmem:[%s4 + $0xb4] sm:$0xf]
    %v97 = vld [vmem:[%s4 + $0xb8] sm:$0xf]
    %v98 = vld [vmem:[%s4 + $0xbc] sm:$0xf]
    %v99 = vld [vmem:[%s5] sm:$0x1]
    %v100 = vld [vmem:[%s5 + $0x1] sm:$0x1]
    %v101 = vld [vmem:[%s5 + $0x2] sm:$0x1]
    %v102 = vld [vmem:[%s5 + $0x3] sm:$0x1]
    %v103 = vld [vmem:[%s5 + $0x4] sm:$0x1]
    %v104 = vld [vmem:[%s5 + $0x5] sm:$0x1]
    %v105 = vld [vmem:[%s5 + $0x6] sm:$0x1]
    %v106 = vld [vmem:[%s5 + $0x7] sm:$0x1]
    %v107 = vld [vmem:[%s5 + $0x8] sm:$0x1]
    %v108 = vld [vmem:[%s5 + $0x9] sm:$0x1]
    %v109 = vld [vmem:[%s5 + $0xa] sm:$0x1]
    %v110 = vld [vmem:[%s5 + $0xb] sm:$0x1]
    %v111 = vld [vmem:[%s6] sm:$0xf]
    %v112 = vld [vmem:[%s6 + $0x4] sm:$0xf]
    %v113 = vld [vmem:[%s6 + $0x8] sm:$0xf]
    %v114 = vld [vmem:[%s6 + $0xc] sm:$0xf]
    %v115 = vld [vmem:[%s3 + $0x6] sm:$0x1]
    %vm116 = vcmask 261120
    %v117 = vsel %vm116, %v49, 0.0
    %118 = vadd.xlane.f32.xlu0 %v117
    %v119 = vpop.xlane.xlu0 %118
    %v120 = vsel %vm116, %v50, 0.0
    %121 = vadd.xlane.f32.xlu0 %v120
    %v122 = vpop.xlane.xlu0 %121
    %v123 = vrcp.pop 32.0
    %v124 = vmul.f32 %v119, %v123
    %v125 = vmul.f32 %v122, %v123
    %v126 = vsub.f32 %v49, %v124
    %v127 = vsub.f32 %v50, %v125
    %v128 = vmul.f32 %v126, %v126
    %v129 = vmul.f32 %v127, %v127
    %v130 = vsel %vm116, %v128, 0.0
    %131 = vadd.xlane.f32.xlu0 %v130
    %v132 = vpop.xlane.xlu0 %131
    %v133 = vsel %vm116, %v129, 0.0
    %134 = vadd.xlane.f32.xlu0 %v133
    %v135 = vpop.xlane.xlu0 %134
    %v136 = vmul.f32 %v132, %v123
    %v137 = vmul.f32 %v135, %v123
    %v138 = vadd.f32 %v136, 1e-05
    %v139 = vadd.f32 %v137, 1e-05
    %v140 = vrsqrt.pop %v138
    %v141 = vrsqrt.pop %v139
    %v142 = vmul.f32 %v126, %v140
    %v143 = vmul.f32 %v127, %v141
    %v144 = vld [vmem:[%s3] sm:$0x1]
    %v145 = vlaneseq
    %v146 = vshrl.u32 %v145, 7
    %v147 = vsub.s32 0, %v146
    %v148 = vrot.slane %v144, %v147
    %v149 = vmul.f32 %v142, %v148
    %v150 = vmul.f32 %v143, %v148
    %v151 = vld [vmem:[%s3 + $0x1] sm:$0x1]
    %v152 = vlaneseq
    %v153 = vshrl.u32 %v152, 7
    %v154 = vsub.s32 0, %v153
    %v155 = vrot.slane %v151, %v154
    %v156 = vadd.f32 %v149, %v155
    %v157 = vadd.f32 %v150, %v155
    %v158 = vpack.c.bf16 %v157, %v156
    %v171 = vlaneseq
    %v172 = vshrl.u32 %v171, 7
    %v173 = vsub.s32 0, %v172
    %v174 = vrot.slane %v99, %v173
    %v175 = vlaneseq
    %v176 = vshrl.u32 %v175, 7
    %v177 = vsub.s32 0, %v176
    %v178 = vrot.slane %v100, %v177
    %v179 = vlaneseq
    %v180 = vshrl.u32 %v179, 7
    %v181 = vsub.s32 0, %v180
    %v182 = vrot.slane %v101, %v181
    %v183 = vlaneseq
    %v184 = vshrl.u32 %v183, 7
    %v185 = vsub.s32 0, %v184
    %v186 = vrot.slane %v102, %v185
    %v187 = vlaneseq
    %v188 = vshrl.u32 %v187, 7
    %v189 = vsub.s32 0, %v188
    %v190 = vrot.slane %v103, %v189
    %v191 = vlaneseq
    %v192 = vshrl.u32 %v191, 7
    %v193 = vsub.s32 0, %v192
    %v194 = vrot.slane %v104, %v193
    %v195 = vlaneseq
    %v196 = vshrl.u32 %v195, 7
    %v197 = vsub.s32 0, %v196
    %v198 = vrot.slane %v105, %v197
    %v199 = vlaneseq
    %v200 = vshrl.u32 %v199, 7
    %v201 = vsub.s32 0, %v200
    %v202 = vrot.slane %v106, %v201
    %v203 = vlaneseq
    %v204 = vshrl.u32 %v203, 7
    %v205 = vsub.s32 0, %v204
    %v206 = vrot.slane %v107, %v205
    %v207 = vlaneseq
    %v208 = vshrl.u32 %v207, 7
    %v209 = vsub.s32 0, %v208
    %v210 = vrot.slane %v108, %v209
    %v211 = vlaneseq
    %v212 = vshrl.u32 %v211, 7
    %v213 = vsub.s32 0, %v212
    %v214 = vrot.slane %v109, %v213
    %v215 = vlaneseq
    %v216 = vshrl.u32 %v215, 7
    %v217 = vsub.s32 0, %v216
    %v218 = vrot.slane %v110, %v217
    %v235 = vunpack.c.l.b16 %v51
    %v236 = vunpack.c.l.b16 %v52
    %v237 = vunpack.c.l.b16 %v53
    %v238 = vunpack.c.l.b16 %v54
    %v239 = vpack.c.b16 %v236, %v235
    %v240 = vpack.c.b16 %v238, %v237
    %v244 = vsel %vm116, %v158, 0
    %246 = vmatprep.subr.bf16.mxu0 0
    %247 = vmatpush1.bf16.msra.mxu0 %v239
    %248 = vmatprep.subr.bf16.mxu0 0
    %249 = vmatpush1.bf16.msra.mxu0 %v240
    %250 = vmatprep.subr.bf16.mxu0 0
    %251 = vmatpush1.bf16.msra.mxu0 0
    %252 = vmatprep.subr.bf16.mxu0 0
    %253 = vmatpush1.bf16.msra.mxu0 0
    %254 = vmatprep.subr.bf16.mxu0 0
    %255 = vmatpush1.bf16.msra.mxu0 0
    %256 = vmatprep.subr.bf16.mxu0 0
    %257 = vmatpush1.bf16.msra.mxu0 0
    %258 = vmatprep.subr.bf16.mxu0 0
    %259 = vmatpush1.bf16.msra.mxu0 0
    %260 = vmatprep.subr.bf16.mxu0 0
    %261 = vmatpush1.bf16.msra.mxu0 0
    %262 = vmatprep.subr.bf16.mxu0 0
    %263 = vmatpush1.bf16.msra.mxu0 0
    %264 = vmatprep.subr.bf16.mxu0 0
    %265 = vmatpush1.bf16.msra.mxu0 0
    %266 = vmatprep.subr.bf16.mxu0 0
    %267 = vmatpush1.bf16.msra.mxu0 0
    %268 = vmatprep.subr.bf16.mxu0 0
    %269 = vmatpush1.bf16.msra.mxu0 0
    %270 = vmatprep.subr.bf16.mxu0 0
    %271 = vmatpush1.bf16.msra.mxu0 0
    %272 = vmatprep.subr.bf16.mxu0 0
    %273 = vmatpush1.bf16.msra.mxu0 0
    %274 = vmatprep.subr.bf16.mxu0 0
    %275 = vmatpush1.bf16.msra.mxu0 0
    %276 = vmatprep.subr.bf16.mxu0 0
    %277 = vmatpush1.bf16.msra.mxu0 0
    %278 = vmatprep.mubr.bf16.mxu0 0
    %279 = vmatmul.mubr.bf16.gmra.mrb[0].mxu0 %v244
    %v280 = vpop.f32.mrb[0].mxu0
    %v281 = vadd.f32 %v174, %v280
    %v282 = vpop.f32.mrb[0].mxu0
    %v283 = vpop.f32.mrb[0].mxu0
    %v284 = vpop.f32.mrb[0].mxu0
    %285 = vdwg.mxu0
    %v290 = vunpack.c.l.b16 %v55
    %v291 = vunpack.c.l.b16 %v56
    %v292 = vunpack.c.l.b16 %v57
    %v293 = vunpack.c.l.b16 %v58
    %v294 = vpack.c.b16 %v291, %v290
    %v295 = vpack.c.b16 %v293, %v292
    %298 = vmatprep.subr.bf16.mxu0 0
    %299 = vmatpush1.bf16.msra.mxu0 %v294
    %300 = vmatprep.subr.bf16.mxu0 0
    %301 = vmatpush1.bf16.msra.mxu0 %v295
    %302 = vmatprep.subr.bf16.mxu0 0
    %303 = vmatpush1.bf16.msra.mxu0 0
    %304 = vmatprep.subr.bf16.mxu0 0
    %305 = vmatpush1.bf16.msra.mxu0 0
    %306 = vmatprep.subr.bf16.mxu0 0
    %307 = vmatpush1.bf16.msra.mxu0 0
    %308 = vmatprep.subr.bf16.mxu0 0
    %309 = vmatpush1.bf16.msra.mxu0 0
    %310 = vmatprep.subr.bf16.mxu0 0
    %311 = vmatpush1.bf16.msra.mxu0 0
    %312 = vmatprep.subr.bf16.mxu0 0
    %313 = vmatpush1.bf16.msra.mxu0 0
    %314 = vmatprep.subr.bf16.mxu0 0
    %315 = vmatpush1.bf16.msra.mxu0 0
    %316 = vmatprep.subr.bf16.mxu0 0
    %317 = vmatpush1.bf16.msra.mxu0 0
    %318 = vmatprep.subr.bf16.mxu0 0
    %319 = vmatpush1.bf16.msra.mxu0 0
    %320 = vmatprep.subr.bf16.mxu0 0
    %321 = vmatpush1.bf16.msra.mxu0 0
    %322 = vmatprep.subr.bf16.mxu0 0
    %323 = vmatpush1.bf16.msra.mxu0 0
    %324 = vmatprep.subr.bf16.mxu0 0
    %325 = vmatpush1.bf16.msra.mxu0 0
    %326 = vmatprep.subr.bf16.mxu0 0
    %327 = vmatpush1.bf16.msra.mxu0 0
    %328 = vmatprep.subr.bf16.mxu0 0
    %329 = vmatpush1.bf16.msra.mxu0 0
    %330 = vmatprep.mubr.bf16.mxu0 0
    %331 = vmatmul.mubr.bf16.gmra.mrb[0].mxu0 %v244
    %v332 = vpop.f32.mrb[0].mxu0
    %v333 = vadd.f32 %v178, %v332
    %v334 = vpop.f32.mrb[0].mxu0
    %v335 = vpop.f32.mrb[0].mxu0
    %v336 = vpop.f32.mrb[0].mxu0
    %337 = vdwg.mxu0
    %v342 = vunpack.c.l.b16 %v59
    %v343 = vunpack.c.l.b16 %v60
    %v344 = vunpack.c.l.b16 %v61
    %v345 = vunpack.c.l.b16 %v62
    %v346 = vpack.c.b16 %v343, %v342
    %v347 = vpack.c.b16 %v345, %v344
    %350 = vmatprep.subr.bf16.mxu0 0
    %351 = vmatpush1.bf16.msra.mxu0 %v346
    %352 = vmatprep.subr.bf16.mxu0 0
    %353 = vmatpush1.bf16.msra.mxu0 %v347
    %354 = vmatprep.subr.bf16.mxu0 0
    %355 = vmatpush1.bf16.msra.mxu0 0
    %356 = vmatprep.subr.bf16.mxu0 0
    %357 = vmatpush1.bf16.msra.mxu0 0
    %358 = vmatprep.subr.bf16.mxu0 0
    %359 = vmatpush1.bf16.msra.mxu0 0
    %360 = vmatprep.subr.bf16.mxu0 0
    %361 = vmatpush1.bf16.msra.mxu0 0
    %362 = vmatprep.subr.bf16.mxu0 0
    %363 = vmatpush1.bf16.msra.mxu0 0
    %364 = vmatprep.subr.bf16.mxu0 0
    %365 = vmatpush1.bf16.msra.mxu0 0
    %366 = vmatprep.subr.bf16.mxu0 0
    %367 = vmatpush1.bf16.msra.mxu0 0
    %368 = vmatprep.subr.bf16.mxu0 0
    %369 = vmatpush1.bf16.msra.mxu0 0
    %370 = vmatprep.subr.bf16.mxu0 0
    %371 = vmatpush1.bf16.msra.mxu0 0
    %372 = vmatprep.subr.bf16.mxu0 0
    %373 = vmatpush1.bf16.msra.mxu0 0
    %374 = vmatprep.subr.bf16.mxu0 0
    %375 = vmatpush1.bf16.msra.mxu0 0
    %376 = vmatprep.subr.bf16.mxu0 0
    %377 = vmatpush1.bf16.msra.mxu0 0
    %378 = vmatprep.subr.bf16.mxu0 0
    %379 = vmatpush1.bf16.msra.mxu0 0
    %380 = vmatprep.subr.bf16.mxu0 0
    %381 = vmatpush1.bf16.msra.mxu0 0
    %382 = vmatprep.mubr.bf16.mxu0 0
    %383 = vmatmul.mubr.bf16.gmra.mrb[0].mxu0 %v244
    %v384 = vpop.f32.mrb[0].mxu0
    %v385 = vadd.f32 %v182, %v384
    %v386 = vpop.f32.mrb[0].mxu0
    %v387 = vpop.f32.mrb[0].mxu0
    %v388 = vpop.f32.mrb[0].mxu0
    %389 = vdwg.mxu0
    %v394 = vunpack.c.l.b16 %v63
    %v395 = vunpack.c.l.b16 %v64
    %v396 = vunpack.c.l.b16 %v65
    %v397 = vunpack.c.l.b16 %v66
    %v398 = vpack.c.b16 %v395, %v394
    %v399 = vpack.c.b16 %v397, %v396
    %402 = vmatprep.subr.bf16.mxu0 0
    %403 = vmatpush1.bf16.msra.mxu0 %v398
    %404 = vmatprep.subr.bf16.mxu0 0
    %405 = vmatpush1.bf16.msra.mxu0 %v399
    %406 = vmatprep.subr.bf16.mxu0 0
    %407 = vmatpush1.bf16.msra.mxu0 0
    %408 = vmatprep.subr.bf16.mxu0 0
    %409 = vmatpush1.bf16.msra.mxu0 0
    %410 = vmatprep.subr.bf16.mxu0 0
    %411 = vmatpush1.bf16.msra.mxu0 0
    %412 = vmatprep.subr.bf16.mxu0 0
    %413 = vmatpush1.bf16.msra.mxu0 0
    %414 = vmatprep.subr.bf16.mxu0 0
    %415 = vmatpush1.bf16.msra.mxu0 0
    %416 = vmatprep.subr.bf16.mxu0 0
    %417 = vmatpush1.bf16.msra.mxu0 0
    %418 = vmatprep.subr.bf16.mxu0 0
    %419 = vmatpush1.bf16.msra.mxu0 0
    %420 = vmatprep.subr.bf16.mxu0 0
    %421 = vmatpush1.bf16.msra.mxu0 0
    %422 = vmatprep.subr.bf16.mxu0 0
    %423 = vmatpush1.bf16.msra.mxu0 0
    %424 = vmatprep.subr.bf16.mxu0 0
    %425 = vmatpush1.bf16.msra.mxu0 0
    %426 = vmatprep.subr.bf16.mxu0 0
    %427 = vmatpush1.bf16.msra.mxu0 0
    %428 = vmatprep.subr.bf16.mxu0 0
    %429 = vmatpush1.bf16.msra.mxu0 0
    %430 = vmatprep.subr.bf16.mxu0 0
    %431 = vmatpush1.bf16.msra.mxu0 0
    %432 = vmatprep.subr.bf16.mxu0 0
    %433 = vmatpush1.bf16.msra.mxu0 0
    %434 = vmatprep.mubr.bf16.mxu0 0
    %435 = vmatmul.mubr.bf16.gmra.mrb[0].mxu0 %v244
    %v436 = vpop.f32.mrb[0].mxu0
    %v437 = vadd.f32 %v186, %v436
    %v438 = vpop.f32.mrb[0].mxu0
    %v439 = vpop.f32.mrb[0].mxu0
    %v440 = vpop.f32.mrb[0].mxu0
    %441 = vdwg.mxu0
    %v446 = vunpack.c.l.b16 %v67
    %v447 = vunpack.c.l.b16 %v68
    %v448 = vunpack.c.l.b16 %v69
    %v449 = vunpack.c.l.b16 %v70
    %v450 = vpack.c.b16 %v447, %v446
    %v451 = vpack.c.b16 %v449, %v448
    %454 = vmatprep.subr.bf16.mxu0 0
    %455 = vmatpush1.bf16.msra.mxu0 %v450
    %456 = vmatprep.subr.bf16.mxu0 0
    %457 = vmatpush1.bf16.msra.mxu0 %v451
    %458 = vmatprep.subr.bf16.mxu0 0
    %459 = vmatpush1.bf16.msra.mxu0 0
    %460 = vmatprep.subr.bf16.mxu0 0
    %461 = vmatpush1.bf16.msra.mxu0 0
    %462 = vmatprep.subr.bf16.mxu0 0
    %463 = vmatpush1.bf16.msra.mxu0 0
    %464 = vmatprep.subr.bf16.mxu0 0
    %465 = vmatpush1.bf16.msra.mxu0 0
    %466 = vmatprep.subr.bf16.mxu0 0
    %467 = vmatpush1.bf16.msra.mxu0 0
    %468 = vmatprep.subr.bf16.mxu0 0
    %469 = vmatpush1.bf16.msra.mxu0 0
    %470 = vmatprep.subr.bf16.mxu0 0
    %471 = vmatpush1.bf16.msra.mxu0 0
    %472 = vmatprep.subr.bf16.mxu0 0
    %473 = vmatpush1.bf16.msra.mxu0 0
    %474 = vmatprep.subr.bf16.mxu0 0
    %475 = vmatpush1.bf16.msra.mxu0 0
    %476 = vmatprep.subr.bf16.mxu0 0
    %477 = vmatpush1.bf16.msra.mxu0 0
    %478 = vmatprep.subr.bf16.mxu0 0
    %479 = vmatpush1.bf16.msra.mxu0 0
    %480 = vmatprep.subr.bf16.mxu0 0
    %481 = vmatpush1.bf16.msra.mxu0 0
    %482 = vmatprep.subr.bf16.mxu0 0
    %483 = vmatpush1.bf16.msra.mxu0 0
    %484 = vmatprep.subr.bf16.mxu0 0
    %485 = vmatpush1.bf16.msra.mxu0 0
    %486 = vmatprep.mubr.bf16.mxu0 0
    %487 = vmatmul.mubr.bf16.gmra.mrb[0].mxu0 %v244
    %v488 = vpop.f32.mrb[0].mxu0
    %v489 = vadd.f32 %v190, %v488
    %v490 = vpop.f32.mrb[0].mxu0
    %v491 = vpop.f32.mrb[0].mxu0
    %v492 = vpop.f32.mrb[0].mxu0
    %493 = vdwg.mxu0
    %v498 = vunpack.c.l.b16 %v71
    %v499 = vunpack.c.l.b16 %v72
    %v500 = vunpack.c.l.b16 %v73
    %v501 = vunpack.c.l.b16 %v74
    %v502 = vpack.c.b16 %v499, %v498
    %v503 = vpack.c.b16 %v501, %v500
    %506 = vmatprep.subr.bf16.mxu0 0
    %507 = vmatpush1.bf16.msra.mxu0 %v502
    %508 = vmatprep.subr.bf16.mxu0 0
    %509 = vmatpush1.bf16.msra.mxu0 %v503
    %510 = vmatprep.subr.bf16.mxu0 0
    %511 = vmatpush1.bf16.msra.mxu0 0
    %512 = vmatprep.subr.bf16.mxu0 0
    %513 = vmatpush1.bf16.msra.mxu0 0
    %514 = vmatprep.subr.bf16.mxu0 0
    %515 = vmatpush1.bf16.msra.mxu0 0
    %516 = vmatprep.subr.bf16.mxu0 0
    %517 = vmatpush1.bf16.msra.mxu0 0
    %518 = vmatprep.subr.bf16.mxu0 0
    %519 = vmatpush1.bf16.msra.mxu0 0
    %520 = vmatprep.subr.bf16.mxu0 0
    %521 = vmatpush1.bf16.msra.mxu0 0
    %522 = vmatprep.subr.bf16.mxu0 0
    %523 = vmatpush1.bf16.msra.mxu0 0
    %524 = vmatprep.subr.bf16.mxu0 0
    %525 = vmatpush1.bf16.msra.mxu0 0
    %526 = vmatprep.subr.bf16.mxu0 0
    %527 = vmatpush1.bf16.msra.mxu0 0
    %528 = vmatprep.subr.bf16.mxu0 0
    %529 = vmatpush1.bf16.msra.mxu0 0
    %530 = vmatprep.subr.bf16.mxu0 0
    %531 = vmatpush1.bf16.msra.mxu0 0
    %532 = vmatprep.subr.bf16.mxu0 0
    %533 = vmatpush1.bf16.msra.mxu0 0
    %534 = vmatprep.subr.bf16.mxu0 0
    %535 = vmatpush1.bf16.msra.mxu0 0
    %536 = vmatprep.subr.bf16.mxu0 0
    %537 = vmatpush1.bf16.msra.mxu0 0
    %538 = vmatprep.mubr.bf16.mxu0 0
    %539 = vmatmul.mubr.bf16.gmra.mrb[0].mxu0 %v244
    %v540 = vpop.f32.mrb[0].mxu0
    %v541 = vadd.f32 %v194, %v540
    %v542 = vpop.f32.mrb[0].mxu0
    %v543 = vpop.f32.mrb[0].mxu0
    %v544 = vpop.f32.mrb[0].mxu0
    %545 = vdwg.mxu0
    %v550 = vunpack.c.l.b16 %v75
    %v551 = vunpack.c.l.b16 %v76
    %v552 = vunpack.c.l.b16 %v77
    %v553 = vunpack.c.l.b16 %v78
    %v554 = vpack.c.b16 %v551, %v550
    %v555 = vpack.c.b16 %v553, %v552
    %558 = vmatprep.subr.bf16.mxu0 0
    %559 = vmatpush1.bf16.msra.mxu0 %v554
    %560 = vmatprep.subr.bf16.mxu0 0
    %561 = vmatpush1.bf16.msra.mxu0 %v555
    %562 = vmatprep.subr.bf16.mxu0 0
    %563 = vmatpush1.bf16.msra.mxu0 0
    %564 = vmatprep.subr.bf16.mxu0 0
    %565 = vmatpush1.bf16.msra.mxu0 0
    %566 = vmatprep.subr.bf16.mxu0 0
    %567 = vmatpush1.bf16.msra.mxu0 0
    %568 = vmatprep.subr.bf16.mxu0 0
    %569 = vmatpush1.bf16.msra.mxu0 0
    %570 = vmatprep.subr.bf16.mxu0 0
    %571 = vmatpush1.bf16.msra.mxu0 0
    %572 = vmatprep.subr.bf16.mxu0 0
    %573 = vmatpush1.bf16.msra.mxu0 0
    %574 = vmatprep.subr.bf16.mxu0 0
    %575 = vmatpush1.bf16.msra.mxu0 0
    %576 = vmatprep.subr.bf16.mxu0 0
    %577 = vmatpush1.bf16.msra.mxu0 0
    %578 = vmatprep.subr.bf16.mxu0 0
    %579 = vmatpush1.bf16.msra.mxu0 0
    %580 = vmatprep.subr.bf16.mxu0 0
    %581 = vmatpush1.bf16.msra.mxu0 0
    %582 = vmatprep.subr.bf16.mxu0 0
    %583 = vmatpush1.bf16.msra.mxu0 0
    %584 = vmatprep.subr.bf16.mxu0 0
    %585 = vmatpush1.bf16.msra.mxu0 0
    %586 = vmatprep.subr.bf16.mxu0 0
    %587 = vmatpush1.bf16.msra.mxu0 0
    %588 = vmatprep.subr.bf16.mxu0 0
    %589 = vmatpush1.bf16.msra.mxu0 0
    %590 = vmatprep.mubr.bf16.mxu0 0
    %591 = vmatmul.mubr.bf16.gmra.mrb[0].mxu0 %v244
    %v592 = vpop.f32.mrb[0].mxu0
    %v593 = vadd.f32 %v198, %v592
    %v594 = vpop.f32.mrb[0].mxu0
    %v595 = vpop.f32.mrb[0].mxu0
    %v596 = vpop.f32.mrb[0].mxu0
    %597 = vdwg.mxu0
    %v602 = vunpack.c.l.b16 %v79
    %v603 = vunpack.c.l.b16 %v80
    %v604 = vunpack.c.l.b16 %v81
    %v605 = vunpack.c.l.b16 %v82
    %v606 = vpack.c.b16 %v603, %v602
    %v607 = vpack.c.b16 %v605, %v604
    %610 = vmatprep.subr.bf16.mxu0 0
    %611 = vmatpush1.bf16.msra.mxu0 %v606
    %612 = vmatprep.subr.bf16.mxu0 0
    %613 = vmatpush1.bf16.msra.mxu0 %v607
    %614 = vmatprep.subr.bf16.mxu0 0
    %615 = vmatpush1.bf16.msra.mxu0 0
    %616 = vmatprep.subr.bf16.mxu0 0
    %617 = vmatpush1.bf16.msra.mxu0 0
    %618 = vmatprep.subr.bf16.mxu0 0
    %619 = vmatpush1.bf16.msra.mxu0 0
    %620 = vmatprep.subr.bf16.mxu0 0
    %621 = vmatpush1.bf16.msra.mxu0 0
    %622 = vmatprep.subr.bf16.mxu0 0
    %623 = vmatpush1.bf16.msra.mxu0 0
    %624 = vmatprep.subr.bf16.mxu0 0
    %625 = vmatpush1.bf16.msra.mxu0 0
    %626 = vmatprep.subr.bf16.mxu0 0
    %627 = vmatpush1.bf16.msra.mxu0 0
    %628 = vmatprep.subr.bf16.mxu0 0
    %629 = vmatpush1.bf16.msra.mxu0 0
    %630 = vmatprep.subr.bf16.mxu0 0
    %631 = vmatpush1.bf16.msra.mxu0 0
    %632 = vmatprep.subr.bf16.mxu0 0
    %633 = vmatpush1.bf16.msra.mxu0 0
    %634 = vmatprep.subr.bf16.mxu0 0
    %635 = vmatpush1.bf16.msra.mxu0 0
    %636 = vmatprep.subr.bf16.mxu0 0
    %637 = vmatpush1.bf16.msra.mxu0 0
    %638 = vmatprep.subr.bf16.mxu0 0
    %639 = vmatpush1.bf16.msra.mxu0 0
    %640 = vmatprep.subr.bf16.mxu0 0
    %641 = vmatpush1.bf16.msra.mxu0 0
    %642 = vmatprep.mubr.bf16.mxu0 0
    %643 = vmatmul.mubr.bf16.gmra.mrb[0].mxu0 %v244
    %v644 = vpop.f32.mrb[0].mxu0
    %v645 = vadd.f32 %v202, %v644
    %v646 = vpop.f32.mrb[0].mxu0
    %v647 = vpop.f32.mrb[0].mxu0
    %v648 = vpop.f32.mrb[0].mxu0
    %649 = vdwg.mxu0
    %v654 = vunpack.c.l.b16 %v83
    %v655 = vunpack.c.l.b16 %v84
    %v656 = vunpack.c.l.b16 %v85
    %v657 = vunpack.c.l.b16 %v86
    %v658 = vpack.c.b16 %v655, %v654
    %v659 = vpack.c.b16 %v657, %v656
    %662 = vmatprep.subr.bf16.mxu0 0
    %663 = vmatpush1.bf16.msra.mxu0 %v658
    %664 = vmatprep.subr.bf16.mxu0 0
    %665 = vmatpush1.bf16.msra.mxu0 %v659
    %666 = vmatprep.subr.bf16.mxu0 0
    %667 = vmatpush1.bf16.msra.mxu0 0
    %668 = vmatprep.subr.bf16.mxu0 0
    %669 = vmatpush1.bf16.msra.mxu0 0
    %670 = vmatprep.subr.bf16.mxu0 0
    %671 = vmatpush1.bf16.msra.mxu0 0
    %672 = vmatprep.subr.bf16.mxu0 0
    %673 = vmatpush1.bf16.msra.mxu0 0
    %674 = vmatprep.subr.bf16.mxu0 0
    %675 = vmatpush1.bf16.msra.mxu0 0
    %676 = vmatprep.subr.bf16.mxu0 0
    %677 = vmatpush1.bf16.msra.mxu0 0
    %678 = vmatprep.subr.bf16.mxu0 0
    %679 = vmatpush1.bf16.msra.mxu0 0
    %680 = vmatprep.subr.bf16.mxu0 0
    %681 = vmatpush1.bf16.msra.mxu0 0
    %682 = vmatprep.subr.bf16.mxu0 0
    %683 = vmatpush1.bf16.msra.mxu0 0
    %684 = vmatprep.subr.bf16.mxu0 0
    %685 = vmatpush1.bf16.msra.mxu0 0
    %686 = vmatprep.subr.bf16.mxu0 0
    %687 = vmatpush1.bf16.msra.mxu0 0
    %688 = vmatprep.subr.bf16.mxu0 0
    %689 = vmatpush1.bf16.msra.mxu0 0
    %690 = vmatprep.subr.bf16.mxu0 0
    %691 = vmatpush1.bf16.msra.mxu0 0
    %692 = vmatprep.subr.bf16.mxu0 0
    %693 = vmatpush1.bf16.msra.mxu0 0
    %694 = vmatprep.mubr.bf16.mxu0 0
    %695 = vmatmul.mubr.bf16.gmra.mrb[0].mxu0 %v244
    %v696 = vpop.f32.mrb[0].mxu0
    %v697 = vadd.f32 %v206, %v696
    %v698 = vpop.f32.mrb[0].mxu0
    %v699 = vpop.f32.mrb[0].mxu0
    %v700 = vpop.f32.mrb[0].mxu0
    %701 = vdwg.mxu0
    %v706 = vunpack.c.l.b16 %v87
    %v707 = vunpack.c.l.b16 %v88
    %v708 = vunpack.c.l.b16 %v89
    %v709 = vunpack.c.l.b16 %v90
    %v710 = vpack.c.b16 %v707, %v706
    %v711 = vpack.c.b16 %v709, %v708
    %714 = vmatprep.subr.bf16.mxu0 0
    %715 = vmatpush1.bf16.msra.mxu0 %v710
    %716 = vmatprep.subr.bf16.mxu0 0
    %717 = vmatpush1.bf16.msra.mxu0 %v711
    %718 = vmatprep.subr.bf16.mxu0 0
    %719 = vmatpush1.bf16.msra.mxu0 0
    %720 = vmatprep.subr.bf16.mxu0 0
    %721 = vmatpush1.bf16.msra.mxu0 0
    %722 = vmatprep.subr.bf16.mxu0 0
    %723 = vmatpush1.bf16.msra.mxu0 0
    %724 = vmatprep.subr.bf16.mxu0 0
    %725 = vmatpush1.bf16.msra.mxu0 0
    %726 = vmatprep.subr.bf16.mxu0 0
    %727 = vmatpush1.bf16.msra.mxu0 0
    %728 = vmatprep.subr.bf16.mxu0 0
    %729 = vmatpush1.bf16.msra.mxu0 0
    %730 = vmatprep.subr.bf16.mxu0 0
    %731 = vmatpush1.bf16.msra.mxu0 0
    %732 = vmatprep.subr.bf16.mxu0 0
    %733 = vmatpush1.bf16.msra.mxu0 0
    %734 = vmatprep.subr.bf16.mxu0 0
    %735 = vmatpush1.bf16.msra.mxu0 0
    %736 = vmatprep.subr.bf16.mxu0 0
    %737 = vmatpush1.bf16.msra.mxu0 0
    %738 = vmatprep.subr.bf16.mxu0 0
    %739 = vmatpush1.bf16.msra.mxu0 0
    %740 = vmatprep.subr.bf16.mxu0 0
    %741 = vmatpush1.bf16.msra.mxu0 0
    %742 = vmatprep.subr.bf16.mxu0 0
    %743 = vmatpush1.bf16.msra.mxu0 0
    %744 = vmatprep.subr.bf16.mxu0 0
    %745 = vmatpush1.bf16.msra.mxu0 0
    %746 = vmatprep.mubr.bf16.mxu0 0
    %747 = vmatmul.mubr.bf16.gmra.mrb[0].mxu0 %v244
    %v748 = vpop.f32.mrb[0].mxu0
    %v749 = vadd.f32 %v210, %v748
    %v750 = vpop.f32.mrb[0].mxu0
    %v751 = vpop.f32.mrb[0].mxu0
    %v752 = vpop.f32.mrb[0].mxu0
    %753 = vdwg.mxu0
    %v758 = vunpack.c.l.b16 %v91
    %v759 = vunpack.c.l.b16 %v92
    %v760 = vunpack.c.l.b16 %v93
    %v761 = vunpack.c.l.b16 %v94
    %v762 = vpack.c.b16 %v759, %v758
    %v763 = vpack.c.b16 %v761, %v760
    %766 = vmatprep.subr.bf16.mxu0 0
    %767 = vmatpush1.bf16.msra.mxu0 %v762
    %768 = vmatprep.subr.bf16.mxu0 0
    %769 = vmatpush1.bf16.msra.mxu0 %v763
    %770 = vmatprep.subr.bf16.mxu0 0
    %771 = vmatpush1.bf16.msra.mxu0 0
    %772 = vmatprep.subr.bf16.mxu0 0
    %773 = vmatpush1.bf16.msra.mxu0 0
    %774 = vmatprep.subr.bf16.mxu0 0
    %775 = vmatpush1.bf16.msra.mxu0 0
    %776 = vmatprep.subr.bf16.mxu0 0
    %777 = vmatpush1.bf16.msra.mxu0 0
    %778 = vmatprep.subr.bf16.mxu0 0
    %779 = vmatpush1.bf16.msra.mxu0 0
    %780 = vmatprep.subr.bf16.mxu0 0
    %781 = vmatpush1.bf16.msra.mxu0 0
    %782 = vmatprep.subr.bf16.mxu0 0
    %783 = vmatpush1.bf16.msra.mxu0 0
    %784 = vmatprep.subr.bf16.mxu0 0
    %785 = vmatpush1.bf16.msra.mxu0 0
    %786 = vmatprep.subr.bf16.mxu0 0
    %787 = vmatpush1.bf16.msra.mxu0 0
    %788 = vmatprep.subr.bf16.mxu0 0
    %789 = vmatpush1.bf16.msra.mxu0 0
    %790 = vmatprep.subr.bf16.mxu0 0
    %791 = vmatpush1.bf16.msra.mxu0 0
    %792 = vmatprep.subr.bf16.mxu0 0
    %793 = vmatpush1.bf16.msra.mxu0 0
    %794 = vmatprep.subr.bf16.mxu0 0
    %795 = vmatpush1.bf16.msra.mxu0 0
    %796 = vmatprep.subr.bf16.mxu0 0
    %797 = vmatpush1.bf16.msra.mxu0 0
    %798 = vmatprep.mubr.bf16.mxu0 0
    %799 = vmatmul.mubr.bf16.gmra.mrb[0].mxu0 %v244
    %v800 = vpop.f32.mrb[0].mxu0
    %v801 = vadd.f32 %v214, %v800
    %v802 = vpop.f32.mrb[0].mxu0
    %v803 = vpop.f32.mrb[0].mxu0
    %v804 = vpop.f32.mrb[0].mxu0
    %805 = vdwg.mxu0
    %v810 = vunpack.c.l.b16 %v95
    %v811 = vunpack.c.l.b16 %v96
    %v812 = vunpack.c.l.b16 %v97
    %v813 = vunpack.c.l.b16 %v98
    %v814 = vpack.c.b16 %v811, %v810
    %v815 = vpack.c.b16 %v813, %v812
    %818 = vmatprep.subr.bf16.mxu0 0
    %819 = vmatpush1.bf16.msra.mxu0 %v814
    %820 = vmatprep.subr.bf16.mxu0 0
    %821 = vmatpush1.bf16.msra.mxu0 %v815
    %822 = vmatprep.subr.bf16.mxu0 0
    %823 = vmatpush1.bf16.msra.mxu0 0
    %824 = vmatprep.subr.bf16.mxu0 0
    %825 = vmatpush1.bf16.msra.mxu0 0
    %826 = vmatprep.subr.bf16.mxu0 0
    %827 = vmatpush1.bf16.msra.mxu0 0
    %828 = vmatprep.subr.bf16.mxu0 0
    %829 = vmatpush1.bf16.msra.mxu0 0
    %830 = vmatprep.subr.bf16.mxu0 0
    %831 = vmatpush1.bf16.msra.mxu0 0
    %832 = vmatprep.subr.bf16.mxu0 0
    %833 = vmatpush1.bf16.msra.mxu0 0
    %834 = vmatprep.subr.bf16.mxu0 0
    %835 = vmatpush1.bf16.msra.mxu0 0
    %836 = vmatprep.subr.bf16.mxu0 0
    %837 = vmatpush1.bf16.msra.mxu0 0
    %838 = vmatprep.subr.bf16.mxu0 0
    %839 = vmatpush1.bf16.msra.mxu0 0
    %840 = vmatprep.subr.bf16.mxu0 0
    %841 = vmatpush1.bf16.msra.mxu0 0
    %842 = vmatprep.subr.bf16.mxu0 0
    %843 = vmatpush1.bf16.msra.mxu0 0
    %844 = vmatprep.subr.bf16.mxu0 0
    %845 = vmatpush1.bf16.msra.mxu0 0
    %846 = vmatprep.subr.bf16.mxu0 0
    %847 = vmatpush1.bf16.msra.mxu0 0
    %848 = vmatprep.subr.bf16.mxu0 0
    %849 = vmatpush1.bf16.msra.mxu0 0
    %850 = vmatprep.mubr.bf16.mxu0 0
    %851 = vmatmul.mubr.bf16.gmra.mrb[0].mxu0 %v244
    %v852 = vpop.f32.mrb[0].mxu0
    %v853 = vadd.f32 %v218, %v852
    %v854 = vpop.f32.mrb[0].mxu0
    %v855 = vpop.f32.mrb[0].mxu0
    %v856 = vpop.f32.mrb[0].mxu0
    %857 = vdwg.mxu0
    %v858 = vpack.c.bf16 %v281, %v281
    %v859 = vpack.c.bf16 %v333, %v333
    %v860 = vpack.c.bf16 %v385, %v385
    %v861 = vpack.c.bf16 %v437, %v437
    %v862 = vpack.c.bf16 %v489, %v489
    %v863 = vpack.c.bf16 %v541, %v541
    %v864 = vpack.c.bf16 %v593, %v593
    %v865 = vpack.c.bf16 %v645, %v645
    %v866 = vpack.c.bf16 %v697, %v697
    %v867 = vpack.c.bf16 %v749, %v749
    %v868 = vpack.c.bf16 %v801, %v801
    %v869 = vpack.c.bf16 %v853, %v853
    %v870 = vld [vmem:[%s2] sm:$0xff]
    %vm871 = vcmask 64512
    %v873 = vsel %vm871, %v858, 0
    %v876 = vsel %vm871, %v862, 0
    %878 = vmatprep.subr.bf16.mxu0 0
    %879 = vmatpush1.bf16.xpose.msra.mxu0 %v876
    %880 = vmatprep.subr.bf16.mxu0 0
    %881 = vmatpush1.bf16.xpose.msra.mxu0 0
    %882 = vmatprep.subr.bf16.mxu0 0
    %883 = vmatpush1.bf16.xpose.msra.mxu0 0
    %884 = vmatprep.subr.bf16.mxu0 0
    %885 = vmatpush1.bf16.xpose.msra.mxu0 0
    %886 = vmatprep.subr.bf16.mxu0 0
    %887 = vmatpush1.bf16.xpose.msra.mxu0 0
    %888 = vmatprep.subr.bf16.mxu0 0
    %889 = vmatpush1.bf16.xpose.msra.mxu0 0
    %890 = vmatprep.subr.bf16.mxu0 0
    %891 = vmatpush1.bf16.xpose.msra.mxu0 0
    %892 = vmatprep.subr.bf16.mxu0 0
    %893 = vmatpush1.bf16.xpose.msra.mxu0 0
    %894 = vmatprep.subr.bf16.mxu0 0
    %895 = vmatpush1.bf16.xpose.msra.mxu0 0
    %896 = vmatprep.subr.bf16.mxu0 0
    %897 = vmatpush1.bf16.xpose.msra.mxu0 0
    %898 = vmatprep.subr.bf16.mxu0 0
    %899 = vmatpush1.bf16.xpose.msra.mxu0 0
    %900 = vmatprep.subr.bf16.mxu0 0
    %901 = vmatpush1.bf16.xpose.msra.mxu0 0
    %902 = vmatprep.subr.bf16.mxu0 0
    %903 = vmatpush1.bf16.xpose.msra.mxu0 0
    %904 = vmatprep.subr.bf16.mxu0 0
    %905 = vmatpush1.bf16.xpose.msra.mxu0 0
    %906 = vmatprep.subr.bf16.mxu0 0
    %907 = vmatpush1.bf16.xpose.msra.mxu0 0
    %908 = vmatprep.subr.bf16.mxu0 0
    %909 = vmatpush1.bf16.xpose.msra.mxu0 0
    %910 = vmatprep.mubr.bf16.mxu0 0
    %911 = vmatmul.mubr.bf16.gmra.mrb[0].mxu0 %v873
    %v912 = vpop.f32.mrb[0].mxu0
    %v913 = vadd.f32 %v870, %v912
    %v914 = vpop.f32.mrb[0].mxu0
    %v915 = vpop.f32.mrb[0].mxu0
    %v916 = vpop.f32.mrb[0].mxu0
    %917 = vdwg.mxu0
    %v919 = vsel %vm871, %v859, 0
    %v922 = vsel %vm871, %v863, 0
    %924 = vmatprep.subr.bf16.mxu0 0
    %925 = vmatpush1.bf16.xpose.msra.mxu0 %v922
    %926 = vmatprep.subr.bf16.mxu0 0
    %927 = vmatpush1.bf16.xpose.msra.mxu0 0
    %928 = vmatprep.subr.bf16.mxu0 0
    %929 = vmatpush1.bf16.xpose.msra.mxu0 0
    %930 = vmatprep.subr.bf16.mxu0 0
    %931 = vmatpush1.bf16.xpose.msra.mxu0 0
    %932 = vmatprep.subr.bf16.mxu0 0
    %933 = vmatpush1.bf16.xpose.msra.mxu0 0
    %934 = vmatprep.subr.bf16.mxu0 0
    %935 = vmatpush1.bf16.xpose.msra.mxu0 0
    %936 = vmatprep.subr.bf16.mxu0 0
    %937 = vmatpush1.bf16.xpose.msra.mxu0 0
    %938 = vmatprep.subr.bf16.mxu0 0
    %939 = vmatpush1.bf16.xpose.msra.mxu0 0
    %940 = vmatprep.subr.bf16.mxu0 0
    %941 = vmatpush1.bf16.xpose.msra.mxu0 0
    %942 = vmatprep.subr.bf16.mxu0 0
    %943 = vmatpush1.bf16.xpose.msra.mxu0 0
    %944 = vmatprep.subr.bf16.mxu0 0
    %945 = vmatpush1.bf16.xpose.msra.mxu0 0
    %946 = vmatprep.subr.bf16.mxu0 0
    %947 = vmatpush1.bf16.xpose.msra.mxu0 0
    %948 = vmatprep.subr.bf16.mxu0 0
    %949 = vmatpush1.bf16.xpose.msra.mxu0 0
    %950 = vmatprep.subr.bf16.mxu0 0
    %951 = vmatpush1.bf16.xpose.msra.mxu0 0
    %952 = vmatprep.subr.bf16.mxu0 0
    %953 = vmatpush1.bf16.xpose.msra.mxu0 0
    %954 = vmatprep.subr.bf16.mxu0 0
    %955 = vmatpush1.bf16.xpose.msra.mxu0 0
    %956 = vmatprep.mubr.bf16.mxu0 0
    %957 = vmatmul.mubr.bf16.gmra.mrb[0].mxu0 %v919
    %v958 = vpop.f32.mrb[0].mxu0
    %v959 = vadd.f32 %v870, %v958
    %v960 = vpop.f32.mrb[0].mxu0
    %v961 = vpop.f32.mrb[0].mxu0
    %v962 = vpop.f32.mrb[0].mxu0
    %963 = vdwg.mxu0
    %v965 = vsel %vm871, %v860, 0
    %v968 = vsel %vm871, %v864, 0
    %970 = vmatprep.subr.bf16.mxu0 0
    %971 = vmatpush1.bf16.xpose.msra.mxu0 %v968
    %972 = vmatprep.subr.bf16.mxu0 0
    %973 = vmatpush1.bf16.xpose.msra.mxu0 0
    %974 = vmatprep.subr.bf16.mxu0 0
    %975 = vmatpush1.bf16.xpose.msra.mxu0 0
    %976 = vmatprep.subr.bf16.mxu0 0
    %977 = vmatpush1.bf16.xpose.msra.mxu0 0
    %978 = vmatprep.subr.bf16.mxu0 0
    %979 = vmatpush1.bf16.xpose.msra.mxu0 0
    %980 = vmatprep.subr.bf16.mxu0 0
    %981 = vmatpush1.bf16.xpose.msra.mxu0 0
    %982 = vmatprep.subr.bf16.mxu0 0
    %983 = vmatpush1.bf16.xpose.msra.mxu0 0
    %984 = vmatprep.subr.bf16.mxu0 0
    %985 = vmatpush1.bf16.xpose.msra.mxu0 0
    %986 = vmatprep.subr.bf16.mxu0 0
    %987 = vmatpush1.bf16.xpose.msra.mxu0 0
    %988 = vmatprep.subr.bf16.mxu0 0
    %989 = vmatpush1.bf16.xpose.msra.mxu0 0
    %990 = vmatprep.subr.bf16.mxu0 0
    %991 = vmatpush1.bf16.xpose.msra.mxu0 0
    %992 = vmatprep.subr.bf16.mxu0 0
    %993 = vmatpush1.bf16.xpose.msra.mxu0 0
    %994 = vmatprep.subr.bf16.mxu0 0
    %995 = vmatpush1.bf16.xpose.msra.mxu0 0
    %996 = vmatprep.subr.bf16.mxu0 0
    %997 = vmatpush1.bf16.xpose.msra.mxu0 0
    %998 = vmatprep.subr.bf16.mxu0 0
    %999 = vmatpush1.bf16.xpose.msra.mxu0 0
    %1000 = vmatprep.subr.bf16.mxu0 0
    %1001 = vmatpush1.bf16.xpose.msra.mxu0 0
    %1002 = vmatprep.mubr.bf16.mxu0 0
    %1003 = vmatmul.mubr.bf16.gmra.mrb[0].mxu0 %v965
    %v1004 = vpop.f32.mrb[0].mxu0
    %v1005 = vadd.f32 %v870, %v1004
    %v1006 = vpop.f32.mrb[0].mxu0
    %v1007 = vpop.f32.mrb[0].mxu0
    %v1008 = vpop.f32.mrb[0].mxu0
    %1009 = vdwg.mxu0
    %v1011 = vsel %vm871, %v861, 0
    %v1014 = vsel %vm871, %v865, 0
    %1016 = vmatprep.subr.bf16.mxu0 0
    %1017 = vmatpush1.bf16.xpose.msra.mxu0 %v1014
    %1018 = vmatprep.subr.bf16.mxu0 0
    %1019 = vmatpush1.bf16.xpose.msra.mxu0 0
    %1020 = vmatprep.subr.bf16.mxu0 0
    %1021 = vmatpush1.bf16.xpose.msra.mxu0 0
    %1022 = vmatprep.subr.bf16.mxu0 0
    %1023 = vmatpush1.bf16.xpose.msra.mxu0 0
    %1024 = vmatprep.subr.bf16.mxu0 0
    %1025 = vmatpush1.bf16.xpose.msra.mxu0 0
    %1026 = vmatprep.subr.bf16.mxu0 0
    %1027 = vmatpush1.bf16.xpose.msra.mxu0 0
    %1028 = vmatprep.subr.bf16.mxu0 0
    %1029 = vmatpush1.bf16.xpose.msra.mxu0 0
    %1030 = vmatprep.subr.bf16.mxu0 0
    %1031 = vmatpush1.bf16.xpose.msra.mxu0 0
    %1032 = vmatprep.subr.bf16.mxu0 0
    %1033 = vmatpush1.bf16.xpose.msra.mxu0 0
    %1034 = vmatprep.subr.bf16.mxu0 0
    %1035 = vmatpush1.bf16.xpose.msra.mxu0 0
    %1036 = vmatprep.subr.bf16.mxu0 0
    %1037 = vmatpush1.bf16.xpose.msra.mxu0 0
    %1038 = vmatprep.subr.bf16.mxu0 0
    %1039 = vmatpush1.bf16.xpose.msra.mxu0 0
    %1040 = vmatprep.subr.bf16.mxu0 0
    %1041 = vmatpush1.bf16.xpose.msra.mxu0 0
    %1042 = vmatprep.subr.bf16.mxu0 0
    %1043 = vmatpush1.bf16.xpose.msra.mxu0 0
    %1044 = vmatprep.subr.bf16.mxu0 0
    %1045 = vmatpush1.bf16.xpose.msra.mxu0 0
    %1046 = vmatprep.subr.bf16.mxu0 0
    %1047 = vmatpush1.bf16.xpose.msra.mxu0 0
    %1048 = vmatprep.mubr.bf16.mxu0 0
    %1049 = vmatmul.mubr.bf16.gmra.mrb[0].mxu0 %v1011
    %v1050 = vpop.f32.mrb[0].mxu0
    %v1051 = vadd.f32 %v870, %v1050
    %v1052 = vpop.f32.mrb[0].mxu0
    %v1053 = vpop.f32.mrb[0].mxu0
    %v1054 = vpop.f32.mrb[0].mxu0
    %1055 = vdwg.mxu0
    %v1056 = vsel %vm871, %v913, -inf
    %1057 = vmax.xlane.f32.xlu0 %v1056
    %v1058 = vpop.xlane.xlu0 %1057
    %v1059 = vsel %vm871, %v959, -inf
    %1060 = vmax.xlane.f32.xlu0 %v1059
    %v1061 = vpop.xlane.xlu0 %1060
    %v1062 = vsel %vm871, %v1005, -inf
    %1063 = vmax.xlane.f32.xlu0 %v1062
    %v1064 = vpop.xlane.xlu0 %1063
    %v1065 = vsel %vm871, %v1051, -inf
    %1066 = vmax.xlane.f32.xlu0 %v1065
    %v1067 = vpop.xlane.xlu0 %1066
    %v1068 = vsub.f32 %v913, %v1058
    %v1069 = vsub.f32 %v959, %v1061
    %v1070 = vsub.f32 %v1005, %v1064
    %v1071 = vsub.f32 %v1051, %v1067
    %v1072 = vmul.f32 %v1068, 1.442695
    %v1073 = vpow.pop %v1072
    %v1074 = vmul.f32 %v1069, 1.442695
    %v1075 = vpow.pop %v1074
    %v1076 = vmul.f32 %v1070, 1.442695
    %v1077 = vpow.pop %v1076
    %v1078 = vmul.f32 %v1071, 1.442695
    %v1079 = vpow.pop %v1078
    %v1080 = vsel %vm871, %v1073, 0.0
    %1081 = vadd.xlane.f32.xlu0 %v1080
    %v1082 = vpop.xlane.xlu0 %1081
    %v1083 = vsel %vm871, %v1075, 0.0
    %1084 = vadd.xlane.f32.xlu0 %v1083
    %v1085 = vpop.xlane.xlu0 %1084
    %v1086 = vsel %vm871, %v1077, 0.0
    %1087 = vadd.xlane.f32.xlu0 %v1086
    %v1088 = vpop.xlane.xlu0 %1087
    %v1089 = vsel %vm871, %v1079, 0.0
    %1090 = vadd.xlane.f32.xlu0 %v1089
    %v1091 = vpop.xlane.xlu0 %1090
    %v1092 = vrcp.pop %v1082
    %v1093 = vrcp.pop %v1085
    %v1094 = vrcp.pop %v1088
    %v1095 = vrcp.pop %v1091
    %v1096 = vmul.f32 %v1073, %v1092
    %v1097 = vmul.f32 %v1075, %v1093
    %v1098 = vmul.f32 %v1077, %v1094
    %v1099 = vmul.f32 %v1079, %v1095
    %v1100 = vpack.c.bf16 %v1096, %v1096
    %v1101 = vpack.c.bf16 %v1097, %v1097
    %v1102 = vpack.c.bf16 %v1098, %v1098
    %v1103 = vpack.c.bf16 %v1099, %v1099
    %v1105 = vsel %vm871, %v1100, 0
    %vm1107 = vcmask 1043456
    %v1109 = vsel %vm1107, %v866, 0
    %1111 = vmatprep.subr.bf16.mxu0 0
    %1112 = vmatpush1.bf16.msra.mxu0 %v1109
    %1113 = vmatprep.subr.bf16.mxu0 0
    %1114 = vmatpush1.bf16.msra.mxu0 0
    %1115 = vmatprep.subr.bf16.mxu0 0
    %1116 = vmatpush1.bf16.msra.mxu0 0
    %1117 = vmatprep.subr.bf16.mxu0 0
    %1118 = vmatpush1.bf16.msra.mxu0 0
    %1119 = vmatprep.subr.bf16.mxu0 0
    %1120 = vmatpush1.bf16.msra.mxu0 0
    %1121 = vmatprep.subr.bf16.mxu0 0
    %1122 = vmatpush1.bf16.msra.mxu0 0
    %1123 = vmatprep.subr.bf16.mxu0 0
    %1124 = vmatpush1.bf16.msra.mxu0 0
    %1125 = vmatprep.subr.bf16.mxu0 0
    %1126 = vmatpush1.bf16.msra.mxu0 0
    %1127 = vmatprep.subr.bf16.mxu0 0
    %1128 = vmatpush1.bf16.msra.mxu0 0
    %1129 = vmatprep.subr.bf16.mxu0 0
    %1130 = vmatpush1.bf16.msra.mxu0 0
    %1131 = vmatprep.subr.bf16.mxu0 0
    %1132 = vmatpush1.bf16.msra.mxu0 0
    %1133 = vmatprep.subr.bf16.mxu0 0
    %1134 = vmatpush1.bf16.msra.mxu0 0
    %1135 = vmatprep.subr.bf16.mxu0 0
    %1136 = vmatpush1.bf16.msra.mxu0 0
    %1137 = vmatprep.subr.bf16.mxu0 0
    %1138 = vmatpush1.bf16.msra.mxu0 0
    %1139 = vmatprep.subr.bf16.mxu0 0
    %1140 = vmatpush1.bf16.msra.mxu0 0
    %1141 = vmatprep.subr.bf16.mxu0 0
    %1142 = vmatpush1.bf16.msra.mxu0 0
    %1143 = vmatprep.mubr.bf16.mxu0 0
    %1144 = vmatmul.mubr.bf16.gmra.mrb[0].mxu0 %v1105
    %v1145 = vpop.f32.mrb[0].mxu0
    %v1146 = vadd.f32 0.0, %v1145
    %v1147 = vpop.f32.mrb[0].mxu0
    %v1148 = vpop.f32.mrb[0].mxu0
    %v1149 = vpop.f32.mrb[0].mxu0
    %1150 = vdwg.mxu0
    %v1152 = vsel %vm871, %v1101, 0
    %v1155 = vsel %vm1107, %v867, 0
    %1157 = vmatprep.subr.bf16.mxu0 0
    %1158 = vmatpush1.bf16.msra.mxu0 %v1155
    %1159 = vmatprep.subr.bf16.mxu0 0
    %1160 = vmatpush1.bf16.msra.mxu0 0
    %1161 = vmatprep.subr.bf16.mxu0 0
    %1162 = vmatpush1.bf16.msra.mxu0 0
    %1163 = vmatprep.subr.bf16.mxu0 0
    %1164 = vmatpush1.bf16.msra.mxu0 0
    %1165 = vmatprep.subr.bf16.mxu0 0
    %1166 = vmatpush1.bf16.msra.mxu0 0
    %1167 = vmatprep.subr.bf16.mxu0 0
    %1168 = vmatpush1.bf16.msra.mxu0 0
    %1169 = vmatprep.subr.bf16.mxu0 0
    %1170 = vmatpush1.bf16.msra.mxu0 0
    %1171 = vmatprep.subr.bf16.mxu0 0
    %1172 = vmatpush1.bf16.msra.mxu0 0
    %1173 = vmatprep.subr.bf16.mxu0 0
    %1174 = vmatpush1.bf16.msra.mxu0 0
    %1175 = vmatprep.subr.bf16.mxu0 0
    %1176 = vmatpush1.bf16.msra.mxu0 0
    %1177 = vmatprep.subr.bf16.mxu0 0
    %1178 = vmatpush1.bf16.msra.mxu0 0
    %1179 = vmatprep.subr.bf16.mxu0 0
    %1180 = vmatpush1.bf16.msra.mxu0 0
    %1181 = vmatprep.subr.bf16.mxu0 0
    %1182 = vmatpush1.bf16.msra.mxu0 0
    %1183 = vmatprep.subr.bf16.mxu0 0
    %1184 = vmatpush1.bf16.msra.mxu0 0
    %1185 = vmatprep.subr.bf16.mxu0 0
    %1186 = vmatpush1.bf16.msra.mxu0 0
    %1187 = vmatprep.subr.bf16.mxu0 0
    %1188 = vmatpush1.bf16.msra.mxu0 0
    %1189 = vmatprep.mubr.bf16.mxu0 0
    %1190 = vmatmul.mubr.bf16.gmra.mrb[0].mxu0 %v1152
    %v1191 = vpop.f32.mrb[0].mxu0
    %v1192 = vadd.f32 0.0, %v1191
    %v1193 = vpop.f32.mrb[0].mxu0
    %v1194 = vpop.f32.mrb[0].mxu0
    %v1195 = vpop.f32.mrb[0].mxu0
    %1196 = vdwg.mxu0
    %v1198 = vsel %vm871, %v1102, 0
    %v1201 = vsel %vm1107, %v868, 0
    %1203 = vmatprep.subr.bf16.mxu0 0
    %1204 = vmatpush1.bf16.msra.mxu0 %v1201
    %1205 = vmatprep.subr.bf16.mxu0 0
    %1206 = vmatpush1.bf16.msra.mxu0 0
    %1207 = vmatprep.subr.bf16.mxu0 0
    %1208 = vmatpush1.bf16.msra.mxu0 0
    %1209 = vmatprep.subr.bf16.mxu0 0
    %1210 = vmatpush1.bf16.msra.mxu0 0
    %1211 = vmatprep.subr.bf16.mxu0 0
    %1212 = vmatpush1.bf16.msra.mxu0 0
    %1213 = vmatprep.subr.bf16.mxu0 0
    %1214 = vmatpush1.bf16.msra.mxu0 0
    %1215 = vmatprep.subr.bf16.mxu0 0
    %1216 = vmatpush1.bf16.msra.mxu0 0
    %1217 = vmatprep.subr.bf16.mxu0 0
    %1218 = vmatpush1.bf16.msra.mxu0 0
    %1219 = vmatprep.subr.bf16.mxu0 0
    %1220 = vmatpush1.bf16.msra.mxu0 0
    %1221 = vmatprep.subr.bf16.mxu0 0
    %1222 = vmatpush1.bf16.msra.mxu0 0
    %1223 = vmatprep.subr.bf16.mxu0 0
    %1224 = vmatpush1.bf16.msra.mxu0 0
    %1225 = vmatprep.subr.bf16.mxu0 0
    %1226 = vmatpush1.bf16.msra.mxu0 0
    %1227 = vmatprep.subr.bf16.mxu0 0
    %1228 = vmatpush1.bf16.msra.mxu0 0
    %1229 = vmatprep.subr.bf16.mxu0 0
    %1230 = vmatpush1.bf16.msra.mxu0 0
    %1231 = vmatprep.subr.bf16.mxu0 0
    %1232 = vmatpush1.bf16.msra.mxu0 0
    %1233 = vmatprep.subr.bf16.mxu0 0
    %1234 = vmatpush1.bf16.msra.mxu0 0
    %1235 = vmatprep.mubr.bf16.mxu0 0
    %1236 = vmatmul.mubr.bf16.gmra.mrb[0].mxu0 %v1198
    %v1237 = vpop.f32.mrb[0].mxu0
    %v1238 = vadd.f32 0.0, %v1237
    %v1239 = vpop.f32.mrb[0].mxu0
    %v1240 = vpop.f32.mrb[0].mxu0
    %v1241 = vpop.f32.mrb[0].mxu0
    %1242 = vdwg.mxu0
    %v1244 = vsel %vm871, %v1103, 0
    %v1247 = vsel %vm1107, %v869, 0
    %1249 = vmatprep.subr.bf16.mxu0 0
    %1250 = vmatpush1.bf16.msra.mxu0 %v1247
    %1251 = vmatprep.subr.bf16.mxu0 0
    %1252 = vmatpush1.bf16.msra.mxu0 0
    %1253 = vmatprep.subr.bf16.mxu0 0
    %1254 = vmatpush1.bf16.msra.mxu0 0
    %1255 = vmatprep.subr.bf16.mxu0 0
    %1256 = vmatpush1.bf16.msra.mxu0 0
    %1257 = vmatprep.subr.bf16.mxu0 0
    %1258 = vmatpush1.bf16.msra.mxu0 0
    %1259 = vmatprep.subr.bf16.mxu0 0
    %1260 = vmatpush1.bf16.msra.mxu0 0
    %1261 = vmatprep.subr.bf16.mxu0 0
    %1262 = vmatpush1.bf16.msra.mxu0 0
    %1263 = vmatprep.subr.bf16.mxu0 0
    %1264 = vmatpush1.bf16.msra.mxu0 0
    %1265 = vmatprep.subr.bf16.mxu0 0
    %1266 = vmatpush1.bf16.msra.mxu0 0
    %1267 = vmatprep.subr.bf16.mxu0 0
    %1268 = vmatpush1.bf16.msra.mxu0 0
    %1269 = vmatprep.subr.bf16.mxu0 0
    %1270 = vmatpush1.bf16.msra.mxu0 0
    %1271 = vmatprep.subr.bf16.mxu0 0
    %1272 = vmatpush1.bf16.msra.mxu0 0
    %1273 = vmatprep.subr.bf16.mxu0 0
    %1274 = vmatpush1.bf16.msra.mxu0 0
    %1275 = vmatprep.subr.bf16.mxu0 0
    %1276 = vmatpush1.bf16.msra.mxu0 0
    %1277 = vmatprep.subr.bf16.mxu0 0
    %1278 = vmatpush1.bf16.msra.mxu0 0
    %1279 = vmatprep.subr.bf16.mxu0 0
    %1280 = vmatpush1.bf16.msra.mxu0 0
    %1281 = vmatprep.mubr.bf16.mxu0 0
    %1282 = vmatmul.mubr.bf16.gmra.mrb[0].mxu0 %v1244
    %v1283 = vpop.f32.mrb[0].mxu0
    %v1284 = vadd.f32 0.0, %v1283
    %v1285 = vpop.f32.mrb[0].mxu0
    %v1286 = vpop.f32.mrb[0].mxu0
    %v1287 = vpop.f32.mrb[0].mxu0
    %1288 = vdwg.mxu0
    %v1289 = vpack.c.bf16 %v1146, %v1146
    %v1290 = vpack.c.bf16 %v1192, %v1192
    %v1291 = vpack.c.bf16 %v1238, %v1238
    %v1292 = vpack.c.bf16 %v1284, %v1284
    %v1294 = vsel %vm871, %v1289, 0
    %v1297 = vsel %vm1107, %v111, 0
    %1299 = vmatprep.subr.bf16.mxu0 0
    %1300 = vmatpush1.bf16.msra.mxu0 %v1297
    %1301 = vmatprep.subr.bf16.mxu0 0
    %1302 = vmatpush1.bf16.msra.mxu0 0
    %1303 = vmatprep.subr.bf16.mxu0 0
    %1304 = vmatpush1.bf16.msra.mxu0 0
    %1305 = vmatprep.subr.bf16.mxu0 0
    %1306 = vmatpush1.bf16.msra.mxu0 0
    %1307 = vmatprep.subr.bf16.mxu0 0
    %1308 = vmatpush1.bf16.msra.mxu0 0
    %1309 = vmatprep.subr.bf16.mxu0 0
    %1310 = vmatpush1.bf16.msra.mxu0 0
    %1311 = vmatprep.subr.bf16.mxu0 0
    %1312 = vmatpush1.bf16.msra.mxu0 0
    %1313 = vmatprep.subr.bf16.mxu0 0
    %1314 = vmatpush1.bf16.msra.mxu0 0
    %1315 = vmatprep.subr.bf16.mxu0 0
    %1316 = vmatpush1.bf16.msra.mxu0 0
    %1317 = vmatprep.subr.bf16.mxu0 0
    %1318 = vmatpush1.bf16.msra.mxu0 0
    %1319 = vmatprep.subr.bf16.mxu0 0
    %1320 = vmatpush1.bf16.msra.mxu0 0
    %1321 = vmatprep.subr.bf16.mxu0 0
    %1322 = vmatpush1.bf16.msra.mxu0 0
    %1323 = vmatprep.subr.bf16.mxu0 0
    %1324 = vmatpush1.bf16.msra.mxu0 0
    %1325 = vmatprep.subr.bf16.mxu0 0
    %1326 = vmatpush1.bf16.msra.mxu0 0
    %1327 = vmatprep.subr.bf16.mxu0 0
    %1328 = vmatpush1.bf16.msra.mxu0 0
    %1329 = vmatprep.subr.bf16.mxu0 0
    %1330 = vmatpush1.bf16.msra.mxu0 0
    %1331 = vmatprep.mubr.bf16.mxu0 0
    %1332 = vmatmul.mubr.bf16.gmra.mrb[0].mxu0 %v1294
    %v1333 = vpop.f32.mrb[0].mxu0
    %v1334 = vadd.f32 0.0, %v1333
    %v1335 = vpop.f32.mrb[0].mxu0
    %v1336 = vpop.f32.mrb[0].mxu0
    %v1337 = vpop.f32.mrb[0].mxu0
    %1338 = vdwg.mxu0
    %v1340 = vsel %vm871, %v1290, 0
    %v1343 = vsel %vm1107, %v112, 0
    %1345 = vmatprep.subr.bf16.mxu0 0
    %1346 = vmatpush1.bf16.msra.mxu0 %v1343
    %1347 = vmatprep.subr.bf16.mxu0 0
    %1348 = vmatpush1.bf16.msra.mxu0 0
    %1349 = vmatprep.subr.bf16.mxu0 0
    %1350 = vmatpush1.bf16.msra.mxu0 0
    %1351 = vmatprep.subr.bf16.mxu0 0
    %1352 = vmatpush1.bf16.msra.mxu0 0
    %1353 = vmatprep.subr.bf16.mxu0 0
    %1354 = vmatpush1.bf16.msra.mxu0 0
    %1355 = vmatprep.subr.bf16.mxu0 0
    %1356 = vmatpush1.bf16.msra.mxu0 0
    %1357 = vmatprep.subr.bf16.mxu0 0
    %1358 = vmatpush1.bf16.msra.mxu0 0
    %1359 = vmatprep.subr.bf16.mxu0 0
    %1360 = vmatpush1.bf16.msra.mxu0 0
    %1361 = vmatprep.subr.bf16.mxu0 0
    %1362 = vmatpush1.bf16.msra.mxu0 0
    %1363 = vmatprep.subr.bf16.mxu0 0
    %1364 = vmatpush1.bf16.msra.mxu0 0
    %1365 = vmatprep.subr.bf16.mxu0 0
    %1366 = vmatpush1.bf16.msra.mxu0 0
    %1367 = vmatprep.subr.bf16.mxu0 0
    %1368 = vmatpush1.bf16.msra.mxu0 0
    %1369 = vmatprep.subr.bf16.mxu0 0
    %1370 = vmatpush1.bf16.msra.mxu0 0
    %1371 = vmatprep.subr.bf16.mxu0 0
    %1372 = vmatpush1.bf16.msra.mxu0 0
    %1373 = vmatprep.subr.bf16.mxu0 0
    %1374 = vmatpush1.bf16.msra.mxu0 0
    %1375 = vmatprep.subr.bf16.mxu0 0
    %1376 = vmatpush1.bf16.msra.mxu0 0
    %1377 = vmatprep.mubr.bf16.mxu0 0
    %1378 = vmatmul.mubr.bf16.gmra.mrb[0].mxu0 %v1340
    %v1379 = vpop.f32.mrb[0].mxu0
    %v1380 = vadd.f32 0.0, %v1379
    %v1381 = vpop.f32.mrb[0].mxu0
    %v1382 = vpop.f32.mrb[0].mxu0
    %v1383 = vpop.f32.mrb[0].mxu0
    %1384 = vdwg.mxu0
    %v1386 = vsel %vm871, %v1291, 0
    %v1389 = vsel %vm1107, %v113, 0
    %1391 = vmatprep.subr.bf16.mxu0 0
    %1392 = vmatpush1.bf16.msra.mxu0 %v1389
    %1393 = vmatprep.subr.bf16.mxu0 0
    %1394 = vmatpush1.bf16.msra.mxu0 0
    %1395 = vmatprep.subr.bf16.mxu0 0
    %1396 = vmatpush1.bf16.msra.mxu0 0
    %1397 = vmatprep.subr.bf16.mxu0 0
    %1398 = vmatpush1.bf16.msra.mxu0 0
    %1399 = vmatprep.subr.bf16.mxu0 0
    %1400 = vmatpush1.bf16.msra.mxu0 0
    %1401 = vmatprep.subr.bf16.mxu0 0
    %1402 = vmatpush1.bf16.msra.mxu0 0
    %1403 = vmatprep.subr.bf16.mxu0 0
    %1404 = vmatpush1.bf16.msra.mxu0 0
    %1405 = vmatprep.subr.bf16.mxu0 0
    %1406 = vmatpush1.bf16.msra.mxu0 0
    %1407 = vmatprep.subr.bf16.mxu0 0
    %1408 = vmatpush1.bf16.msra.mxu0 0
    %1409 = vmatprep.subr.bf16.mxu0 0
    %1410 = vmatpush1.bf16.msra.mxu0 0
    %1411 = vmatprep.subr.bf16.mxu0 0
    %1412 = vmatpush1.bf16.msra.mxu0 0
    %1413 = vmatprep.subr.bf16.mxu0 0
    %1414 = vmatpush1.bf16.msra.mxu0 0
    %1415 = vmatprep.subr.bf16.mxu0 0
    %1416 = vmatpush1.bf16.msra.mxu0 0
    %1417 = vmatprep.subr.bf16.mxu0 0
    %1418 = vmatpush1.bf16.msra.mxu0 0
    %1419 = vmatprep.subr.bf16.mxu0 0
    %1420 = vmatpush1.bf16.msra.mxu0 0
    %1421 = vmatprep.subr.bf16.mxu0 0
    %1422 = vmatpush1.bf16.msra.mxu0 0
    %1423 = vmatprep.mubr.bf16.mxu0 0
    %1424 = vmatmul.mubr.bf16.gmra.mrb[0].mxu0 %v1386
    %v1425 = vpop.f32.mrb[0].mxu0
    %v1426 = vadd.f32 0.0, %v1425
    %v1427 = vpop.f32.mrb[0].mxu0
    %v1428 = vpop.f32.mrb[0].mxu0
    %v1429 = vpop.f32.mrb[0].mxu0
    %1430 = vdwg.mxu0
    %v1432 = vsel %vm871, %v1292, 0
    %v1435 = vsel %vm1107, %v114, 0
    %1437 = vmatprep.subr.bf16.mxu0 0
    %1438 = vmatpush1.bf16.msra.mxu0 %v1435
    %1439 = vmatprep.subr.bf16.mxu0 0
    %1440 = vmatpush1.bf16.msra.mxu0 0
    %1441 = vmatprep.subr.bf16.mxu0 0
    %1442 = vmatpush1.bf16.msra.mxu0 0
    %1443 = vmatprep.subr.bf16.mxu0 0
    %1444 = vmatpush1.bf16.msra.mxu0 0
    %1445 = vmatprep.subr.bf16.mxu0 0
    %1446 = vmatpush1.bf16.msra.mxu0 0
    %1447 = vmatprep.subr.bf16.mxu0 0
    %1448 = vmatpush1.bf16.msra.mxu0 0
    %1449 = vmatprep.subr.bf16.mxu0 0
    %1450 = vmatpush1.bf16.msra.mxu0 0
    %1451 = vmatprep.subr.bf16.mxu0 0
    %1452 = vmatpush1.bf16.msra.mxu0 0
    %1453 = vmatprep.subr.bf16.mxu0 0
    %1454 = vmatpush1.bf16.msra.mxu0 0
    %1455 = vmatprep.subr.bf16.mxu0 0
    %1456 = vmatpush1.bf16.msra.mxu0 0
    %1457 = vmatprep.subr.bf16.mxu0 0
    %1458 = vmatpush1.bf16.msra.mxu0 0
    %1459 = vmatprep.subr.bf16.mxu0 0
    %1460 = vmatpush1.bf16.msra.mxu0 0
    %1461 = vmatprep.subr.bf16.mxu0 0
    %1462 = vmatpush1.bf16.msra.mxu0 0
    %1463 = vmatprep.subr.bf16.mxu0 0
    %1464 = vmatpush1.bf16.msra.mxu0 0
    %1465 = vmatprep.subr.bf16.mxu0 0
    %1466 = vmatpush1.bf16.msra.mxu0 0
    %1467 = vmatprep.subr.bf16.mxu0 0
    %1468 = vmatpush1.bf16.msra.mxu0 0
    %1469 = vmatprep.mubr.bf16.mxu0 0
    %1470 = vmatmul.mubr.bf16.gmra.mrb[0].mxu0 %v1432
    %v1471 = vpop.f32.mrb[0].mxu0
    %v1472 = vadd.f32 0.0, %v1471
    %v1473 = vpop.f32.mrb[0].mxu0
    %v1474 = vpop.f32.mrb[0].mxu0
    %v1475 = vpop.f32.mrb[0].mxu0
    %1476 = vdwg.mxu0
    %v1477 = vsel %vm116, %v1334, 0.0
    %v1478 = vsel %vm116, %v1380, 0.0
    %v1479 = vadd.f32 %v1477, %v1478
    %v1480 = vsel %vm116, %v1426, 0.0
    %v1481 = vadd.f32 %v1479, %v1480
    %v1482 = vsel %vm116, %v1472, 0.0
    %v1483 = vadd.f32 %v1481, %v1482
    %v1484 = vlaneseq
    %v1485 = vshrl.u32 %v1484, 7
    %v1486 = vsub.s32 0, %v1485
    %v1487 = vrot.slane %v115, %v1486
    %v1488 = vadd.f32 %v1483, %v1487
    %v1490 = vrot.slane %v158, 4
    %v1492 = vsel %vm116, %v1490, 0
    %1494 = vmatprep.subr.bf16.mxu0 0
    %1495 = vmatpush1.bf16.msra.mxu0 %v239
    %1496 = vmatprep.subr.bf16.mxu0 0
    %1497 = vmatpush1.bf16.msra.mxu0 %v240
    %1498 = vmatprep.subr.bf16.mxu0 0
    %1499 = vmatpush1.bf16.msra.mxu0 0
    %1500 = vmatprep.subr.bf16.mxu0 0
    %1501 = vmatpush1.bf16.msra.mxu0 0
    %1502 = vmatprep.subr.bf16.mxu0 0
    %1503 = vmatpush1.bf16.msra.mxu0 0
    %1504 = vmatprep.subr.bf16.mxu0 0
    %1505 = vmatpush1.bf16.msra.mxu0 0
    %1506 = vmatprep.subr.bf16.mxu0 0
    %1507 = vmatpush1.bf16.msra.mxu0 0
    %1508 = vmatprep.subr.bf16.mxu0 0
    %1509 = vmatpush1.bf16.msra.mxu0 0
    %1510 = vmatprep.subr.bf16.mxu0 0
    %1511 = vmatpush1.bf16.msra.mxu0 0
    %1512 = vmatprep.subr.bf16.mxu0 0
    %1513 = vmatpush1.bf16.msra.mxu0 0
    %1514 = vmatprep.subr.bf16.mxu0 0
    %1515 = vmatpush1.bf16.msra.mxu0 0
    %1516 = vmatprep.subr.bf16.mxu0 0
    %1517 = vmatpush1.bf16.msra.mxu0 0
    %1518 = vmatprep.subr.bf16.mxu0 0
    %1519 = vmatpush1.bf16.msra.mxu0 0
    %1520 = vmatprep.subr.bf16.mxu0 0
    %1521 = vmatpush1.bf16.msra.mxu0 0
    %1522 = vmatprep.subr.bf16.mxu0 0
    %1523 = vmatpush1.bf16.msra.mxu0 0
    %1524 = vmatprep.subr.bf16.mxu0 0
    %1525 = vmatpush1.bf16.msra.mxu0 0
    %1526 = vmatprep.mubr.bf16.mxu0 0
    %1527 = vmatmul.mubr.bf16.gmra.mrb[0].mxu0 %v1492
    %v1528 = vpop.f32.mrb[0].mxu0
    %v1529 = vadd.f32 %v174, %v1528
    %v1530 = vpop.f32.mrb[0].mxu0
    %v1531 = vpop.f32.mrb[0].mxu0
    %v1532 = vpop.f32.mrb[0].mxu0
    %1533 = vdwg.mxu0
    %1534 = vmatprep.subr.bf16.mxu0 0
    %1535 = vmatpush1.bf16.msra.mxu0 %v294
    %1536 = vmatprep.subr.bf16.mxu0 0
    %1537 = vmatpush1.bf16.msra.mxu0 %v295
    %1538 = vmatprep.subr.bf16.mxu0 0
    %1539 = vmatpush1.bf16.msra.mxu0 0
    %1540 = vmatprep.subr.bf16.mxu0 0
    %1541 = vmatpush1.bf16.msra.mxu0 0
    %1542 = vmatprep.subr.bf16.mxu0 0
    %1543 = vmatpush1.bf16.msra.mxu0 0
    %1544 = vmatprep.subr.bf16.mxu0 0
    %1545 = vmatpush1.bf16.msra.mxu0 0
    %1546 = vmatprep.subr.bf16.mxu0 0
    %1547 = vmatpush1.bf16.msra.mxu0 0
    %1548 = vmatprep.subr.bf16.mxu0 0
    %1549 = vmatpush1.bf16.msra.mxu0 0
    %1550 = vmatprep.subr.bf16.mxu0 0
    %1551 = vmatpush1.bf16.msra.mxu0 0
    %1552 = vmatprep.subr.bf16.mxu0 0
    %1553 = vmatpush1.bf16.msra.mxu0 0
    %1554 = vmatprep.subr.bf16.mxu0 0
    %1555 = vmatpush1.bf16.msra.mxu0 0
    %1556 = vmatprep.subr.bf16.mxu0 0
    %1557 = vmatpush1.bf16.msra.mxu0 0
    %1558 = vmatprep.subr.bf16.mxu0 0
    %1559 = vmatpush1.bf16.msra.mxu0 0
    %1560 = vmatprep.subr.bf16.mxu0 0
    %1561 = vmatpush1.bf16.msra.mxu0 0
    %1562 = vmatprep.subr.bf16.mxu0 0
    %1563 = vmatpush1.bf16.msra.mxu0 0
    %1564 = vmatprep.subr.bf16.mxu0 0
    %1565 = vmatpush1.bf16.msra.mxu0 0
    %1566 = vmatprep.mubr.bf16.mxu0 0
    %1567 = vmatmul.mubr.bf16.gmra.mrb[0].mxu0 %v1492
    %v1568 = vpop.f32.mrb[0].mxu0
    %v1569 = vadd.f32 %v178, %v1568
    %v1570 = vpop.f32.mrb[0].mxu0
    %v1571 = vpop.f32.mrb[0].mxu0
    %v1572 = vpop.f32.mrb[0].mxu0
    %1573 = vdwg.mxu0
    %1574 = vmatprep.subr.bf16.mxu0 0
    %1575 = vmatpush1.bf16.msra.mxu0 %v346
    %1576 = vmatprep.subr.bf16.mxu0 0
    %1577 = vmatpush1.bf16.msra.mxu0 %v347
    %1578 = vmatprep.subr.bf16.mxu0 0
    %1579 = vmatpush1.bf16.msra.mxu0 0
    %1580 = vmatprep.subr.bf16.mxu0 0
    %1581 = vmatpush1.bf16.msra.mxu0 0
    %1582 = vmatprep.subr.bf16.mxu0 0
    %1583 = vmatpush1.bf16.msra.mxu0 0
    %1584 = vmatprep.subr.bf16.mxu0 0
    %1585 = vmatpush1.bf16.msra.mxu0 0
    %1586 = vmatprep.subr.bf16.mxu0 0
    %1587 = vmatpush1.bf16.msra.mxu0 0
    %1588 = vmatprep.subr.bf16.mxu0 0
    %1589 = vmatpush1.bf16.msra.mxu0 0
    %1590 = vmatprep.subr.bf16.mxu0 0
    %1591 = vmatpush1.bf16.msra.mxu0 0
    %1592 = vmatprep.subr.bf16.mxu0 0
    %1593 = vmatpush1.bf16.msra.mxu0 0
    %1594 = vmatprep.subr.bf16.mxu0 0
    %1595 = vmatpush1.bf16.msra.mxu0 0
    %1596 = vmatprep.subr.bf16.mxu0 0
    %1597 = vmatpush1.bf16.msra.mxu0 0
    %1598 = vmatprep.subr.bf16.mxu0 0
    %1599 = vmatpush1.bf16.msra.mxu0 0
    %1600 = vmatprep.subr.bf16.mxu0 0
    %1601 = vmatpush1.bf16.msra.mxu0 0
    %1602 = vmatprep.subr.bf16.mxu0 0
    %1603 = vmatpush1.bf16.msra.mxu0 0
    %1604 = vmatprep.subr.bf16.mxu0 0
    %1605 = vmatpush1.bf16.msra.mxu0 0
    %1606 = vmatprep.mubr.bf16.mxu0 0
    %1607 = vmatmul.mubr.bf16.gmra.mrb[0].mxu0 %v1492
    %v1608 = vpop.f32.mrb[0].mxu0
    %v1609 = vadd.f32 %v182, %v1608
    %v1610 = vpop.f32.mrb[0].mxu0
    %v1611 = vpop.f32.mrb[0].mxu0
    %v1612 = vpop.f32.mrb[0].mxu0
    %1613 = vdwg.mxu0
    %1614 = vmatprep.subr.bf16.mxu0 0
    %1615 = vmatpush1.bf16.msra.mxu0 %v398
    %1616 = vmatprep.subr.bf16.mxu0 0
    %1617 = vmatpush1.bf16.msra.mxu0 %v399
    %1618 = vmatprep.subr.bf16.mxu0 0
    %1619 = vmatpush1.bf16.msra.mxu0 0
    %1620 = vmatprep.subr.bf16.mxu0 0
    %1621 = vmatpush1.bf16.msra.mxu0 0
    %1622 = vmatprep.subr.bf16.mxu0 0
    %1623 = vmatpush1.bf16.msra.mxu0 0
    %1624 = vmatprep.subr.bf16.mxu0 0
    %1625 = vmatpush1.bf16.msra.mxu0 0
    %1626 = vmatprep.subr.bf16.mxu0 0
    %1627 = vmatpush1.bf16.msra.mxu0 0
    %1628 = vmatprep.subr.bf16.mxu0 0
    %1629 = vmatpush1.bf16.msra.mxu0 0
    %1630 = vmatprep.subr.bf16.mxu0 0
    %1631 = vmatpush1.bf16.msra.mxu0 0
    %1632 = vmatprep.subr.bf16.mxu0 0
    %1633 = vmatpush1.bf16.msra.mxu0 0
    %1634 = vmatprep.subr.bf16.mxu0 0
    %1635 = vmatpush1.bf16.msra.mxu0 0
    %1636 = vmatprep.subr.bf16.mxu0 0
    %1637 = vmatpush1.bf16.msra.mxu0 0
    %1638 = vmatprep.subr.bf16.mxu0 0
    %1639 = vmatpush1.bf16.msra.mxu0 0
    %1640 = vmatprep.subr.bf16.mxu0 0
    %1641 = vmatpush1.bf16.msra.mxu0 0
    %1642 = vmatprep.subr.bf16.mxu0 0
    %1643 = vmatpush1.bf16.msra.mxu0 0
    %1644 = vmatprep.subr.bf16.mxu0 0
    %1645 = vmatpush1.bf16.msra.mxu0 0
    %1646 = vmatprep.mubr.bf16.mxu0 0
    %1647 = vmatmul.mubr.bf16.gmra.mrb[0].mxu0 %v1492
    %v1648 = vpop.f32.mrb[0].mxu0
    %v1649 = vadd.f32 %v186, %v1648
    %v1650 = vpop.f32.mrb[0].mxu0
    %v1651 = vpop.f32.mrb[0].mxu0
    %v1652 = vpop.f32.mrb[0].mxu0
    %1653 = vdwg.mxu0
    %1654 = vmatprep.subr.bf16.mxu0 0
    %1655 = vmatpush1.bf16.msra.mxu0 %v450
    %1656 = vmatprep.subr.bf16.mxu0 0
    %1657 = vmatpush1.bf16.msra.mxu0 %v451
    %1658 = vmatprep.subr.bf16.mxu0 0
    %1659 = vmatpush1.bf16.msra.mxu0 0
    %1660 = vmatprep.subr.bf16.mxu0 0
    %1661 = vmatpush1.bf16.msra.mxu0 0
    %1662 = vmatprep.subr.bf16.mxu0 0
    %1663 = vmatpush1.bf16.msra.mxu0 0
    %1664 = vmatprep.subr.bf16.mxu0 0
    %1665 = vmatpush1.bf16.msra.mxu0 0
    %1666 = vmatprep.subr.bf16.mxu0 0
    %1667 = vmatpush1.bf16.msra.mxu0 0
    %1668 = vmatprep.subr.bf16.mxu0 0
    %1669 = vmatpush1.bf16.msra.mxu0 0
    %1670 = vmatprep.subr.bf16.mxu0 0
    %1671 = vmatpush1.bf16.msra.mxu0 0
    %1672 = vmatprep.subr.bf16.mxu0 0
    %1673 = vmatpush1.bf16.msra.mxu0 0
    %1674 = vmatprep.subr.bf16.mxu0 0
    %1675 = vmatpush1.bf16.msra.mxu0 0
    %1676 = vmatprep.subr.bf16.mxu0 0
    %1677 = vmatpush1.bf16.msra.mxu0 0
    %1678 = vmatprep.subr.bf16.mxu0 0
    %1679 = vmatpush1.bf16.msra.mxu0 0
    %1680 = vmatprep.subr.bf16.mxu0 0
    %1681 = vmatpush1.bf16.msra.mxu0 0
    %1682 = vmatprep.subr.bf16.mxu0 0
    %1683 = vmatpush1.bf16.msra.mxu0 0
    %1684 = vmatprep.subr.bf16.mxu0 0
    %1685 = vmatpush1.bf16.msra.mxu0 0
    %1686 = vmatprep.mubr.bf16.mxu0 0
    %1687 = vmatmul.mubr.bf16.gmra.mrb[0].mxu0 %v1492
    %v1688 = vpop.f32.mrb[0].mxu0
    %v1689 = vadd.f32 %v190, %v1688
    %v1690 = vpop.f32.mrb[0].mxu0
    %v1691 = vpop.f32.mrb[0].mxu0
    %v1692 = vpop.f32.mrb[0].mxu0
    %1693 = vdwg.mxu0
    %1694 = vmatprep.subr.bf16.mxu0 0
    %1695 = vmatpush1.bf16.msra.mxu0 %v502
    %1696 = vmatprep.subr.bf16.mxu0 0
    %1697 = vmatpush1.bf16.msra.mxu0 %v503
    %1698 = vmatprep.subr.bf16.mxu0 0
    %1699 = vmatpush1.bf16.msra.mxu0 0
    %1700 = vmatprep.subr.bf16.mxu0 0
    %1701 = vmatpush1.bf16.msra.mxu0 0
    %1702 = vmatprep.subr.bf16.mxu0 0
    %1703 = vmatpush1.bf16.msra.mxu0 0
    %1704 = vmatprep.subr.bf16.mxu0 0
    %1705 = vmatpush1.bf16.msra.mxu0 0
    %1706 = vmatprep.subr.bf16.mxu0 0
    %1707 = vmatpush1.bf16.msra.mxu0 0
    %1708 = vmatprep.subr.bf16.mxu0 0
    %1709 = vmatpush1.bf16.msra.mxu0 0
    %1710 = vmatprep.subr.bf16.mxu0 0
    %1711 = vmatpush1.bf16.msra.mxu0 0
    %1712 = vmatprep.subr.bf16.mxu0 0
    %1713 = vmatpush1.bf16.msra.mxu0 0
    %1714 = vmatprep.subr.bf16.mxu0 0
    %1715 = vmatpush1.bf16.msra.mxu0 0
    %1716 = vmatprep.subr.bf16.mxu0 0
    %1717 = vmatpush1.bf16.msra.mxu0 0
    %1718 = vmatprep.subr.bf16.mxu0 0
    %1719 = vmatpush1.bf16.msra.mxu0 0
    %1720 = vmatprep.subr.bf16.mxu0 0
    %1721 = vmatpush1.bf16.msra.mxu0 0
    %1722 = vmatprep.subr.bf16.mxu0 0
    %1723 = vmatpush1.bf16.msra.mxu0 0
    %1724 = vmatprep.subr.bf16.mxu0 0
    %1725 = vmatpush1.bf16.msra.mxu0 0
    %1726 = vmatprep.mubr.bf16.mxu0 0
    %1727 = vmatmul.mubr.bf16.gmra.mrb[0].mxu0 %v1492
    %v1728 = vpop.f32.mrb[0].mxu0
    %v1729 = vadd.f32 %v194, %v1728
    %v1730 = vpop.f32.mrb[0].mxu0
    %v1731 = vpop.f32.mrb[0].mxu0
    %v1732 = vpop.f32.mrb[0].mxu0
    %1733 = vdwg.mxu0
    %1734 = vmatprep.subr.bf16.mxu0 0
    %1735 = vmatpush1.bf16.msra.mxu0 %v554
    %1736 = vmatprep.subr.bf16.mxu0 0
    %1737 = vmatpush1.bf16.msra.mxu0 %v555
    %1738 = vmatprep.subr.bf16.mxu0 0
    %1739 = vmatpush1.bf16.msra.mxu0 0
    %1740 = vmatprep.subr.bf16.mxu0 0
    %1741 = vmatpush1.bf16.msra.mxu0 0
    %1742 = vmatprep.subr.bf16.mxu0 0
    %1743 = vmatpush1.bf16.msra.mxu0 0
    %1744 = vmatprep.subr.bf16.mxu0 0
    %1745 = vmatpush1.bf16.msra.mxu0 0
    %1746 = vmatprep.subr.bf16.mxu0 0
    %1747 = vmatpush1.bf16.msra.mxu0 0
    %1748 = vmatprep.subr.bf16.mxu0 0
    %1749 = vmatpush1.bf16.msra.mxu0 0
    %1750 = vmatprep.subr.bf16.mxu0 0
    %1751 = vmatpush1.bf16.msra.mxu0 0
    %1752 = vmatprep.subr.bf16.mxu0 0
    %1753 = vmatpush1.bf16.msra.mxu0 0
    %1754 = vmatprep.subr.bf16.mxu0 0
    %1755 = vmatpush1.bf16.msra.mxu0 0
    %1756 = vmatprep.subr.bf16.mxu0 0
    %1757 = vmatpush1.bf16.msra.mxu0 0
    %1758 = vmatprep.subr.bf16.mxu0 0
    %1759 = vmatpush1.bf16.msra.mxu0 0
    %1760 = vmatprep.subr.bf16.mxu0 0
    %1761 = vmatpush1.bf16.msra.mxu0 0
    %1762 = vmatprep.subr.bf16.mxu0 0
    %1763 = vmatpush1.bf16.msra.mxu0 0
    %1764 = vmatprep.subr.bf16.mxu0 0
    %1765 = vmatpush1.bf16.msra.mxu0 0
    %1766 = vmatprep.mubr.bf16.mxu0 0
    %1767 = vmatmul.mubr.bf16.gmra.mrb[0].mxu0 %v1492
    %v1768 = vpop.f32.mrb[0].mxu0
    %v1769 = vadd.f32 %v198, %v1768
    %v1770 = vpop.f32.mrb[0].mxu0
    %v1771 = vpop.f32.mrb[0].mxu0
    %v1772 = vpop.f32.mrb[0].mxu0
    %1773 = vdwg.mxu0
    %1774 = vmatprep.subr.bf16.mxu0 0
    %1775 = vmatpush1.bf16.msra.mxu0 %v606
    %1776 = vmatprep.subr.bf16.mxu0 0
    %1777 = vmatpush1.bf16.msra.mxu0 %v607
    %1778 = vmatprep.subr.bf16.mxu0 0
    %1779 = vmatpush1.bf16.msra.mxu0 0
    %1780 = vmatprep.subr.bf16.mxu0 0
    %1781 = vmatpush1.bf16.msra.mxu0 0
    %1782 = vmatprep.subr.bf16.mxu0 0
    %1783 = vmatpush1.bf16.msra.mxu0 0
    %1784 = vmatprep.subr.bf16.mxu0 0
    %1785 = vmatpush1.bf16.msra.mxu0 0
    %1786 = vmatprep.subr.bf16.mxu0 0
    %1787 = vmatpush1.bf16.msra.mxu0 0
    %1788 = vmatprep.subr.bf16.mxu0 0
    %1789 = vmatpush1.bf16.msra.mxu0 0
    %1790 = vmatprep.subr.bf16.mxu0 0
    %1791 = vmatpush1.bf16.msra.mxu0 0
    %1792 = vmatprep.subr.bf16.mxu0 0
    %1793 = vmatpush1.bf16.msra.mxu0 0
    %1794 = vmatprep.subr.bf16.mxu0 0
    %1795 = vmatpush1.bf16.msra.mxu0 0
    %1796 = vmatprep.subr.bf16.mxu0 0
    %1797 = vmatpush1.bf16.msra.mxu0 0
    %1798 = vmatprep.subr.bf16.mxu0 0
    %1799 = vmatpush1.bf16.msra.mxu0 0
    %1800 = vmatprep.subr.bf16.mxu0 0
    %1801 = vmatpush1.bf16.msra.mxu0 0
    %1802 = vmatprep.subr.bf16.mxu0 0
    %1803 = vmatpush1.bf16.msra.mxu0 0
    %1804 = vmatprep.subr.bf16.mxu0 0
    %1805 = vmatpush1.bf16.msra.mxu0 0
    %1806 = vmatprep.mubr.bf16.mxu0 0
    %1807 = vmatmul.mubr.bf16.gmra.mrb[0].mxu0 %v1492
    %v1808 = vpop.f32.mrb[0].mxu0
    %v1809 = vadd.f32 %v202, %v1808
    %v1810 = vpop.f32.mrb[0].mxu0
    %v1811 = vpop.f32.mrb[0].mxu0
    %v1812 = vpop.f32.mrb[0].mxu0
    %1813 = vdwg.mxu0
    %1814 = vmatprep.subr.bf16.mxu0 0
    %1815 = vmatpush1.bf16.msra.mxu0 %v658
    %1816 = vmatprep.subr.bf16.mxu0 0
    %1817 = vmatpush1.bf16.msra.mxu0 %v659
    %1818 = vmatprep.subr.bf16.mxu0 0
    %1819 = vmatpush1.bf16.msra.mxu0 0
    %1820 = vmatprep.subr.bf16.mxu0 0
    %1821 = vmatpush1.bf16.msra.mxu0 0
    %1822 = vmatprep.subr.bf16.mxu0 0
    %1823 = vmatpush1.bf16.msra.mxu0 0
    %1824 = vmatprep.subr.bf16.mxu0 0
    %1825 = vmatpush1.bf16.msra.mxu0 0
    %1826 = vmatprep.subr.bf16.mxu0 0
    %1827 = vmatpush1.bf16.msra.mxu0 0
    %1828 = vmatprep.subr.bf16.mxu0 0
    %1829 = vmatpush1.bf16.msra.mxu0 0
    %1830 = vmatprep.subr.bf16.mxu0 0
    %1831 = vmatpush1.bf16.msra.mxu0 0
    %1832 = vmatprep.subr.bf16.mxu0 0
    %1833 = vmatpush1.bf16.msra.mxu0 0
    %1834 = vmatprep.subr.bf16.mxu0 0
    %1835 = vmatpush1.bf16.msra.mxu0 0
    %1836 = vmatprep.subr.bf16.mxu0 0
    %1837 = vmatpush1.bf16.msra.mxu0 0
    %1838 = vmatprep.subr.bf16.mxu0 0
    %1839 = vmatpush1.bf16.msra.mxu0 0
    %1840 = vmatprep.subr.bf16.mxu0 0
    %1841 = vmatpush1.bf16.msra.mxu0 0
    %1842 = vmatprep.subr.bf16.mxu0 0
    %1843 = vmatpush1.bf16.msra.mxu0 0
    %1844 = vmatprep.subr.bf16.mxu0 0
    %1845 = vmatpush1.bf16.msra.mxu0 0
    %1846 = vmatprep.mubr.bf16.mxu0 0
    %1847 = vmatmul.mubr.bf16.gmra.mrb[0].mxu0 %v1492
    %v1848 = vpop.f32.mrb[0].mxu0
    %v1849 = vadd.f32 %v206, %v1848
    %v1850 = vpop.f32.mrb[0].mxu0
    %v1851 = vpop.f32.mrb[0].mxu0
    %v1852 = vpop.f32.mrb[0].mxu0
    %1853 = vdwg.mxu0
    %1854 = vmatprep.subr.bf16.mxu0 0
    %1855 = vmatpush1.bf16.msra.mxu0 %v710
    %1856 = vmatprep.subr.bf16.mxu0 0
    %1857 = vmatpush1.bf16.msra.mxu0 %v711
    %1858 = vmatprep.subr.bf16.mxu0 0
    %1859 = vmatpush1.bf16.msra.mxu0 0
    %1860 = vmatprep.subr.bf16.mxu0 0
    %1861 = vmatpush1.bf16.msra.mxu0 0
    %1862 = vmatprep.subr.bf16.mxu0 0
    %1863 = vmatpush1.bf16.msra.mxu0 0
    %1864 = vmatprep.subr.bf16.mxu0 0
    %1865 = vmatpush1.bf16.msra.mxu0 0
    %1866 = vmatprep.subr.bf16.mxu0 0
    %1867 = vmatpush1.bf16.msra.mxu0 0
    %1868 = vmatprep.subr.bf16.mxu0 0
    %1869 = vmatpush1.bf16.msra.mxu0 0
    %1870 = vmatprep.subr.bf16.mxu0 0
    %1871 = vmatpush1.bf16.msra.mxu0 0
    %1872 = vmatprep.subr.bf16.mxu0 0
    %1873 = vmatpush1.bf16.msra.mxu0 0
    %1874 = vmatprep.subr.bf16.mxu0 0
    %1875 = vmatpush1.bf16.msra.mxu0 0
    %1876 = vmatprep.subr.bf16.mxu0 0
    %1877 = vmatpush1.bf16.msra.mxu0 0
    %1878 = vmatprep.subr.bf16.mxu0 0
    %1879 = vmatpush1.bf16.msra.mxu0 0
    %1880 = vmatprep.subr.bf16.mxu0 0
    %1881 = vmatpush1.bf16.msra.mxu0 0
    %1882 = vmatprep.subr.bf16.mxu0 0
    %1883 = vmatpush1.bf16.msra.mxu0 0
    %1884 = vmatprep.subr.bf16.mxu0 0
    %1885 = vmatpush1.bf16.msra.mxu0 0
    %1886 = vmatprep.mubr.bf16.mxu0 0
    %1887 = vmatmul.mubr.bf16.gmra.mrb[0].mxu0 %v1492
    %v1888 = vpop.f32.mrb[0].mxu0
    %v1889 = vadd.f32 %v210, %v1888
    %v1890 = vpop.f32.mrb[0].mxu0
    %v1891 = vpop.f32.mrb[0].mxu0
    %v1892 = vpop.f32.mrb[0].mxu0
    %1893 = vdwg.mxu0
    %1894 = vmatprep.subr.bf16.mxu0 0
    %1895 = vmatpush1.bf16.msra.mxu0 %v762
    %1896 = vmatprep.subr.bf16.mxu0 0
    %1897 = vmatpush1.bf16.msra.mxu0 %v763
    %1898 = vmatprep.subr.bf16.mxu0 0
    %1899 = vmatpush1.bf16.msra.mxu0 0
    %1900 = vmatprep.subr.bf16.mxu0 0
    %1901 = vmatpush1.bf16.msra.mxu0 0
    %1902 = vmatprep.subr.bf16.mxu0 0
    %1903 = vmatpush1.bf16.msra.mxu0 0
    %1904 = vmatprep.subr.bf16.mxu0 0
    %1905 = vmatpush1.bf16.msra.mxu0 0
    %1906 = vmatprep.subr.bf16.mxu0 0
    %1907 = vmatpush1.bf16.msra.mxu0 0
    %1908 = vmatprep.subr.bf16.mxu0 0
    %1909 = vmatpush1.bf16.msra.mxu0 0
    %1910 = vmatprep.subr.bf16.mxu0 0
    %1911 = vmatpush1.bf16.msra.mxu0 0
    %1912 = vmatprep.subr.bf16.mxu0 0
    %1913 = vmatpush1.bf16.msra.mxu0 0
    %1914 = vmatprep.subr.bf16.mxu0 0
    %1915 = vmatpush1.bf16.msra.mxu0 0
    %1916 = vmatprep.subr.bf16.mxu0 0
    %1917 = vmatpush1.bf16.msra.mxu0 0
    %1918 = vmatprep.subr.bf16.mxu0 0
    %1919 = vmatpush1.bf16.msra.mxu0 0
    %1920 = vmatprep.subr.bf16.mxu0 0
    %1921 = vmatpush1.bf16.msra.mxu0 0
    %1922 = vmatprep.subr.bf16.mxu0 0
    %1923 = vmatpush1.bf16.msra.mxu0 0
    %1924 = vmatprep.subr.bf16.mxu0 0
    %1925 = vmatpush1.bf16.msra.mxu0 0
    %1926 = vmatprep.mubr.bf16.mxu0 0
    %1927 = vmatmul.mubr.bf16.gmra.mrb[0].mxu0 %v1492
    %v1928 = vpop.f32.mrb[0].mxu0
    %v1929 = vadd.f32 %v214, %v1928
    %v1930 = vpop.f32.mrb[0].mxu0
    %v1931 = vpop.f32.mrb[0].mxu0
    %v1932 = vpop.f32.mrb[0].mxu0
    %1933 = vdwg.mxu0
    %1934 = vmatprep.subr.bf16.mxu0 0
    %1935 = vmatpush1.bf16.msra.mxu0 %v814
    %1936 = vmatprep.subr.bf16.mxu0 0
    %1937 = vmatpush1.bf16.msra.mxu0 %v815
    %1938 = vmatprep.subr.bf16.mxu0 0
    %1939 = vmatpush1.bf16.msra.mxu0 0
    %1940 = vmatprep.subr.bf16.mxu0 0
    %1941 = vmatpush1.bf16.msra.mxu0 0
    %1942 = vmatprep.subr.bf16.mxu0 0
    %1943 = vmatpush1.bf16.msra.mxu0 0
    %1944 = vmatprep.subr.bf16.mxu0 0
    %1945 = vmatpush1.bf16.msra.mxu0 0
    %1946 = vmatprep.subr.bf16.mxu0 0
    %1947 = vmatpush1.bf16.msra.mxu0 0
    %1948 = vmatprep.subr.bf16.mxu0 0
    %1949 = vmatpush1.bf16.msra.mxu0 0
    %1950 = vmatprep.subr.bf16.mxu0 0
    %1951 = vmatpush1.bf16.msra.mxu0 0
    %1952 = vmatprep.subr.bf16.mxu0 0
    %1953 = vmatpush1.bf16.msra.mxu0 0
    %1954 = vmatprep.subr.bf16.mxu0 0
    %1955 = vmatpush1.bf16.msra.mxu0 0
    %1956 = vmatprep.subr.bf16.mxu0 0
    %1957 = vmatpush1.bf16.msra.mxu0 0
    %1958 = vmatprep.subr.bf16.mxu0 0
    %1959 = vmatpush1.bf16.msra.mxu0 0
    %1960 = vmatprep.subr.bf16.mxu0 0
    %1961 = vmatpush1.bf16.msra.mxu0 0
    %1962 = vmatprep.subr.bf16.mxu0 0
    %1963 = vmatpush1.bf16.msra.mxu0 0
    %1964 = vmatprep.subr.bf16.mxu0 0
    %1965 = vmatpush1.bf16.msra.mxu0 0
    %1966 = vmatprep.mubr.bf16.mxu0 0
    %1967 = vmatmul.mubr.bf16.gmra.mrb[0].mxu0 %v1492
    %v1968 = vpop.f32.mrb[0].mxu0
    %v1969 = vadd.f32 %v218, %v1968
    %v1970 = vpop.f32.mrb[0].mxu0
    %v1971 = vpop.f32.mrb[0].mxu0
    %v1972 = vpop.f32.mrb[0].mxu0
    %1973 = vdwg.mxu0
    %v1974 = vpack.c.bf16 %v1529, %v1529
    %v1975 = vpack.c.bf16 %v1569, %v1569
    %v1976 = vpack.c.bf16 %v1609, %v1609
    %v1977 = vpack.c.bf16 %v1649, %v1649
    %v1978 = vpack.c.bf16 %v1689, %v1689
    %v1979 = vpack.c.bf16 %v1729, %v1729
    %v1980 = vpack.c.bf16 %v1769, %v1769
    %v1981 = vpack.c.bf16 %v1809, %v1809
    %v1982 = vpack.c.bf16 %v1849, %v1849
    %v1983 = vpack.c.bf16 %v1889, %v1889
    %v1984 = vpack.c.bf16 %v1929, %v1929
    %v1985 = vpack.c.bf16 %v1969, %v1969
    %s1986 = scalar_lea.vmem %s2, 8
    %v1987 = vld [vmem:[%s1986] sm:$0xff]
    %v1989 = vsel %vm871, %v1974, 0
    %v1992 = vsel %vm871, %v1978, 0
    %1994 = vmatprep.subr.bf16.mxu0 0
    %1995 = vmatpush1.bf16.xpose.msra.mxu0 %v1992
    %1996 = vmatprep.subr.bf16.mxu0 0
    %1997 = vmatpush1.bf16.xpose.msra.mxu0 0
    %1998 = vmatprep.subr.bf16.mxu0 0
    %1999 = vmatpush1.bf16.xpose.msra.mxu0 0
    %2000 = vmatprep.subr.bf16.mxu0 0
    %2001 = vmatpush1.bf16.xpose.msra.mxu0 0
    %2002 = vmatprep.subr.bf16.mxu0 0
    %2003 = vmatpush1.bf16.xpose.msra.mxu0 0
    %2004 = vmatprep.subr.bf16.mxu0 0
    %2005 = vmatpush1.bf16.xpose.msra.mxu0 0
    %2006 = vmatprep.subr.bf16.mxu0 0
    %2007 = vmatpush1.bf16.xpose.msra.mxu0 0
    %2008 = vmatprep.subr.bf16.mxu0 0
    %2009 = vmatpush1.bf16.xpose.msra.mxu0 0
    %2010 = vmatprep.subr.bf16.mxu0 0
    %2011 = vmatpush1.bf16.xpose.msra.mxu0 0
    %2012 = vmatprep.subr.bf16.mxu0 0
    %2013 = vmatpush1.bf16.xpose.msra.mxu0 0
    %2014 = vmatprep.subr.bf16.mxu0 0
    %2015 = vmatpush1.bf16.xpose.msra.mxu0 0
    %2016 = vmatprep.subr.bf16.mxu0 0
    %2017 = vmatpush1.bf16.xpose.msra.mxu0 0
    %2018 = vmatprep.subr.bf16.mxu0 0
    %2019 = vmatpush1.bf16.xpose.msra.mxu0 0
    %2020 = vmatprep.subr.bf16.mxu0 0
    %2021 = vmatpush1.bf16.xpose.msra.mxu0 0
    %2022 = vmatprep.subr.bf16.mxu0 0
    %2023 = vmatpush1.bf16.xpose.msra.mxu0 0
    %2024 = vmatprep.subr.bf16.mxu0 0
    %2025 = vmatpush1.bf16.xpose.msra.mxu0 0
    %2026 = vmatprep.mubr.bf16.mxu0 0
    %2027 = vmatmul.mubr.bf16.gmra.mrb[0].mxu0 %v1989
    %v2028 = vpop.f32.mrb[0].mxu0
    %v2029 = vadd.f32 %v1987, %v2028
    %v2030 = vpop.f32.mrb[0].mxu0
    %v2031 = vpop.f32.mrb[0].mxu0
    %v2032 = vpop.f32.mrb[0].mxu0
    %2033 = vdwg.mxu0
    %v2035 = vsel %vm871, %v1975, 0
    %v2038 = vsel %vm871, %v1979, 0
    %2040 = vmatprep.subr.bf16.mxu0 0
    %2041 = vmatpush1.bf16.xpose.msra.mxu0 %v2038
    %2042 = vmatprep.subr.bf16.mxu0 0
    %2043 = vmatpush1.bf16.xpose.msra.mxu0 0
    %2044 = vmatprep.subr.bf16.mxu0 0
    %2045 = vmatpush1.bf16.xpose.msra.mxu0 0
    %2046 = vmatprep.subr.bf16.mxu0 0
    %2047 = vmatpush1.bf16.xpose.msra.mxu0 0
    %2048 = vmatprep.subr.bf16.mxu0 0
    %2049 = vmatpush1.bf16.xpose.msra.mxu0 0
    %2050 = vmatprep.subr.bf16.mxu0 0
    %2051 = vmatpush1.bf16.xpose.msra.mxu0 0
    %2052 = vmatprep.subr.bf16.mxu0 0
    %2053 = vmatpush1.bf16.xpose.msra.mxu0 0
    %2054 = vmatprep.subr.bf16.mxu0 0
    %2055 = vmatpush1.bf16.xpose.msra.mxu0 0
    %2056 = vmatprep.subr.bf16.mxu0 0
    %2057 = vmatpush1.bf16.xpose.msra.mxu0 0
    %2058 = vmatprep.subr.bf16.mxu0 0
    %2059 = vmatpush1.bf16.xpose.msra.mxu0 0
    %2060 = vmatprep.subr.bf16.mxu0 0
    %2061 = vmatpush1.bf16.xpose.msra.mxu0 0
    %2062 = vmatprep.subr.bf16.mxu0 0
    %2063 = vmatpush1.bf16.xpose.msra.mxu0 0
    %2064 = vmatprep.subr.bf16.mxu0 0
    %2065 = vmatpush1.bf16.xpose.msra.mxu0 0
    %2066 = vmatprep.subr.bf16.mxu0 0
    %2067 = vmatpush1.bf16.xpose.msra.mxu0 0
    %2068 = vmatprep.subr.bf16.mxu0 0
    %2069 = vmatpush1.bf16.xpose.msra.mxu0 0
    %2070 = vmatprep.subr.bf16.mxu0 0
    %2071 = vmatpush1.bf16.xpose.msra.mxu0 0
    %2072 = vmatprep.mubr.bf16.mxu0 0
    %2073 = vmatmul.mubr.bf16.gmra.mrb[0].mxu0 %v2035
    %v2074 = vpop.f32.mrb[0].mxu0
    %v2075 = vadd.f32 %v1987, %v2074
    %v2076 = vpop.f32.mrb[0].mxu0
    %v2077 = vpop.f32.mrb[0].mxu0
    %v2078 = vpop.f32.mrb[0].mxu0
    %2079 = vdwg.mxu0
    %v2081 = vsel %vm871, %v1976, 0
    %v2084 = vsel %vm871, %v1980, 0
    %2086 = vmatprep.subr.bf16.mxu0 0
    %2087 = vmatpush1.bf16.xpose.msra.mxu0 %v2084
    %2088 = vmatprep.subr.bf16.mxu0 0
    %2089 = vmatpush1.bf16.xpose.msra.mxu0 0
    %2090 = vmatprep.subr.bf16.mxu0 0
    %2091 = vmatpush1.bf16.xpose.msra.mxu0 0
    %2092 = vmatprep.subr.bf16.mxu0 0
    %2093 = vmatpush1.bf16.xpose.msra.mxu0 0
    %2094 = vmatprep.subr.bf16.mxu0 0
    %2095 = vmatpush1.bf16.xpose.msra.mxu0 0
    %2096 = vmatprep.subr.bf16.mxu0 0
    %2097 = vmatpush1.bf16.xpose.msra.mxu0 0
    %2098 = vmatprep.subr.bf16.mxu0 0
    %2099 = vmatpush1.bf16.xpose.msra.mxu0 0
    %2100 = vmatprep.subr.bf16.mxu0 0
    %2101 = vmatpush1.bf16.xpose.msra.mxu0 0
    %2102 = vmatprep.subr.bf16.mxu0 0
    %2103 = vmatpush1.bf16.xpose.msra.mxu0 0
    %2104 = vmatprep.subr.bf16.mxu0 0
    %2105 = vmatpush1.bf16.xpose.msra.mxu0 0
    %2106 = vmatprep.subr.bf16.mxu0 0
    %2107 = vmatpush1.bf16.xpose.msra.mxu0 0
    %2108 = vmatprep.subr.bf16.mxu0 0
    %2109 = vmatpush1.bf16.xpose.msra.mxu0 0
    %2110 = vmatprep.subr.bf16.mxu0 0
    %2111 = vmatpush1.bf16.xpose.msra.mxu0 0
    %2112 = vmatprep.subr.bf16.mxu0 0
    %2113 = vmatpush1.bf16.xpose.msra.mxu0 0
    %2114 = vmatprep.subr.bf16.mxu0 0
    %2115 = vmatpush1.bf16.xpose.msra.mxu0 0
    %2116 = vmatprep.subr.bf16.mxu0 0
    %2117 = vmatpush1.bf16.xpose.msra.mxu0 0
    %2118 = vmatprep.mubr.bf16.mxu0 0
    %2119 = vmatmul.mubr.bf16.gmra.mrb[0].mxu0 %v2081
    %v2120 = vpop.f32.mrb[0].mxu0
    %v2121 = vadd.f32 %v1987, %v2120
    %v2122 = vpop.f32.mrb[0].mxu0
    %v2123 = vpop.f32.mrb[0].mxu0
    %v2124 = vpop.f32.mrb[0].mxu0
    %2125 = vdwg.mxu0
    %v2127 = vsel %vm871, %v1977, 0
    %v2130 = vsel %vm871, %v1981, 0
    %2132 = vmatprep.subr.bf16.mxu0 0
    %2133 = vmatpush1.bf16.xpose.msra.mxu0 %v2130
    %2134 = vmatprep.subr.bf16.mxu0 0
    %2135 = vmatpush1.bf16.xpose.msra.mxu0 0
    %2136 = vmatprep.subr.bf16.mxu0 0
    %2137 = vmatpush1.bf16.xpose.msra.mxu0 0
    %2138 = vmatprep.subr.bf16.mxu0 0
    %2139 = vmatpush1.bf16.xpose.msra.mxu0 0
    %2140 = vmatprep.subr.bf16.mxu0 0
    %2141 = vmatpush1.bf16.xpose.msra.mxu0 0
    %2142 = vmatprep.subr.bf16.mxu0 0
    %2143 = vmatpush1.bf16.xpose.msra.mxu0 0
    %2144 = vmatprep.subr.bf16.mxu0 0
    %2145 = vmatpush1.bf16.xpose.msra.mxu0 0
    %2146 = vmatprep.subr.bf16.mxu0 0
    %2147 = vmatpush1.bf16.xpose.msra.mxu0 0
    %2148 = vmatprep.subr.bf16.mxu0 0
    %2149 = vmatpush1.bf16.xpose.msra.mxu0 0
    %2150 = vmatprep.subr.bf16.mxu0 0
    %2151 = vmatpush1.bf16.xpose.msra.mxu0 0
    %2152 = vmatprep.subr.bf16.mxu0 0
    %2153 = vmatpush1.bf16.xpose.msra.mxu0 0
    %2154 = vmatprep.subr.bf16.mxu0 0
    %2155 = vmatpush1.bf16.xpose.msra.mxu0 0
    %2156 = vmatprep.subr.bf16.mxu0 0
    %2157 = vmatpush1.bf16.xpose.msra.mxu0 0
    %2158 = vmatprep.subr.bf16.mxu0 0
    %2159 = vmatpush1.bf16.xpose.msra.mxu0 0
    %2160 = vmatprep.subr.bf16.mxu0 0
    %2161 = vmatpush1.bf16.xpose.msra.mxu0 0
    %2162 = vmatprep.subr.bf16.mxu0 0
    %2163 = vmatpush1.bf16.xpose.msra.mxu0 0
    %2164 = vmatprep.mubr.bf16.mxu0 0
    %2165 = vmatmul.mubr.bf16.gmra.mrb[0].mxu0 %v2127
    %v2166 = vpop.f32.mrb[0].mxu0
    %v2167 = vadd.f32 %v1987, %v2166
    %v2168 = vpop.f32.mrb[0].mxu0
    %v2169 = vpop.f32.mrb[0].mxu0
    %v2170 = vpop.f32.mrb[0].mxu0
    %2171 = vdwg.mxu0
    %v2172 = vsel %vm871, %v2029, -inf
    %2173 = vmax.xlane.f32.xlu0 %v2172
    %v2174 = vpop.xlane.xlu0 %2173
    %v2175 = vsel %vm871, %v2075, -inf
    %2176 = vmax.xlane.f32.xlu0 %v2175
    %v2177 = vpop.xlane.xlu0 %2176
    %v2178 = vsel %vm871, %v2121, -inf
    %2179 = vmax.xlane.f32.xlu0 %v2178
    %v2180 = vpop.xlane.xlu0 %2179
    %v2181 = vsel %vm871, %v2167, -inf
    %2182 = vmax.xlane.f32.xlu0 %v2181
    %v2183 = vpop.xlane.xlu0 %2182
    %v2184 = vsub.f32 %v2029, %v2174
    %v2185 = vsub.f32 %v2075, %v2177
    %v2186 = vsub.f32 %v2121, %v2180
    %v2187 = vsub.f32 %v2167, %v2183
    %v2188 = vmul.f32 %v2184, 1.442695
    %v2189 = vpow.pop %v2188
    %v2190 = vmul.f32 %v2185, 1.442695
    %v2191 = vpow.pop %v2190
    %v2192 = vmul.f32 %v2186, 1.442695
    %v2193 = vpow.pop %v2192
    %v2194 = vmul.f32 %v2187, 1.442695
    %v2195 = vpow.pop %v2194
    %v2196 = vsel %vm871, %v2189, 0.0
    %2197 = vadd.xlane.f32.xlu0 %v2196
    %v2198 = vpop.xlane.xlu0 %2197
    %v2199 = vsel %vm871, %v2191, 0.0
    %2200 = vadd.xlane.f32.xlu0 %v2199
    %v2201 = vpop.xlane.xlu0 %2200
    %v2202 = vsel %vm871, %v2193, 0.0
    %2203 = vadd.xlane.f32.xlu0 %v2202
    %v2204 = vpop.xlane.xlu0 %2203
    %v2205 = vsel %vm871, %v2195, 0.0
    %2206 = vadd.xlane.f32.xlu0 %v2205
    %v2207 = vpop.xlane.xlu0 %2206
    %v2208 = vrcp.pop %v2198
    %v2209 = vrcp.pop %v2201
    %v2210 = vrcp.pop %v2204
    %v2211 = vrcp.pop %v2207
    %v2212 = vmul.f32 %v2189, %v2208
    %v2213 = vmul.f32 %v2191, %v2209
    %v2214 = vmul.f32 %v2193, %v2210
    %v2215 = vmul.f32 %v2195, %v2211
    %v2216 = vpack.c.bf16 %v2212, %v2212
    %v2217 = vpack.c.bf16 %v2213, %v2213
    %v2218 = vpack.c.bf16 %v2214, %v2214
    %v2219 = vpack.c.bf16 %v2215, %v2215
    %v2221 = vsel %vm871, %v2216, 0
    %v2224 = vsel %vm1107, %v1982, 0
    %2226 = vmatprep.subr.bf16.mxu0 0
    %2227 = vmatpush1.bf16.msra.mxu0 %v2224
    %2228 = vmatprep.subr.bf16.mxu0 0
    %2229 = vmatpush1.bf16.msra.mxu0 0
    %2230 = vmatprep.subr.bf16.mxu0 0
    %2231 = vmatpush1.bf16.msra.mxu0 0
    %2232 = vmatprep.subr.bf16.mxu0 0
    %2233 = vmatpush1.bf16.msra.mxu0 0
    %2234 = vmatprep.subr.bf16.mxu0 0
    %2235 = vmatpush1.bf16.msra.mxu0 0
    %2236 = vmatprep.subr.bf16.mxu0 0
    %2237 = vmatpush1.bf16.msra.mxu0 0
    %2238 = vmatprep.subr.bf16.mxu0 0
    %2239 = vmatpush1.bf16.msra.mxu0 0
    %2240 = vmatprep.subr.bf16.mxu0 0
    %2241 = vmatpush1.bf16.msra.mxu0 0
    %2242 = vmatprep.subr.bf16.mxu0 0
    %2243 = vmatpush1.bf16.msra.mxu0 0
    %2244 = vmatprep.subr.bf16.mxu0 0
    %2245 = vmatpush1.bf16.msra.mxu0 0
    %2246 = vmatprep.subr.bf16.mxu0 0
    %2247 = vmatpush1.bf16.msra.mxu0 0
    %2248 = vmatprep.subr.bf16.mxu0 0
    %2249 = vmatpush1.bf16.msra.mxu0 0
    %2250 = vmatprep.subr.bf16.mxu0 0
    %2251 = vmatpush1.bf16.msra.mxu0 0
    %2252 = vmatprep.subr.bf16.mxu0 0
    %2253 = vmatpush1.bf16.msra.mxu0 0
    %2254 = vmatprep.subr.bf16.mxu0 0
    %2255 = vmatpush1.bf16.msra.mxu0 0
    %2256 = vmatprep.subr.bf16.mxu0 0
    %2257 = vmatpush1.bf16.msra.mxu0 0
    %2258 = vmatprep.mubr.bf16.mxu0 0
    %2259 = vmatmul.mubr.bf16.gmra.mrb[0].mxu0 %v2221
    %v2260 = vpop.f32.mrb[0].mxu0
    %v2261 = vadd.f32 0.0, %v2260
    %v2262 = vpop.f32.mrb[0].mxu0
    %v2263 = vpop.f32.mrb[0].mxu0
    %v2264 = vpop.f32.mrb[0].mxu0
    %2265 = vdwg.mxu0
    %v2267 = vsel %vm871, %v2217, 0
    %v2270 = vsel %vm1107, %v1983, 0
    %2272 = vmatprep.subr.bf16.mxu0 0
    %2273 = vmatpush1.bf16.msra.mxu0 %v2270
    %2274 = vmatprep.subr.bf16.mxu0 0
    %2275 = vmatpush1.bf16.msra.mxu0 0
    %2276 = vmatprep.subr.bf16.mxu0 0
    %2277 = vmatpush1.bf16.msra.mxu0 0
    %2278 = vmatprep.subr.bf16.mxu0 0
    %2279 = vmatpush1.bf16.msra.mxu0 0
    %2280 = vmatprep.subr.bf16.mxu0 0
    %2281 = vmatpush1.bf16.msra.mxu0 0
    %2282 = vmatprep.subr.bf16.mxu0 0
    %2283 = vmatpush1.bf16.msra.mxu0 0
    %2284 = vmatprep.subr.bf16.mxu0 0
    %2285 = vmatpush1.bf16.msra.mxu0 0
    %2286 = vmatprep.subr.bf16.mxu0 0
    %2287 = vmatpush1.bf16.msra.mxu0 0
    %2288 = vmatprep.subr.bf16.mxu0 0
    %2289 = vmatpush1.bf16.msra.mxu0 0
    %2290 = vmatprep.subr.bf16.mxu0 0
    %2291 = vmatpush1.bf16.msra.mxu0 0
    %2292 = vmatprep.subr.bf16.mxu0 0
    %2293 = vmatpush1.bf16.msra.mxu0 0
    %2294 = vmatprep.subr.bf16.mxu0 0
    %2295 = vmatpush1.bf16.msra.mxu0 0
    %2296 = vmatprep.subr.bf16.mxu0 0
    %2297 = vmatpush1.bf16.msra.mxu0 0
    %2298 = vmatprep.subr.bf16.mxu0 0
    %2299 = vmatpush1.bf16.msra.mxu0 0
    %2300 = vmatprep.subr.bf16.mxu0 0
    %2301 = vmatpush1.bf16.msra.mxu0 0
    %2302 = vmatprep.subr.bf16.mxu0 0
    %2303 = vmatpush1.bf16.msra.mxu0 0
    %2304 = vmatprep.mubr.bf16.mxu0 0
    %2305 = vmatmul.mubr.bf16.gmra.mrb[0].mxu0 %v2267
    %v2306 = vpop.f32.mrb[0].mxu0
    %v2307 = vadd.f32 0.0, %v2306
    %v2308 = vpop.f32.mrb[0].mxu0
    %v2309 = vpop.f32.mrb[0].mxu0
    %v2310 = vpop.f32.mrb[0].mxu0
    %2311 = vdwg.mxu0
    %v2313 = vsel %vm871, %v2218, 0
    %v2316 = vsel %vm1107, %v1984, 0
    %2318 = vmatprep.subr.bf16.mxu0 0
    %2319 = vmatpush1.bf16.msra.mxu0 %v2316
    %2320 = vmatprep.subr.bf16.mxu0 0
    %2321 = vmatpush1.bf16.msra.mxu0 0
    %2322 = vmatprep.subr.bf16.mxu0 0
    %2323 = vmatpush1.bf16.msra.mxu0 0
    %2324 = vmatprep.subr.bf16.mxu0 0
    %2325 = vmatpush1.bf16.msra.mxu0 0
    %2326 = vmatprep.subr.bf16.mxu0 0
    %2327 = vmatpush1.bf16.msra.mxu0 0
    %2328 = vmatprep.subr.bf16.mxu0 0
    %2329 = vmatpush1.bf16.msra.mxu0 0
    %2330 = vmatprep.subr.bf16.mxu0 0
    %2331 = vmatpush1.bf16.msra.mxu0 0
    %2332 = vmatprep.subr.bf16.mxu0 0
    %2333 = vmatpush1.bf16.msra.mxu0 0
    %2334 = vmatprep.subr.bf16.mxu0 0
    %2335 = vmatpush1.bf16.msra.mxu0 0
    %2336 = vmatprep.subr.bf16.mxu0 0
    %2337 = vmatpush1.bf16.msra.mxu0 0
    %2338 = vmatprep.subr.bf16.mxu0 0
    %2339 = vmatpush1.bf16.msra.mxu0 0
    %2340 = vmatprep.subr.bf16.mxu0 0
    %2341 = vmatpush1.bf16.msra.mxu0 0
    %2342 = vmatprep.subr.bf16.mxu0 0
    %2343 = vmatpush1.bf16.msra.mxu0 0
    %2344 = vmatprep.subr.bf16.mxu0 0
    %2345 = vmatpush1.bf16.msra.mxu0 0
    %2346 = vmatprep.subr.bf16.mxu0 0
    %2347 = vmatpush1.bf16.msra.mxu0 0
    %2348 = vmatprep.subr.bf16.mxu0 0
    %2349 = vmatpush1.bf16.msra.mxu0 0
    %2350 = vmatprep.mubr.bf16.mxu0 0
    %2351 = vmatmul.mubr.bf16.gmra.mrb[0].mxu0 %v2313
    %v2352 = vpop.f32.mrb[0].mxu0
    %v2353 = vadd.f32 0.0, %v2352
    %v2354 = vpop.f32.mrb[0].mxu0
    %v2355 = vpop.f32.mrb[0].mxu0
    %v2356 = vpop.f32.mrb[0].mxu0
    %2357 = vdwg.mxu0
    %v2359 = vsel %vm871, %v2219, 0
    %v2362 = vsel %vm1107, %v1985, 0
    %2364 = vmatprep.subr.bf16.mxu0 0
    %2365 = vmatpush1.bf16.msra.mxu0 %v2362
    %2366 = vmatprep.subr.bf16.mxu0 0
    %2367 = vmatpush1.bf16.msra.mxu0 0
    %2368 = vmatprep.subr.bf16.mxu0 0
    %2369 = vmatpush1.bf16.msra.mxu0 0
    %2370 = vmatprep.subr.bf16.mxu0 0
    %2371 = vmatpush1.bf16.msra.mxu0 0
    %2372 = vmatprep.subr.bf16.mxu0 0
    %2373 = vmatpush1.bf16.msra.mxu0 0
    %2374 = vmatprep.subr.bf16.mxu0 0
    %2375 = vmatpush1.bf16.msra.mxu0 0
    %2376 = vmatprep.subr.bf16.mxu0 0
    %2377 = vmatpush1.bf16.msra.mxu0 0
    %2378 = vmatprep.subr.bf16.mxu0 0
    %2379 = vmatpush1.bf16.msra.mxu0 0
    %2380 = vmatprep.subr.bf16.mxu0 0
    %2381 = vmatpush1.bf16.msra.mxu0 0
    %2382 = vmatprep.subr.bf16.mxu0 0
    %2383 = vmatpush1.bf16.msra.mxu0 0
    %2384 = vmatprep.subr.bf16.mxu0 0
    %2385 = vmatpush1.bf16.msra.mxu0 0
    %2386 = vmatprep.subr.bf16.mxu0 0
    %2387 = vmatpush1.bf16.msra.mxu0 0
    %2388 = vmatprep.subr.bf16.mxu0 0
    %2389 = vmatpush1.bf16.msra.mxu0 0
    %2390 = vmatprep.subr.bf16.mxu0 0
    %2391 = vmatpush1.bf16.msra.mxu0 0
    %2392 = vmatprep.subr.bf16.mxu0 0
    %2393 = vmatpush1.bf16.msra.mxu0 0
    %2394 = vmatprep.subr.bf16.mxu0 0
    %2395 = vmatpush1.bf16.msra.mxu0 0
    %2396 = vmatprep.mubr.bf16.mxu0 0
    %2397 = vmatmul.mubr.bf16.gmra.mrb[0].mxu0 %v2359
    %v2398 = vpop.f32.mrb[0].mxu0
    %v2399 = vadd.f32 0.0, %v2398
    %v2400 = vpop.f32.mrb[0].mxu0
    %v2401 = vpop.f32.mrb[0].mxu0
    %v2402 = vpop.f32.mrb[0].mxu0
    %2403 = vdwg.mxu0
    %v2404 = vpack.c.bf16 %v2261, %v2261
    %v2405 = vpack.c.bf16 %v2307, %v2307
    %v2406 = vpack.c.bf16 %v2353, %v2353
    %v2407 = vpack.c.bf16 %v2399, %v2399
    %v2409 = vsel %vm871, %v2404, 0
    %2411 = vmatprep.subr.bf16.mxu0 0
    %2412 = vmatpush1.bf16.msra.mxu0 %v1297
    %2413 = vmatprep.subr.bf16.mxu0 0
    %2414 = vmatpush1.bf16.msra.mxu0 0
    %2415 = vmatprep.subr.bf16.mxu0 0
    %2416 = vmatpush1.bf16.msra.mxu0 0
    %2417 = vmatprep.subr.bf16.mxu0 0
    %2418 = vmatpush1.bf16.msra.mxu0 0
    %2419 = vmatprep.subr.bf16.mxu0 0
    %2420 = vmatpush1.bf16.msra.mxu0 0
    %2421 = vmatprep.subr.bf16.mxu0 0
    %2422 = vmatpush1.bf16.msra.mxu0 0
    %2423 = vmatprep.subr.bf16.mxu0 0
    %2424 = vmatpush1.bf16.msra.mxu0 0
    %2425 = vmatprep.subr.bf16.mxu0 0
    %2426 = vmatpush1.bf16.msra.mxu0 0
    %2427 = vmatprep.subr.bf16.mxu0 0
    %2428 = vmatpush1.bf16.msra.mxu0 0
    %2429 = vmatprep.subr.bf16.mxu0 0
    %2430 = vmatpush1.bf16.msra.mxu0 0
    %2431 = vmatprep.subr.bf16.mxu0 0
    %2432 = vmatpush1.bf16.msra.mxu0 0
    %2433 = vmatprep.subr.bf16.mxu0 0
    %2434 = vmatpush1.bf16.msra.mxu0 0
    %2435 = vmatprep.subr.bf16.mxu0 0
    %2436 = vmatpush1.bf16.msra.mxu0 0
    %2437 = vmatprep.subr.bf16.mxu0 0
    %2438 = vmatpush1.bf16.msra.mxu0 0
    %2439 = vmatprep.subr.bf16.mxu0 0
    %2440 = vmatpush1.bf16.msra.mxu0 0
    %2441 = vmatprep.subr.bf16.mxu0 0
    %2442 = vmatpush1.bf16.msra.mxu0 0
    %2443 = vmatprep.mubr.bf16.mxu0 0
    %2444 = vmatmul.mubr.bf16.gmra.mrb[0].mxu0 %v2409
    %v2445 = vpop.f32.mrb[0].mxu0
    %v2446 = vadd.f32 0.0, %v2445
    %v2447 = vpop.f32.mrb[0].mxu0
    %v2448 = vpop.f32.mrb[0].mxu0
    %v2449 = vpop.f32.mrb[0].mxu0
    %2450 = vdwg.mxu0
    %v2452 = vsel %vm871, %v2405, 0
    %2454 = vmatprep.subr.bf16.mxu0 0
    %2455 = vmatpush1.bf16.msra.mxu0 %v1343
    %2456 = vmatprep.subr.bf16.mxu0 0
    %2457 = vmatpush1.bf16.msra.mxu0 0
    %2458 = vmatprep.subr.bf16.mxu0 0
    %2459 = vmatpush1.bf16.msra.mxu0 0
    %2460 = vmatprep.subr.bf16.mxu0 0
    %2461 = vmatpush1.bf16.msra.mxu0 0
    %2462 = vmatprep.subr.bf16.mxu0 0
    %2463 = vmatpush1.bf16.msra.mxu0 0
    %2464 = vmatprep.subr.bf16.mxu0 0
    %2465 = vmatpush1.bf16.msra.mxu0 0
    %2466 = vmatprep.subr.bf16.mxu0 0
    %2467 = vmatpush1.bf16.msra.mxu0 0
    %2468 = vmatprep.subr.bf16.mxu0 0
    %2469 = vmatpush1.bf16.msra.mxu0 0
    %2470 = vmatprep.subr.bf16.mxu0 0
    %2471 = vmatpush1.bf16.msra.mxu0 0
    %2472 = vmatprep.subr.bf16.mxu0 0
    %2473 = vmatpush1.bf16.msra.mxu0 0
    %2474 = vmatprep.subr.bf16.mxu0 0
    %2475 = vmatpush1.bf16.msra.mxu0 0
    %2476 = vmatprep.subr.bf16.mxu0 0
    %2477 = vmatpush1.bf16.msra.mxu0 0
    %2478 = vmatprep.subr.bf16.mxu0 0
    %2479 = vmatpush1.bf16.msra.mxu0 0
    %2480 = vmatprep.subr.bf16.mxu0 0
    %2481 = vmatpush1.bf16.msra.mxu0 0
    %2482 = vmatprep.subr.bf16.mxu0 0
    %2483 = vmatpush1.bf16.msra.mxu0 0
    %2484 = vmatprep.subr.bf16.mxu0 0
    %2485 = vmatpush1.bf16.msra.mxu0 0
    %2486 = vmatprep.mubr.bf16.mxu0 0
    %2487 = vmatmul.mubr.bf16.gmra.mrb[0].mxu0 %v2452
    %v2488 = vpop.f32.mrb[0].mxu0
    %v2489 = vadd.f32 0.0, %v2488
    %v2490 = vpop.f32.mrb[0].mxu0
    %v2491 = vpop.f32.mrb[0].mxu0
    %v2492 = vpop.f32.mrb[0].mxu0
    %2493 = vdwg.mxu0
    %v2495 = vsel %vm871, %v2406, 0
    %2497 = vmatprep.subr.bf16.mxu0 0
    %2498 = vmatpush1.bf16.msra.mxu0 %v1389
    %2499 = vmatprep.subr.bf16.mxu0 0
    %2500 = vmatpush1.bf16.msra.mxu0 0
    %2501 = vmatprep.subr.bf16.mxu0 0
    %2502 = vmatpush1.bf16.msra.mxu0 0
    %2503 = vmatprep.subr.bf16.mxu0 0
    %2504 = vmatpush1.bf16.msra.mxu0 0
    %2505 = vmatprep.subr.bf16.mxu0 0
    %2506 = vmatpush1.bf16.msra.mxu0 0
    %2507 = vmatprep.subr.bf16.mxu0 0
    %2508 = vmatpush1.bf16.msra.mxu0 0
    %2509 = vmatprep.subr.bf16.mxu0 0
    %2510 = vmatpush1.bf16.msra.mxu0 0
    %2511 = vmatprep.subr.bf16.mxu0 0
    %2512 = vmatpush1.bf16.msra.mxu0 0
    %2513 = vmatprep.subr.bf16.mxu0 0
    %2514 = vmatpush1.bf16.msra.mxu0 0
    %2515 = vmatprep.subr.bf16.mxu0 0
    %2516 = vmatpush1.bf16.msra.mxu0 0
    %2517 = vmatprep.subr.bf16.mxu0 0
    %2518 = vmatpush1.bf16.msra.mxu0 0
    %2519 = vmatprep.subr.bf16.mxu0 0
    %2520 = vmatpush1.bf16.msra.mxu0 0
    %2521 = vmatprep.subr.bf16.mxu0 0
    %2522 = vmatpush1.bf16.msra.mxu0 0
    %2523 = vmatprep.subr.bf16.mxu0 0
    %2524 = vmatpush1.bf16.msra.mxu0 0
    %2525 = vmatprep.subr.bf16.mxu0 0
    %2526 = vmatpush1.bf16.msra.mxu0 0
    %2527 = vmatprep.subr.bf16.mxu0 0
    %2528 = vmatpush1.bf16.msra.mxu0 0
    %2529 = vmatprep.mubr.bf16.mxu0 0
    %2530 = vmatmul.mubr.bf16.gmra.mrb[0].mxu0 %v2495
    %v2531 = vpop.f32.mrb[0].mxu0
    %v2532 = vadd.f32 0.0, %v2531
    %v2533 = vpop.f32.mrb[0].mxu0
    %v2534 = vpop.f32.mrb[0].mxu0
    %v2535 = vpop.f32.mrb[0].mxu0
    %2536 = vdwg.mxu0
    %v2538 = vsel %vm871, %v2407, 0
    %2540 = vmatprep.subr.bf16.mxu0 0
    %2541 = vmatpush1.bf16.msra.mxu0 %v1435
    %2542 = vmatprep.subr.bf16.mxu0 0
    %2543 = vmatpush1.bf16.msra.mxu0 0
    %2544 = vmatprep.subr.bf16.mxu0 0
    %2545 = vmatpush1.bf16.msra.mxu0 0
    %2546 = vmatprep.subr.bf16.mxu0 0
    %2547 = vmatpush1.bf16.msra.mxu0 0
    %2548 = vmatprep.subr.bf16.mxu0 0
    %2549 = vmatpush1.bf16.msra.mxu0 0
    %2550 = vmatprep.subr.bf16.mxu0 0
    %2551 = vmatpush1.bf16.msra.mxu0 0
    %2552 = vmatprep.subr.bf16.mxu0 0
    %2553 = vmatpush1.bf16.msra.mxu0 0
    %2554 = vmatprep.subr.bf16.mxu0 0
    %2555 = vmatpush1.bf16.msra.mxu0 0
    %2556 = vmatprep.subr.bf16.mxu0 0
    %2557 = vmatpush1.bf16.msra.mxu0 0
    %2558 = vmatprep.subr.bf16.mxu0 0
    %2559 = vmatpush1.bf16.msra.mxu0 0
    %2560 = vmatprep.subr.bf16.mxu0 0
    %2561 = vmatpush1.bf16.msra.mxu0 0
    %2562 = vmatprep.subr.bf16.mxu0 0
    %2563 = vmatpush1.bf16.msra.mxu0 0
    %2564 = vmatprep.subr.bf16.mxu0 0
    %2565 = vmatpush1.bf16.msra.mxu0 0
    %2566 = vmatprep.subr.bf16.mxu0 0
    %2567 = vmatpush1.bf16.msra.mxu0 0
    %2568 = vmatprep.subr.bf16.mxu0 0
    %2569 = vmatpush1.bf16.msra.mxu0 0
    %2570 = vmatprep.subr.bf16.mxu0 0
    %2571 = vmatpush1.bf16.msra.mxu0 0
    %2572 = vmatprep.mubr.bf16.mxu0 0
    %2573 = vmatmul.mubr.bf16.gmra.mrb[0].mxu0 %v2538
    %v2574 = vpop.f32.mrb[0].mxu0
    %v2575 = vadd.f32 0.0, %v2574
    %v2576 = vpop.f32.mrb[0].mxu0
    %v2577 = vpop.f32.mrb[0].mxu0
    %v2578 = vpop.f32.mrb[0].mxu0
    %2579 = vdwg.mxu0
    %v2580 = vsel %vm116, %v2446, 0.0
    %v2581 = vsel %vm116, %v2489, 0.0
    %v2582 = vadd.f32 %v2580, %v2581
    %v2583 = vsel %vm116, %v2532, 0.0
    %v2584 = vadd.f32 %v2582, %v2583
    %v2585 = vsel %vm116, %v2575, 0.0
    %v2586 = vadd.f32 %v2584, %v2585
    %v2587 = vadd.f32 %v2586, %v1487
    %v2588 = vadd.f32 %v49, %v1488
    %v2589 = vadd.f32 %v50, %v2587
    %v2590 = vld [vmem:[%s1] sm:$0xff]
    %v2591 = vld [vmem:[%s1 + $0x8] sm:$0xff]
    %v2592 = vpack.c.bf16 %v2591, %v2590
    %v2593 = vld [vmem:[%s7] sm:$0xf]
    %v2594 = vld [vmem:[%s7 + $0x4] sm:$0xf]
    %v2595 = vld [vmem:[%s7 + $0x8] sm:$0xf]
    %v2596 = vld [vmem:[%s7 + $0xc] sm:$0xf]
    %v2597 = vld [vmem:[%s7 + $0x10] sm:$0xf]
    %v2598 = vld [vmem:[%s7 + $0x14] sm:$0xf]
    %v2599 = vld [vmem:[%s7 + $0x18] sm:$0xf]
    %v2600 = vld [vmem:[%s7 + $0x1c] sm:$0xf]
    %v2601 = vld [vmem:[%s7 + $0x20] sm:$0xf]
    %v2602 = vld [vmem:[%s7 + $0x24] sm:$0xf]
    %v2603 = vld [vmem:[%s7 + $0x28] sm:$0xf]
    %v2604 = vld [vmem:[%s7 + $0x2c] sm:$0xf]
    %v2605 = vld [vmem:[%s7 + $0x30] sm:$0xf]
    %v2606 = vld [vmem:[%s7 + $0x34] sm:$0xf]
    %v2607 = vld [vmem:[%s7 + $0x38] sm:$0xf]
    %v2608 = vld [vmem:[%s7 + $0x3c] sm:$0xf]
    %v2609 = vld [vmem:[%s8] sm:$0x1]
    %v2610 = vld [vmem:[%s8 + $0x1] sm:$0x1]
    %v2611 = vld [vmem:[%s8 + $0x2] sm:$0x1]
    %v2612 = vld [vmem:[%s8 + $0x3] sm:$0x1]
    %v2613 = vld [vmem:[%s9] sm:$0xf]
    %v2614 = vld [vmem:[%s9 + $0x4] sm:$0xf]
    %v2615 = vld [vmem:[%s9 + $0x8] sm:$0xf]
    %v2616 = vld [vmem:[%s9 + $0xc] sm:$0xf]
    %v2617 = vld [vmem:[%s9 + $0x10] sm:$0xf]
    %v2618 = vld [vmem:[%s9 + $0x14] sm:$0xf]
    %v2619 = vld [vmem:[%s9 + $0x18] sm:$0xf]
    %v2620 = vld [vmem:[%s9 + $0x1c] sm:$0xf]
    %v2621 = vld [vmem:[%s9 + $0x20] sm:$0xf]
    %v2622 = vld [vmem:[%s9 + $0x24] sm:$0xf]
    %v2623 = vld [vmem:[%s9 + $0x28] sm:$0xf]
    %v2624 = vld [vmem:[%s9 + $0x2c] sm:$0xf]
    %v2625 = vld [vmem:[%s9 + $0x30] sm:$0xf]
    %v2626 = vld [vmem:[%s9 + $0x34] sm:$0xf]
    %v2627 = vld [vmem:[%s9 + $0x38] sm:$0xf]
    %v2628 = vld [vmem:[%s9 + $0x3c] sm:$0xf]
    %v2629 = vld [vmem:[%s9 + $0x40] sm:$0xf]
    %v2630 = vld [vmem:[%s9 + $0x44] sm:$0xf]
    %v2631 = vld [vmem:[%s9 + $0x48] sm:$0xf]
    %v2632 = vld [vmem:[%s9 + $0x4c] sm:$0xf]
    %v2633 = vld [vmem:[%s9 + $0x50] sm:$0xf]
    %v2634 = vld [vmem:[%s9 + $0x54] sm:$0xf]
    %v2635 = vld [vmem:[%s9 + $0x58] sm:$0xf]
    %v2636 = vld [vmem:[%s9 + $0x5c] sm:$0xf]
    %v2637 = vld [vmem:[%s9 + $0x60] sm:$0xf]
    %v2638 = vld [vmem:[%s9 + $0x64] sm:$0xf]
    %v2639 = vld [vmem:[%s9 + $0x68] sm:$0xf]
    %v2640 = vld [vmem:[%s9 + $0x6c] sm:$0xf]
    %v2641 = vld [vmem:[%s9 + $0x70] sm:$0xf]
    %v2642 = vld [vmem:[%s9 + $0x74] sm:$0xf]
    %v2643 = vld [vmem:[%s9 + $0x78] sm:$0xf]
    %v2644 = vld [vmem:[%s9 + $0x7c] sm:$0xf]
    %v2645 = vld [vmem:[%s10] sm:$0x1]
    %v2646 = vld [vmem:[%s10 + $0x1] sm:$0x1]
    %v2647 = vld [vmem:[%s10 + $0x2] sm:$0x1]
    %v2648 = vld [vmem:[%s10 + $0x3] sm:$0x1]
    %v2649 = vld [vmem:[%s10 + $0x4] sm:$0x1]
    %v2650 = vld [vmem:[%s10 + $0x5] sm:$0x1]
    %v2651 = vld [vmem:[%s10 + $0x6] sm:$0x1]
    %v2652 = vld [vmem:[%s10 + $0x7] sm:$0x1]
    %v2653 = vld [vmem:[%s11] sm:$0xf]
    %v2654 = vld [vmem:[%s11 + $0x4] sm:$0xf]
    %v2655 = vld [vmem:[%s11 + $0x8] sm:$0xf]
    %v2656 = vld [vmem:[%s11 + $0xc] sm:$0xf]
    %v2657 = vld [vmem:[%s3 + $0x7] sm:$0x1]
    %v2658 = vsel %vm116, %v2588, 0.0
    %2659 = vadd.xlane.f32.xlu0 %v2658
    %v2660 = vpop.xlane.xlu0 %2659
    %v2661 = vsel %vm116, %v2589, 0.0
    %2662 = vadd.xlane.f32.xlu0 %v2661
    %v2663 = vpop.xlane.xlu0 %2662
    %v2664 = vmul.f32 %v2660, %v123
    %v2665 = vmul.f32 %v2663, %v123
    %v2666 = vsub.f32 %v2588, %v2664
    %v2667 = vsub.f32 %v2589, %v2665
    %v2668 = vmul.f32 %v2666, %v2666
    %v2669 = vmul.f32 %v2667, %v2667
    %v2670 = vsel %vm116, %v2668, 0.0
    %2671 = vadd.xlane.f32.xlu0 %v2670
    %v2672 = vpop.xlane.xlu0 %2671
    %v2673 = vsel %vm116, %v2669, 0.0
    %2674 = vadd.xlane.f32.xlu0 %v2673
    %v2675 = vpop.xlane.xlu0 %2674
    %v2676 = vmul.f32 %v2672, %v123
    %v2677 = vmul.f32 %v2675, %v123
    %v2678 = vadd.f32 %v2676, 1e-05
    %v2679 = vadd.f32 %v2677, 1e-05
    %v2680 = vrsqrt.pop %v2678
    %v2681 = vrsqrt.pop %v2679
    %v2682 = vmul.f32 %v2666, %v2680
    %v2683 = vmul.f32 %v2667, %v2681
    %v2684 = vld [vmem:[%s3 + $0x2] sm:$0x1]
    %v2685 = vlaneseq
    %v2686 = vshrl.u32 %v2685, 7
    %v2687 = vsub.s32 0, %v2686
    %v2688 = vrot.slane %v2684, %v2687
    %v2689 = vmul.f32 %v2682, %v2688
    %v2690 = vmul.f32 %v2683, %v2688
    %v2691 = vld [vmem:[%s3 + $0x3] sm:$0x1]
    %v2692 = vlaneseq
    %v2693 = vshrl.u32 %v2692, 7
    %v2694 = vsub.s32 0, %v2693
    %v2695 = vrot.slane %v2691, %v2694
    %v2696 = vadd.f32 %v2689, %v2695
    %v2697 = vadd.f32 %v2690, %v2695
    %v2698 = vpack.c.bf16 %v2697, %v2696
    %v2703 = vlaneseq
    %v2704 = vshrl.u32 %v2703, 7
    %v2705 = vsub.s32 0, %v2704
    %v2706 = vrot.slane %v2609, %v2705
    %v2707 = vlaneseq
    %v2708 = vshrl.u32 %v2707, 7
    %v2709 = vsub.s32 0, %v2708
    %v2710 = vrot.slane %v2610, %v2709
    %v2711 = vlaneseq
    %v2712 = vshrl.u32 %v2711, 7
    %v2713 = vsub.s32 0, %v2712
    %v2714 = vrot.slane %v2611, %v2713
    %v2715 = vlaneseq
    %v2716 = vshrl.u32 %v2715, 7
    %v2717 = vsub.s32 0, %v2716
    %v2718 = vrot.slane %v2612, %v2717
    %v2727 = vunpack.c.l.b16 %v2593
    %v2728 = vunpack.c.l.b16 %v2594
    %v2729 = vunpack.c.l.b16 %v2595
    %v2730 = vunpack.c.l.b16 %v2596
    %v2731 = vpack.c.b16 %v2728, %v2727
    %v2732 = vpack.c.b16 %v2730, %v2729
    %v2736 = vsel %vm116, %v2698, 0
    %2738 = vmatprep.subr.bf16.mxu0 0
    %2739 = vmatpush1.bf16.msra.mxu0 %v2731
    %2740 = vmatprep.subr.bf16.mxu0 0
    %2741 = vmatpush1.bf16.msra.mxu0 %v2732
    %2742 = vmatprep.subr.bf16.mxu0 0
    %2743 = vmatpush1.bf16.msra.mxu0 0
    %2744 = vmatprep.subr.bf16.mxu0 0
    %2745 = vmatpush1.bf16.msra.mxu0 0
    %2746 = vmatprep.subr.bf16.mxu0 0
    %2747 = vmatpush1.bf16.msra.mxu0 0
    %2748 = vmatprep.subr.bf16.mxu0 0
    %2749 = vmatpush1.bf16.msra.mxu0 0
    %2750 = vmatprep.subr.bf16.mxu0 0
    %2751 = vmatpush1.bf16.msra.mxu0 0
    %2752 = vmatprep.subr.bf16.mxu0 0
    %2753 = vmatpush1.bf16.msra.mxu0 0
    %2754 = vmatprep.subr.bf16.mxu0 0
    %2755 = vmatpush1.bf16.msra.mxu0 0
    %2756 = vmatprep.subr.bf16.mxu0 0
    %2757 = vmatpush1.bf16.msra.mxu0 0
    %2758 = vmatprep.subr.bf16.mxu0 0
    %2759 = vmatpush1.bf16.msra.mxu0 0
    %2760 = vmatprep.subr.bf16.mxu0 0
    %2761 = vmatpush1.bf16.msra.mxu0 0
    %2762 = vmatprep.subr.bf16.mxu0 0
    %2763 = vmatpush1.bf16.msra.mxu0 0
    %2764 = vmatprep.subr.bf16.mxu0 0
    %2765 = vmatpush1.bf16.msra.mxu0 0
    %2766 = vmatprep.subr.bf16.mxu0 0
    %2767 = vmatpush1.bf16.msra.mxu0 0
    %2768 = vmatprep.subr.bf16.mxu0 0
    %2769 = vmatpush1.bf16.msra.mxu0 0
    %2770 = vmatprep.mubr.bf16.mxu0 0
    %2771 = vmatmul.mubr.bf16.gmra.mrb[0].mxu0 %v2736
    %v2772 = vpop.f32.mrb[0].mxu0
    %v2773 = vadd.f32 %v2706, %v2772
    %v2774 = vpop.f32.mrb[0].mxu0
    %v2775 = vpop.f32.mrb[0].mxu0
    %v2776 = vpop.f32.mrb[0].mxu0
    %2777 = vdwg.mxu0
    %v2782 = vunpack.c.l.b16 %v2597
    %v2783 = vunpack.c.l.b16 %v2598
    %v2784 = vunpack.c.l.b16 %v2599
    %v2785 = vunpack.c.l.b16 %v2600
    %v2786 = vpack.c.b16 %v2783, %v2782
    %v2787 = vpack.c.b16 %v2785, %v2784
    %2790 = vmatprep.subr.bf16.mxu0 0
    %2791 = vmatpush1.bf16.msra.mxu0 %v2786
    %2792 = vmatprep.subr.bf16.mxu0 0
    %2793 = vmatpush1.bf16.msra.mxu0 %v2787
    %2794 = vmatprep.subr.bf16.mxu0 0
    %2795 = vmatpush1.bf16.msra.mxu0 0
    %2796 = vmatprep.subr.bf16.mxu0 0
    %2797 = vmatpush1.bf16.msra.mxu0 0
    %2798 = vmatprep.subr.bf16.mxu0 0
    %2799 = vmatpush1.bf16.msra.mxu0 0
    %2800 = vmatprep.subr.bf16.mxu0 0
    %2801 = vmatpush1.bf16.msra.mxu0 0
    %2802 = vmatprep.subr.bf16.mxu0 0
    %2803 = vmatpush1.bf16.msra.mxu0 0
    %2804 = vmatprep.subr.bf16.mxu0 0
    %2805 = vmatpush1.bf16.msra.mxu0 0
    %2806 = vmatprep.subr.bf16.mxu0 0
    %2807 = vmatpush1.bf16.msra.mxu0 0
    %2808 = vmatprep.subr.bf16.mxu0 0
    %2809 = vmatpush1.bf16.msra.mxu0 0
    %2810 = vmatprep.subr.bf16.mxu0 0
    %2811 = vmatpush1.bf16.msra.mxu0 0
    %2812 = vmatprep.subr.bf16.mxu0 0
    %2813 = vmatpush1.bf16.msra.mxu0 0
    %2814 = vmatprep.subr.bf16.mxu0 0
    %2815 = vmatpush1.bf16.msra.mxu0 0
    %2816 = vmatprep.subr.bf16.mxu0 0
    %2817 = vmatpush1.bf16.msra.mxu0 0
    %2818 = vmatprep.subr.bf16.mxu0 0
    %2819 = vmatpush1.bf16.msra.mxu0 0
    %2820 = vmatprep.subr.bf16.mxu0 0
    %2821 = vmatpush1.bf16.msra.mxu0 0
    %2822 = vmatprep.mubr.bf16.mxu0 0
    %2823 = vmatmul.mubr.bf16.gmra.mrb[0].mxu0 %v2736
    %v2824 = vpop.f32.mrb[0].mxu0
    %v2825 = vadd.f32 %v2710, %v2824
    %v2826 = vpop.f32.mrb[0].mxu0
    %v2827 = vpop.f32.mrb[0].mxu0
    %v2828 = vpop.f32.mrb[0].mxu0
    %2829 = vdwg.mxu0
    %v2834 = vunpack.c.l.b16 %v2601
    %v2835 = vunpack.c.l.b16 %v2602
    %v2836 = vunpack.c.l.b16 %v2603
    %v2837 = vunpack.c.l.b16 %v2604
    %v2838 = vpack.c.b16 %v2835, %v2834
    %v2839 = vpack.c.b16 %v2837, %v2836
    %2842 = vmatprep.subr.bf16.mxu0 0
    %2843 = vmatpush1.bf16.msra.mxu0 %v2838
    %2844 = vmatprep.subr.bf16.mxu0 0
    %2845 = vmatpush1.bf16.msra.mxu0 %v2839
    %2846 = vmatprep.subr.bf16.mxu0 0
    %2847 = vmatpush1.bf16.msra.mxu0 0
    %2848 = vmatprep.subr.bf16.mxu0 0
    %2849 = vmatpush1.bf16.msra.mxu0 0
    %2850 = vmatprep.subr.bf16.mxu0 0
    %2851 = vmatpush1.bf16.msra.mxu0 0
    %2852 = vmatprep.subr.bf16.mxu0 0
    %2853 = vmatpush1.bf16.msra.mxu0 0
    %2854 = vmatprep.subr.bf16.mxu0 0
    %2855 = vmatpush1.bf16.msra.mxu0 0
    %2856 = vmatprep.subr.bf16.mxu0 0
    %2857 = vmatpush1.bf16.msra.mxu0 0
    %2858 = vmatprep.subr.bf16.mxu0 0
    %2859 = vmatpush1.bf16.msra.mxu0 0
    %2860 = vmatprep.subr.bf16.mxu0 0
    %2861 = vmatpush1.bf16.msra.mxu0 0
    %2862 = vmatprep.subr.bf16.mxu0 0
    %2863 = vmatpush1.bf16.msra.mxu0 0
    %2864 = vmatprep.subr.bf16.mxu0 0
    %2865 = vmatpush1.bf16.msra.mxu0 0
    %2866 = vmatprep.subr.bf16.mxu0 0
    %2867 = vmatpush1.bf16.msra.mxu0 0
    %2868 = vmatprep.subr.bf16.mxu0 0
    %2869 = vmatpush1.bf16.msra.mxu0 0
    %2870 = vmatprep.subr.bf16.mxu0 0
    %2871 = vmatpush1.bf16.msra.mxu0 0
    %2872 = vmatprep.subr.bf16.mxu0 0
    %2873 = vmatpush1.bf16.msra.mxu0 0
    %2874 = vmatprep.mubr.bf16.mxu0 0
    %2875 = vmatmul.mubr.bf16.gmra.mrb[0].mxu0 %v2736
    %v2876 = vpop.f32.mrb[0].mxu0
    %v2877 = vadd.f32 %v2714, %v2876
    %v2878 = vpop.f32.mrb[0].mxu0
    %v2879 = vpop.f32.mrb[0].mxu0
    %v2880 = vpop.f32.mrb[0].mxu0
    %2881 = vdwg.mxu0
    %v2886 = vunpack.c.l.b16 %v2605
    %v2887 = vunpack.c.l.b16 %v2606
    %v2888 = vunpack.c.l.b16 %v2607
    %v2889 = vunpack.c.l.b16 %v2608
    %v2890 = vpack.c.b16 %v2887, %v2886
    %v2891 = vpack.c.b16 %v2889, %v2888
    %2894 = vmatprep.subr.bf16.mxu0 0
    %2895 = vmatpush1.bf16.msra.mxu0 %v2890
    %2896 = vmatprep.subr.bf16.mxu0 0
    %2897 = vmatpush1.bf16.msra.mxu0 %v2891
    %2898 = vmatprep.subr.bf16.mxu0 0
    %2899 = vmatpush1.bf16.msra.mxu0 0
    %2900 = vmatprep.subr.bf16.mxu0 0
    %2901 = vmatpush1.bf16.msra.mxu0 0
    %2902 = vmatprep.subr.bf16.mxu0 0
    %2903 = vmatpush1.bf16.msra.mxu0 0
    %2904 = vmatprep.subr.bf16.mxu0 0
    %2905 = vmatpush1.bf16.msra.mxu0 0
    %2906 = vmatprep.subr.bf16.mxu0 0
    %2907 = vmatpush1.bf16.msra.mxu0 0
    %2908 = vmatprep.subr.bf16.mxu0 0
    %2909 = vmatpush1.bf16.msra.mxu0 0
    %2910 = vmatprep.subr.bf16.mxu0 0
    %2911 = vmatpush1.bf16.msra.mxu0 0
    %2912 = vmatprep.subr.bf16.mxu0 0
    %2913 = vmatpush1.bf16.msra.mxu0 0
    %2914 = vmatprep.subr.bf16.mxu0 0
    %2915 = vmatpush1.bf16.msra.mxu0 0
    %2916 = vmatprep.subr.bf16.mxu0 0
    %2917 = vmatpush1.bf16.msra.mxu0 0
    %2918 = vmatprep.subr.bf16.mxu0 0
    %2919 = vmatpush1.bf16.msra.mxu0 0
    %2920 = vmatprep.subr.bf16.mxu0 0
    %2921 = vmatpush1.bf16.msra.mxu0 0
    %2922 = vmatprep.subr.bf16.mxu0 0
    %2923 = vmatpush1.bf16.msra.mxu0 0
    %2924 = vmatprep.subr.bf16.mxu0 0
    %2925 = vmatpush1.bf16.msra.mxu0 0
    %2926 = vmatprep.mubr.bf16.mxu0 0
    %2927 = vmatmul.mubr.bf16.gmra.mrb[0].mxu0 %v2736
    %v2928 = vpop.f32.mrb[0].mxu0
    %v2929 = vadd.f32 %v2718, %v2928
    %v2930 = vpop.f32.mrb[0].mxu0
    %v2931 = vpop.f32.mrb[0].mxu0
    %v2932 = vpop.f32.mrb[0].mxu0
    %2933 = vdwg.mxu0
    %v2934 = vpack.c.bf16 %v2773, %v2773
    %v2935 = vpack.c.bf16 %v2825, %v2825
    %v2936 = vpack.c.bf16 %v2877, %v2877
    %v2937 = vpack.c.bf16 %v2929, %v2929
    %v2946 = vlaneseq
    %v2947 = vshrl.u32 %v2946, 7
    %v2948 = vsub.s32 0, %v2947
    %v2949 = vrot.slane %v2645, %v2948
    %v2950 = vlaneseq
    %v2951 = vshrl.u32 %v2950, 7
    %v2952 = vsub.s32 0, %v2951
    %v2953 = vrot.slane %v2646, %v2952
    %v2954 = vlaneseq
    %v2955 = vshrl.u32 %v2954, 7
    %v2956 = vsub.s32 0, %v2955
    %v2957 = vrot.slane %v2647, %v2956
    %v2958 = vlaneseq
    %v2959 = vshrl.u32 %v2958, 7
    %v2960 = vsub.s32 0, %v2959
    %v2961 = vrot.slane %v2648, %v2960
    %v2962 = vlaneseq
    %v2963 = vshrl.u32 %v2962, 7
    %v2964 = vsub.s32 0, %v2963
    %v2965 = vrot.slane %v2649, %v2964
    %v2966 = vlaneseq
    %v2967 = vshrl.u32 %v2966, 7
    %v2968 = vsub.s32 0, %v2967
    %v2969 = vrot.slane %v2650, %v2968
    %v2970 = vlaneseq
    %v2971 = vshrl.u32 %v2970, 7
    %v2972 = vsub.s32 0, %v2971
    %v2973 = vrot.slane %v2651, %v2972
    %v2974 = vlaneseq
    %v2975 = vshrl.u32 %v2974, 7
    %v2976 = vsub.s32 0, %v2975
    %v2977 = vrot.slane %v2652, %v2976
    %v2990 = vunpack.c.l.b16 %v2613
    %v2991 = vunpack.c.l.b16 %v2614
    %v2992 = vunpack.c.l.b16 %v2615
    %v2993 = vunpack.c.l.b16 %v2616
    %v2994 = vpack.c.b16 %v2991, %v2990
    %v2995 = vpack.c.b16 %v2993, %v2992
    %v2999 = vsel %vm116, %v2592, 0
    %3001 = vmatprep.subr.bf16.mxu0 0
    %3002 = vmatpush1.bf16.msra.mxu0 %v2994
    %3003 = vmatprep.subr.bf16.mxu0 0
    %3004 = vmatpush1.bf16.msra.mxu0 %v2995
    %3005 = vmatprep.subr.bf16.mxu0 0
    %3006 = vmatpush1.bf16.msra.mxu0 0
    %3007 = vmatprep.subr.bf16.mxu0 0
    %3008 = vmatpush1.bf16.msra.mxu0 0
    %3009 = vmatprep.subr.bf16.mxu0 0
    %3010 = vmatpush1.bf16.msra.mxu0 0
    %3011 = vmatprep.subr.bf16.mxu0 0
    %3012 = vmatpush1.bf16.msra.mxu0 0
    %3013 = vmatprep.subr.bf16.mxu0 0
    %3014 = vmatpush1.bf16.msra.mxu0 0
    %3015 = vmatprep.subr.bf16.mxu0 0
    %3016 = vmatpush1.bf16.msra.mxu0 0
    %3017 = vmatprep.subr.bf16.mxu0 0
    %3018 = vmatpush1.bf16.msra.mxu0 0
    %3019 = vmatprep.subr.bf16.mxu0 0
    %3020 = vmatpush1.bf16.msra.mxu0 0
    %3021 = vmatprep.subr.bf16.mxu0 0
    %3022 = vmatpush1.bf16.msra.mxu0 0
    %3023 = vmatprep.subr.bf16.mxu0 0
    %3024 = vmatpush1.bf16.msra.mxu0 0
    %3025 = vmatprep.subr.bf16.mxu0 0
    %3026 = vmatpush1.bf16.msra.mxu0 0
    %3027 = vmatprep.subr.bf16.mxu0 0
    %3028 = vmatpush1.bf16.msra.mxu0 0
    %3029 = vmatprep.subr.bf16.mxu0 0
    %3030 = vmatpush1.bf16.msra.mxu0 0
    %3031 = vmatprep.subr.bf16.mxu0 0
    %3032 = vmatpush1.bf16.msra.mxu0 0
    %3033 = vmatprep.mubr.bf16.mxu0 0
    %3034 = vmatmul.mubr.bf16.gmra.mrb[0].mxu0 %v2999
    %v3035 = vpop.f32.mrb[0].mxu0
    %v3036 = vadd.f32 %v2949, %v3035
    %v3037 = vpop.f32.mrb[0].mxu0
    %v3038 = vpop.f32.mrb[0].mxu0
    %v3039 = vpop.f32.mrb[0].mxu0
    %3040 = vdwg.mxu0
    %v3045 = vunpack.c.l.b16 %v2617
    %v3046 = vunpack.c.l.b16 %v2618
    %v3047 = vunpack.c.l.b16 %v2619
    %v3048 = vunpack.c.l.b16 %v2620
    %v3049 = vpack.c.b16 %v3046, %v3045
    %v3050 = vpack.c.b16 %v3048, %v3047
    %3053 = vmatprep.subr.bf16.mxu0 0
    %3054 = vmatpush1.bf16.msra.mxu0 %v3049
    %3055 = vmatprep.subr.bf16.mxu0 0
    %3056 = vmatpush1.bf16.msra.mxu0 %v3050
    %3057 = vmatprep.subr.bf16.mxu0 0
    %3058 = vmatpush1.bf16.msra.mxu0 0
    %3059 = vmatprep.subr.bf16.mxu0 0
    %3060 = vmatpush1.bf16.msra.mxu0 0
    %3061 = vmatprep.subr.bf16.mxu0 0
    %3062 = vmatpush1.bf16.msra.mxu0 0
    %3063 = vmatprep.subr.bf16.mxu0 0
    %3064 = vmatpush1.bf16.msra.mxu0 0
    %3065 = vmatprep.subr.bf16.mxu0 0
    %3066 = vmatpush1.bf16.msra.mxu0 0
    %3067 = vmatprep.subr.bf16.mxu0 0
    %3068 = vmatpush1.bf16.msra.mxu0 0
    %3069 = vmatprep.subr.bf16.mxu0 0
    %3070 = vmatpush1.bf16.msra.mxu0 0
    %3071 = vmatprep.subr.bf16.mxu0 0
    %3072 = vmatpush1.bf16.msra.mxu0 0
    %3073 = vmatprep.subr.bf16.mxu0 0
    %3074 = vmatpush1.bf16.msra.mxu0 0
    %3075 = vmatprep.subr.bf16.mxu0 0
    %3076 = vmatpush1.bf16.msra.mxu0 0
    %3077 = vmatprep.subr.bf16.mxu0 0
    %3078 = vmatpush1.bf16.msra.mxu0 0
    %3079 = vmatprep.subr.bf16.mxu0 0
    %3080 = vmatpush1.bf16.msra.mxu0 0
    %3081 = vmatprep.subr.bf16.mxu0 0
    %3082 = vmatpush1.bf16.msra.mxu0 0
    %3083 = vmatprep.subr.bf16.mxu0 0
    %3084 = vmatpush1.bf16.msra.mxu0 0
    %3085 = vmatprep.mubr.bf16.mxu0 0
    %3086 = vmatmul.mubr.bf16.gmra.mrb[0].mxu0 %v2999
    %v3087 = vpop.f32.mrb[0].mxu0
    %v3088 = vadd.f32 %v2953, %v3087
    %v3089 = vpop.f32.mrb[0].mxu0
    %v3090 = vpop.f32.mrb[0].mxu0
    %v3091 = vpop.f32.mrb[0].mxu0
    %3092 = vdwg.mxu0
    %v3097 = vunpack.c.l.b16 %v2621
    %v3098 = vunpack.c.l.b16 %v2622
    %v3099 = vunpack.c.l.b16 %v2623
    %v3100 = vunpack.c.l.b16 %v2624
    %v3101 = vpack.c.b16 %v3098, %v3097
    %v3102 = vpack.c.b16 %v3100, %v3099
    %3105 = vmatprep.subr.bf16.mxu0 0
    %3106 = vmatpush1.bf16.msra.mxu0 %v3101
    %3107 = vmatprep.subr.bf16.mxu0 0
    %3108 = vmatpush1.bf16.msra.mxu0 %v3102
    %3109 = vmatprep.subr.bf16.mxu0 0
    %3110 = vmatpush1.bf16.msra.mxu0 0
    %3111 = vmatprep.subr.bf16.mxu0 0
    %3112 = vmatpush1.bf16.msra.mxu0 0
    %3113 = vmatprep.subr.bf16.mxu0 0
    %3114 = vmatpush1.bf16.msra.mxu0 0
    %3115 = vmatprep.subr.bf16.mxu0 0
    %3116 = vmatpush1.bf16.msra.mxu0 0
    %3117 = vmatprep.subr.bf16.mxu0 0
    %3118 = vmatpush1.bf16.msra.mxu0 0
    %3119 = vmatprep.subr.bf16.mxu0 0
    %3120 = vmatpush1.bf16.msra.mxu0 0
    %3121 = vmatprep.subr.bf16.mxu0 0
    %3122 = vmatpush1.bf16.msra.mxu0 0
    %3123 = vmatprep.subr.bf16.mxu0 0
    %3124 = vmatpush1.bf16.msra.mxu0 0
    %3125 = vmatprep.subr.bf16.mxu0 0
    %3126 = vmatpush1.bf16.msra.mxu0 0
    %3127 = vmatprep.subr.bf16.mxu0 0
    %3128 = vmatpush1.bf16.msra.mxu0 0
    %3129 = vmatprep.subr.bf16.mxu0 0
    %3130 = vmatpush1.bf16.msra.mxu0 0
    %3131 = vmatprep.subr.bf16.mxu0 0
    %3132 = vmatpush1.bf16.msra.mxu0 0
    %3133 = vmatprep.subr.bf16.mxu0 0
    %3134 = vmatpush1.bf16.msra.mxu0 0
    %3135 = vmatprep.subr.bf16.mxu0 0
    %3136 = vmatpush1.bf16.msra.mxu0 0
    %3137 = vmatprep.mubr.bf16.mxu0 0
    %3138 = vmatmul.mubr.bf16.gmra.mrb[0].mxu0 %v2999
    %v3139 = vpop.f32.mrb[0].mxu0
    %v3140 = vadd.f32 %v2957, %v3139
    %v3141 = vpop.f32.mrb[0].mxu0
    %v3142 = vpop.f32.mrb[0].mxu0
    %v3143 = vpop.f32.mrb[0].mxu0
    %3144 = vdwg.mxu0
    %v3149 = vunpack.c.l.b16 %v2625
    %v3150 = vunpack.c.l.b16 %v2626
    %v3151 = vunpack.c.l.b16 %v2627
    %v3152 = vunpack.c.l.b16 %v2628
    %v3153 = vpack.c.b16 %v3150, %v3149
    %v3154 = vpack.c.b16 %v3152, %v3151
    %3157 = vmatprep.subr.bf16.mxu0 0
    %3158 = vmatpush1.bf16.msra.mxu0 %v3153
    %3159 = vmatprep.subr.bf16.mxu0 0
    %3160 = vmatpush1.bf16.msra.mxu0 %v3154
    %3161 = vmatprep.subr.bf16.mxu0 0
    %3162 = vmatpush1.bf16.msra.mxu0 0
    %3163 = vmatprep.subr.bf16.mxu0 0
    %3164 = vmatpush1.bf16.msra.mxu0 0
    %3165 = vmatprep.subr.bf16.mxu0 0
    %3166 = vmatpush1.bf16.msra.mxu0 0
    %3167 = vmatprep.subr.bf16.mxu0 0
    %3168 = vmatpush1.bf16.msra.mxu0 0
    %3169 = vmatprep.subr.bf16.mxu0 0
    %3170 = vmatpush1.bf16.msra.mxu0 0
    %3171 = vmatprep.subr.bf16.mxu0 0
    %3172 = vmatpush1.bf16.msra.mxu0 0
    %3173 = vmatprep.subr.bf16.mxu0 0
    %3174 = vmatpush1.bf16.msra.mxu0 0
    %3175 = vmatprep.subr.bf16.mxu0 0
    %3176 = vmatpush1.bf16.msra.mxu0 0
    %3177 = vmatprep.subr.bf16.mxu0 0
    %3178 = vmatpush1.bf16.msra.mxu0 0
    %3179 = vmatprep.subr.bf16.mxu0 0
    %3180 = vmatpush1.bf16.msra.mxu0 0
    %3181 = vmatprep.subr.bf16.mxu0 0
    %3182 = vmatpush1.bf16.msra.mxu0 0
    %3183 = vmatprep.subr.bf16.mxu0 0
    %3184 = vmatpush1.bf16.msra.mxu0 0
    %3185 = vmatprep.subr.bf16.mxu0 0
    %3186 = vmatpush1.bf16.msra.mxu0 0
    %3187 = vmatprep.subr.bf16.mxu0 0
    %3188 = vmatpush1.bf16.msra.mxu0 0
    %3189 = vmatprep.mubr.bf16.mxu0 0
    %3190 = vmatmul.mubr.bf16.gmra.mrb[0].mxu0 %v2999
    %v3191 = vpop.f32.mrb[0].mxu0
    %v3192 = vadd.f32 %v2961, %v3191
    %v3193 = vpop.f32.mrb[0].mxu0
    %v3194 = vpop.f32.mrb[0].mxu0
    %v3195 = vpop.f32.mrb[0].mxu0
    %3196 = vdwg.mxu0
    %v3201 = vunpack.c.l.b16 %v2629
    %v3202 = vunpack.c.l.b16 %v2630
    %v3203 = vunpack.c.l.b16 %v2631
    %v3204 = vunpack.c.l.b16 %v2632
    %v3205 = vpack.c.b16 %v3202, %v3201
    %v3206 = vpack.c.b16 %v3204, %v3203
    %3209 = vmatprep.subr.bf16.mxu0 0
    %3210 = vmatpush1.bf16.msra.mxu0 %v3205
    %3211 = vmatprep.subr.bf16.mxu0 0
    %3212 = vmatpush1.bf16.msra.mxu0 %v3206
    %3213 = vmatprep.subr.bf16.mxu0 0
    %3214 = vmatpush1.bf16.msra.mxu0 0
    %3215 = vmatprep.subr.bf16.mxu0 0
    %3216 = vmatpush1.bf16.msra.mxu0 0
    %3217 = vmatprep.subr.bf16.mxu0 0
    %3218 = vmatpush1.bf16.msra.mxu0 0
    %3219 = vmatprep.subr.bf16.mxu0 0
    %3220 = vmatpush1.bf16.msra.mxu0 0
    %3221 = vmatprep.subr.bf16.mxu0 0
    %3222 = vmatpush1.bf16.msra.mxu0 0
    %3223 = vmatprep.subr.bf16.mxu0 0
    %3224 = vmatpush1.bf16.msra.mxu0 0
    %3225 = vmatprep.subr.bf16.mxu0 0
    %3226 = vmatpush1.bf16.msra.mxu0 0
    %3227 = vmatprep.subr.bf16.mxu0 0
    %3228 = vmatpush1.bf16.msra.mxu0 0
    %3229 = vmatprep.subr.bf16.mxu0 0
    %3230 = vmatpush1.bf16.msra.mxu0 0
    %3231 = vmatprep.subr.bf16.mxu0 0
    %3232 = vmatpush1.bf16.msra.mxu0 0
    %3233 = vmatprep.subr.bf16.mxu0 0
    %3234 = vmatpush1.bf16.msra.mxu0 0
    %3235 = vmatprep.subr.bf16.mxu0 0
    %3236 = vmatpush1.bf16.msra.mxu0 0
    %3237 = vmatprep.subr.bf16.mxu0 0
    %3238 = vmatpush1.bf16.msra.mxu0 0
    %3239 = vmatprep.subr.bf16.mxu0 0
    %3240 = vmatpush1.bf16.msra.mxu0 0
    %3241 = vmatprep.mubr.bf16.mxu0 0
    %3242 = vmatmul.mubr.bf16.gmra.mrb[0].mxu0 %v2999
    %v3243 = vpop.f32.mrb[0].mxu0
    %v3244 = vadd.f32 %v2965, %v3243
    %v3245 = vpop.f32.mrb[0].mxu0
    %v3246 = vpop.f32.mrb[0].mxu0
    %v3247 = vpop.f32.mrb[0].mxu0
    %3248 = vdwg.mxu0
    %v3253 = vunpack.c.l.b16 %v2633
    %v3254 = vunpack.c.l.b16 %v2634
    %v3255 = vunpack.c.l.b16 %v2635
    %v3256 = vunpack.c.l.b16 %v2636
    %v3257 = vpack.c.b16 %v3254, %v3253
    %v3258 = vpack.c.b16 %v3256, %v3255
    %3261 = vmatprep.subr.bf16.mxu0 0
    %3262 = vmatpush1.bf16.msra.mxu0 %v3257
    %3263 = vmatprep.subr.bf16.mxu0 0
    %3264 = vmatpush1.bf16.msra.mxu0 %v3258
    %3265 = vmatprep.subr.bf16.mxu0 0
    %3266 = vmatpush1.bf16.msra.mxu0 0
    %3267 = vmatprep.subr.bf16.mxu0 0
    %3268 = vmatpush1.bf16.msra.mxu0 0
    %3269 = vmatprep.subr.bf16.mxu0 0
    %3270 = vmatpush1.bf16.msra.mxu0 0
    %3271 = vmatprep.subr.bf16.mxu0 0
    %3272 = vmatpush1.bf16.msra.mxu0 0
    %3273 = vmatprep.subr.bf16.mxu0 0
    %3274 = vmatpush1.bf16.msra.mxu0 0
    %3275 = vmatprep.subr.bf16.mxu0 0
    %3276 = vmatpush1.bf16.msra.mxu0 0
    %3277 = vmatprep.subr.bf16.mxu0 0
    %3278 = vmatpush1.bf16.msra.mxu0 0
    %3279 = vmatprep.subr.bf16.mxu0 0
    %3280 = vmatpush1.bf16.msra.mxu0 0
    %3281 = vmatprep.subr.bf16.mxu0 0
    %3282 = vmatpush1.bf16.msra.mxu0 0
    %3283 = vmatprep.subr.bf16.mxu0 0
    %3284 = vmatpush1.bf16.msra.mxu0 0
    %3285 = vmatprep.subr.bf16.mxu0 0
    %3286 = vmatpush1.bf16.msra.mxu0 0
    %3287 = vmatprep.subr.bf16.mxu0 0
    %3288 = vmatpush1.bf16.msra.mxu0 0
    %3289 = vmatprep.subr.bf16.mxu0 0
    %3290 = vmatpush1.bf16.msra.mxu0 0
    %3291 = vmatprep.subr.bf16.mxu0 0
    %3292 = vmatpush1.bf16.msra.mxu0 0
    %3293 = vmatprep.mubr.bf16.mxu0 0
    %3294 = vmatmul.mubr.bf16.gmra.mrb[0].mxu0 %v2999
    %v3295 = vpop.f32.mrb[0].mxu0
    %v3296 = vadd.f32 %v2969, %v3295
    %v3297 = vpop.f32.mrb[0].mxu0
    %v3298 = vpop.f32.mrb[0].mxu0
    %v3299 = vpop.f32.mrb[0].mxu0
    %3300 = vdwg.mxu0
    %v3305 = vunpack.c.l.b16 %v2637
    %v3306 = vunpack.c.l.b16 %v2638
    %v3307 = vunpack.c.l.b16 %v2639
    %v3308 = vunpack.c.l.b16 %v2640
    %v3309 = vpack.c.b16 %v3306, %v3305
    %v3310 = vpack.c.b16 %v3308, %v3307
    %3313 = vmatprep.subr.bf16.mxu0 0
    %3314 = vmatpush1.bf16.msra.mxu0 %v3309
    %3315 = vmatprep.subr.bf16.mxu0 0
    %3316 = vmatpush1.bf16.msra.mxu0 %v3310
    %3317 = vmatprep.subr.bf16.mxu0 0
    %3318 = vmatpush1.bf16.msra.mxu0 0
    %3319 = vmatprep.subr.bf16.mxu0 0
    %3320 = vmatpush1.bf16.msra.mxu0 0
    %3321 = vmatprep.subr.bf16.mxu0 0
    %3322 = vmatpush1.bf16.msra.mxu0 0
    %3323 = vmatprep.subr.bf16.mxu0 0
    %3324 = vmatpush1.bf16.msra.mxu0 0
    %3325 = vmatprep.subr.bf16.mxu0 0
    %3326 = vmatpush1.bf16.msra.mxu0 0
    %3327 = vmatprep.subr.bf16.mxu0 0
    %3328 = vmatpush1.bf16.msra.mxu0 0
    %3329 = vmatprep.subr.bf16.mxu0 0
    %3330 = vmatpush1.bf16.msra.mxu0 0
    %3331 = vmatprep.subr.bf16.mxu0 0
    %3332 = vmatpush1.bf16.msra.mxu0 0
    %3333 = vmatprep.subr.bf16.mxu0 0
    %3334 = vmatpush1.bf16.msra.mxu0 0
    %3335 = vmatprep.subr.bf16.mxu0 0
    %3336 = vmatpush1.bf16.msra.mxu0 0
    %3337 = vmatprep.subr.bf16.mxu0 0
    %3338 = vmatpush1.bf16.msra.mxu0 0
    %3339 = vmatprep.subr.bf16.mxu0 0
    %3340 = vmatpush1.bf16.msra.mxu0 0
    %3341 = vmatprep.subr.bf16.mxu0 0
    %3342 = vmatpush1.bf16.msra.mxu0 0
    %3343 = vmatprep.subr.bf16.mxu0 0
    %3344 = vmatpush1.bf16.msra.mxu0 0
    %3345 = vmatprep.mubr.bf16.mxu0 0
    %3346 = vmatmul.mubr.bf16.gmra.mrb[0].mxu0 %v2999
    %v3347 = vpop.f32.mrb[0].mxu0
    %v3348 = vadd.f32 %v2973, %v3347
    %v3349 = vpop.f32.mrb[0].mxu0
    %v3350 = vpop.f32.mrb[0].mxu0
    %v3351 = vpop.f32.mrb[0].mxu0
    %3352 = vdwg.mxu0
    %v3357 = vunpack.c.l.b16 %v2641
    %v3358 = vunpack.c.l.b16 %v2642
    %v3359 = vunpack.c.l.b16 %v2643
    %v3360 = vunpack.c.l.b16 %v2644
    %v3361 = vpack.c.b16 %v3358, %v3357
    %v3362 = vpack.c.b16 %v3360, %v3359
    %3365 = vmatprep.subr.bf16.mxu0 0
    %3366 = vmatpush1.bf16.msra.mxu0 %v3361
    %3367 = vmatprep.subr.bf16.mxu0 0
    %3368 = vmatpush1.bf16.msra.mxu0 %v3362
    %3369 = vmatprep.subr.bf16.mxu0 0
    %3370 = vmatpush1.bf16.msra.mxu0 0
    %3371 = vmatprep.subr.bf16.mxu0 0
    %3372 = vmatpush1.bf16.msra.mxu0 0
    %3373 = vmatprep.subr.bf16.mxu0 0
    %3374 = vmatpush1.bf16.msra.mxu0 0
    %3375 = vmatprep.subr.bf16.mxu0 0
    %3376 = vmatpush1.bf16.msra.mxu0 0
    %3377 = vmatprep.subr.bf16.mxu0 0
    %3378 = vmatpush1.bf16.msra.mxu0 0
    %3379 = vmatprep.subr.bf16.mxu0 0
    %3380 = vmatpush1.bf16.msra.mxu0 0
    %3381 = vmatprep.subr.bf16.mxu0 0
    %3382 = vmatpush1.bf16.msra.mxu0 0
    %3383 = vmatprep.subr.bf16.mxu0 0
    %3384 = vmatpush1.bf16.msra.mxu0 0
    %3385 = vmatprep.subr.bf16.mxu0 0
    %3386 = vmatpush1.bf16.msra.mxu0 0
    %3387 = vmatprep.subr.bf16.mxu0 0
    %3388 = vmatpush1.bf16.msra.mxu0 0
    %3389 = vmatprep.subr.bf16.mxu0 0
    %3390 = vmatpush1.bf16.msra.mxu0 0
    %3391 = vmatprep.subr.bf16.mxu0 0
    %3392 = vmatpush1.bf16.msra.mxu0 0
    %3393 = vmatprep.subr.bf16.mxu0 0
    %3394 = vmatpush1.bf16.msra.mxu0 0
    %3395 = vmatprep.subr.bf16.mxu0 0
    %3396 = vmatpush1.bf16.msra.mxu0 0
    %3397 = vmatprep.mubr.bf16.mxu0 0
    %3398 = vmatmul.mubr.bf16.gmra.mrb[0].mxu0 %v2999
    %v3399 = vpop.f32.mrb[0].mxu0
    %v3400 = vadd.f32 %v2977, %v3399
    %v3401 = vpop.f32.mrb[0].mxu0
    %v3402 = vpop.f32.mrb[0].mxu0
    %v3403 = vpop.f32.mrb[0].mxu0
    %3404 = vdwg.mxu0
    %v3405 = vpack.c.bf16 %v3036, %v3036
    %v3406 = vpack.c.bf16 %v3088, %v3088
    %v3407 = vpack.c.bf16 %v3140, %v3140
    %v3408 = vpack.c.bf16 %v3192, %v3192
    %v3409 = vpack.c.bf16 %v3244, %v3244
    %v3410 = vpack.c.bf16 %v3296, %v3296
    %v3411 = vpack.c.bf16 %v3348, %v3348
    %v3412 = vpack.c.bf16 %v3400, %v3400
    %v3414 = vsel %vm871, %v2934, 0
    %v3417 = vsel %vm871, %v3405, 0
    %3419 = vmatprep.subr.bf16.mxu0 0
    %3420 = vmatpush1.bf16.xpose.msra.mxu0 %v3417
    %3421 = vmatprep.subr.bf16.mxu0 0
    %3422 = vmatpush1.bf16.xpose.msra.mxu0 0
    %3423 = vmatprep.subr.bf16.mxu0 0
    %3424 = vmatpush1.bf16.xpose.msra.mxu0 0
    %3425 = vmatprep.subr.bf16.mxu0 0
    %3426 = vmatpush1.bf16.xpose.msra.mxu0 0
    %3427 = vmatprep.subr.bf16.mxu0 0
    %3428 = vmatpush1.bf16.xpose.msra.mxu0 0
    %3429 = vmatprep.subr.bf16.mxu0 0
    %3430 = vmatpush1.bf16.xpose.msra.mxu0 0
    %3431 = vmatprep.subr.bf16.mxu0 0
    %3432 = vmatpush1.bf16.xpose.msra.mxu0 0
    %3433 = vmatprep.subr.bf16.mxu0 0
    %3434 = vmatpush1.bf16.xpose.msra.mxu0 0
    %3435 = vmatprep.subr.bf16.mxu0 0
    %3436 = vmatpush1.bf16.xpose.msra.mxu0 0
    %3437 = vmatprep.subr.bf16.mxu0 0
    %3438 = vmatpush1.bf16.xpose.msra.mxu0 0
    %3439 = vmatprep.subr.bf16.mxu0 0
    %3440 = vmatpush1.bf16.xpose.msra.mxu0 0
    %3441 = vmatprep.subr.bf16.mxu0 0
    %3442 = vmatpush1.bf16.xpose.msra.mxu0 0
    %3443 = vmatprep.subr.bf16.mxu0 0
    %3444 = vmatpush1.bf16.xpose.msra.mxu0 0
    %3445 = vmatprep.subr.bf16.mxu0 0
    %3446 = vmatpush1.bf16.xpose.msra.mxu0 0
    %3447 = vmatprep.subr.bf16.mxu0 0
    %3448 = vmatpush1.bf16.xpose.msra.mxu0 0
    %3449 = vmatprep.subr.bf16.mxu0 0
    %3450 = vmatpush1.bf16.xpose.msra.mxu0 0
    %3451 = vmatprep.mubr.bf16.mxu0 0
    %3452 = vmatmul.mubr.bf16.gmra.mrb[0].mxu0 %v3414
    %v3453 = vpop.f32.mrb[0].mxu0
    %v3454 = vadd.f32 0.0, %v3453
    %v3455 = vpop.f32.mrb[0].mxu0
    %v3456 = vpop.f32.mrb[0].mxu0
    %v3457 = vpop.f32.mrb[0].mxu0
    %3458 = vdwg.mxu0
    %v3460 = vsel %vm871, %v2935, 0
    %v3463 = vsel %vm871, %v3406, 0
    %3465 = vmatprep.subr.bf16.mxu0 0
    %3466 = vmatpush1.bf16.xpose.msra.mxu0 %v3463
    %3467 = vmatprep.subr.bf16.mxu0 0
    %3468 = vmatpush1.bf16.xpose.msra.mxu0 0
    %3469 = vmatprep.subr.bf16.mxu0 0
    %3470 = vmatpush1.bf16.xpose.msra.mxu0 0
    %3471 = vmatprep.subr.bf16.mxu0 0
    %3472 = vmatpush1.bf16.xpose.msra.mxu0 0
    %3473 = vmatprep.subr.bf16.mxu0 0
    %3474 = vmatpush1.bf16.xpose.msra.mxu0 0
    %3475 = vmatprep.subr.bf16.mxu0 0
    %3476 = vmatpush1.bf16.xpose.msra.mxu0 0
    %3477 = vmatprep.subr.bf16.mxu0 0
    %3478 = vmatpush1.bf16.xpose.msra.mxu0 0
    %3479 = vmatprep.subr.bf16.mxu0 0
    %3480 = vmatpush1.bf16.xpose.msra.mxu0 0
    %3481 = vmatprep.subr.bf16.mxu0 0
    %3482 = vmatpush1.bf16.xpose.msra.mxu0 0
    %3483 = vmatprep.subr.bf16.mxu0 0
    %3484 = vmatpush1.bf16.xpose.msra.mxu0 0
    %3485 = vmatprep.subr.bf16.mxu0 0
    %3486 = vmatpush1.bf16.xpose.msra.mxu0 0
    %3487 = vmatprep.subr.bf16.mxu0 0
    %3488 = vmatpush1.bf16.xpose.msra.mxu0 0
    %3489 = vmatprep.subr.bf16.mxu0 0
    %3490 = vmatpush1.bf16.xpose.msra.mxu0 0
    %3491 = vmatprep.subr.bf16.mxu0 0
    %3492 = vmatpush1.bf16.xpose.msra.mxu0 0
    %3493 = vmatprep.subr.bf16.mxu0 0
    %3494 = vmatpush1.bf16.xpose.msra.mxu0 0
    %3495 = vmatprep.subr.bf16.mxu0 0
    %3496 = vmatpush1.bf16.xpose.msra.mxu0 0
    %3497 = vmatprep.mubr.bf16.mxu0 0
    %3498 = vmatmul.mubr.bf16.gmra.mrb[0].mxu0 %v3460
    %v3499 = vpop.f32.mrb[0].mxu0
    %v3500 = vadd.f32 0.0, %v3499
    %v3501 = vpop.f32.mrb[0].mxu0
    %v3502 = vpop.f32.mrb[0].mxu0
    %v3503 = vpop.f32.mrb[0].mxu0
    %3504 = vdwg.mxu0
    %v3506 = vsel %vm871, %v2936, 0
    %v3509 = vsel %vm871, %v3407, 0
    %3511 = vmatprep.subr.bf16.mxu0 0
    %3512 = vmatpush1.bf16.xpose.msra.mxu0 %v3509
    %3513 = vmatprep.subr.bf16.mxu0 0
    %3514 = vmatpush1.bf16.xpose.msra.mxu0 0
    %3515 = vmatprep.subr.bf16.mxu0 0
    %3516 = vmatpush1.bf16.xpose.msra.mxu0 0
    %3517 = vmatprep.subr.bf16.mxu0 0
    %3518 = vmatpush1.bf16.xpose.msra.mxu0 0
    %3519 = vmatprep.subr.bf16.mxu0 0
    %3520 = vmatpush1.bf16.xpose.msra.mxu0 0
    %3521 = vmatprep.subr.bf16.mxu0 0
    %3522 = vmatpush1.bf16.xpose.msra.mxu0 0
    %3523 = vmatprep.subr.bf16.mxu0 0
    %3524 = vmatpush1.bf16.xpose.msra.mxu0 0
    %3525 = vmatprep.subr.bf16.mxu0 0
    %3526 = vmatpush1.bf16.xpose.msra.mxu0 0
    %3527 = vmatprep.subr.bf16.mxu0 0
    %3528 = vmatpush1.bf16.xpose.msra.mxu0 0
    %3529 = vmatprep.subr.bf16.mxu0 0
    %3530 = vmatpush1.bf16.xpose.msra.mxu0 0
    %3531 = vmatprep.subr.bf16.mxu0 0
    %3532 = vmatpush1.bf16.xpose.msra.mxu0 0
    %3533 = vmatprep.subr.bf16.mxu0 0
    %3534 = vmatpush1.bf16.xpose.msra.mxu0 0
    %3535 = vmatprep.subr.bf16.mxu0 0
    %3536 = vmatpush1.bf16.xpose.msra.mxu0 0
    %3537 = vmatprep.subr.bf16.mxu0 0
    %3538 = vmatpush1.bf16.xpose.msra.mxu0 0
    %3539 = vmatprep.subr.bf16.mxu0 0
    %3540 = vmatpush1.bf16.xpose.msra.mxu0 0
    %3541 = vmatprep.subr.bf16.mxu0 0
    %3542 = vmatpush1.bf16.xpose.msra.mxu0 0
    %3543 = vmatprep.mubr.bf16.mxu0 0
    %3544 = vmatmul.mubr.bf16.gmra.mrb[0].mxu0 %v3506
    %v3545 = vpop.f32.mrb[0].mxu0
    %v3546 = vadd.f32 0.0, %v3545
    %v3547 = vpop.f32.mrb[0].mxu0
    %v3548 = vpop.f32.mrb[0].mxu0
    %v3549 = vpop.f32.mrb[0].mxu0
    %3550 = vdwg.mxu0
    %v3552 = vsel %vm871, %v2937, 0
    %v3555 = vsel %vm871, %v3408, 0
    %3557 = vmatprep.subr.bf16.mxu0 0
    %3558 = vmatpush1.bf16.xpose.msra.mxu0 %v3555
    %3559 = vmatprep.subr.bf16.mxu0 0
    %3560 = vmatpush1.bf16.xpose.msra.mxu0 0
    %3561 = vmatprep.subr.bf16.mxu0 0
    %3562 = vmatpush1.bf16.xpose.msra.mxu0 0
    %3563 = vmatprep.subr.bf16.mxu0 0
    %3564 = vmatpush1.bf16.xpose.msra.mxu0 0
    %3565 = vmatprep.subr.bf16.mxu0 0
    %3566 = vmatpush1.bf16.xpose.msra.mxu0 0
    %3567 = vmatprep.subr.bf16.mxu0 0
    %3568 = vmatpush1.bf16.xpose.msra.mxu0 0
    %3569 = vmatprep.subr.bf16.mxu0 0
    %3570 = vmatpush1.bf16.xpose.msra.mxu0 0
    %3571 = vmatprep.subr.bf16.mxu0 0
    %3572 = vmatpush1.bf16.xpose.msra.mxu0 0
    %3573 = vmatprep.subr.bf16.mxu0 0
    %3574 = vmatpush1.bf16.xpose.msra.mxu0 0
    %3575 = vmatprep.subr.bf16.mxu0 0
    %3576 = vmatpush1.bf16.xpose.msra.mxu0 0
    %3577 = vmatprep.subr.bf16.mxu0 0
    %3578 = vmatpush1.bf16.xpose.msra.mxu0 0
    %3579 = vmatprep.subr.bf16.mxu0 0
    %3580 = vmatpush1.bf16.xpose.msra.mxu0 0
    %3581 = vmatprep.subr.bf16.mxu0 0
    %3582 = vmatpush1.bf16.xpose.msra.mxu0 0
    %3583 = vmatprep.subr.bf16.mxu0 0
    %3584 = vmatpush1.bf16.xpose.msra.mxu0 0
    %3585 = vmatprep.subr.bf16.mxu0 0
    %3586 = vmatpush1.bf16.xpose.msra.mxu0 0
    %3587 = vmatprep.subr.bf16.mxu0 0
    %3588 = vmatpush1.bf16.xpose.msra.mxu0 0
    %3589 = vmatprep.mubr.bf16.mxu0 0
    %3590 = vmatmul.mubr.bf16.gmra.mrb[0].mxu0 %v3552
    %v3591 = vpop.f32.mrb[0].mxu0
    %v3592 = vadd.f32 0.0, %v3591
    %v3593 = vpop.f32.mrb[0].mxu0
    %v3594 = vpop.f32.mrb[0].mxu0
    %v3595 = vpop.f32.mrb[0].mxu0
    %3596 = vdwg.mxu0
    %v3597 = vsel %vm871, %v3454, -inf
    %3598 = vmax.xlane.f32.xlu0 %v3597
    %v3599 = vpop.xlane.xlu0 %3598
    %v3600 = vsel %vm871, %v3500, -inf
    %3601 = vmax.xlane.f32.xlu0 %v3600
    %v3602 = vpop.xlane.xlu0 %3601
    %v3603 = vsel %vm871, %v3546, -inf
    %3604 = vmax.xlane.f32.xlu0 %v3603
    %v3605 = vpop.xlane.xlu0 %3604
    %v3606 = vsel %vm871, %v3592, -inf
    %3607 = vmax.xlane.f32.xlu0 %v3606
    %v3608 = vpop.xlane.xlu0 %3607
    %v3609 = vsub.f32 %v3454, %v3599
    %v3610 = vsub.f32 %v3500, %v3602
    %v3611 = vsub.f32 %v3546, %v3605
    %v3612 = vsub.f32 %v3592, %v3608
    %v3613 = vmul.f32 %v3609, 1.442695
    %v3614 = vpow.pop %v3613
    %v3615 = vmul.f32 %v3610, 1.442695
    %v3616 = vpow.pop %v3615
    %v3617 = vmul.f32 %v3611, 1.442695
    %v3618 = vpow.pop %v3617
    %v3619 = vmul.f32 %v3612, 1.442695
    %v3620 = vpow.pop %v3619
    %v3621 = vsel %vm871, %v3614, 0.0
    %3622 = vadd.xlane.f32.xlu0 %v3621
    %v3623 = vpop.xlane.xlu0 %3622
    %v3624 = vsel %vm871, %v3616, 0.0
    %3625 = vadd.xlane.f32.xlu0 %v3624
    %v3626 = vpop.xlane.xlu0 %3625
    %v3627 = vsel %vm871, %v3618, 0.0
    %3628 = vadd.xlane.f32.xlu0 %v3627
    %v3629 = vpop.xlane.xlu0 %3628
    %v3630 = vsel %vm871, %v3620, 0.0
    %3631 = vadd.xlane.f32.xlu0 %v3630
    %v3632 = vpop.xlane.xlu0 %3631
    %v3633 = vrcp.pop %v3623
    %v3634 = vrcp.pop %v3626
    %v3635 = vrcp.pop %v3629
    %v3636 = vrcp.pop %v3632
    %v3637 = vmul.f32 %v3614, %v3633
    %v3638 = vmul.f32 %v3616, %v3634
    %v3639 = vmul.f32 %v3618, %v3635
    %v3640 = vmul.f32 %v3620, %v3636
    %v3641 = vpack.c.bf16 %v3637, %v3637
    %v3642 = vpack.c.bf16 %v3638, %v3638
    %v3643 = vpack.c.bf16 %v3639, %v3639
    %v3644 = vpack.c.bf16 %v3640, %v3640
    %v3646 = vsel %vm871, %v3641, 0
    %v3649 = vsel %vm1107, %v3409, 0
    %3651 = vmatprep.subr.bf16.mxu0 0
    %3652 = vmatpush1.bf16.msra.mxu0 %v3649
    %3653 = vmatprep.subr.bf16.mxu0 0
    %3654 = vmatpush1.bf16.msra.mxu0 0
    %3655 = vmatprep.subr.bf16.mxu0 0
    %3656 = vmatpush1.bf16.msra.mxu0 0
    %3657 = vmatprep.subr.bf16.mxu0 0
    %3658 = vmatpush1.bf16.msra.mxu0 0
    %3659 = vmatprep.subr.bf16.mxu0 0
    %3660 = vmatpush1.bf16.msra.mxu0 0
    %3661 = vmatprep.subr.bf16.mxu0 0
    %3662 = vmatpush1.bf16.msra.mxu0 0
    %3663 = vmatprep.subr.bf16.mxu0 0
    %3664 = vmatpush1.bf16.msra.mxu0 0
    %3665 = vmatprep.subr.bf16.mxu0 0
    %3666 = vmatpush1.bf16.msra.mxu0 0
    %3667 = vmatprep.subr.bf16.mxu0 0
    %3668 = vmatpush1.bf16.msra.mxu0 0
    %3669 = vmatprep.subr.bf16.mxu0 0
    %3670 = vmatpush1.bf16.msra.mxu0 0
    %3671 = vmatprep.subr.bf16.mxu0 0
    %3672 = vmatpush1.bf16.msra.mxu0 0
    %3673 = vmatprep.subr.bf16.mxu0 0
    %3674 = vmatpush1.bf16.msra.mxu0 0
    %3675 = vmatprep.subr.bf16.mxu0 0
    %3676 = vmatpush1.bf16.msra.mxu0 0
    %3677 = vmatprep.subr.bf16.mxu0 0
    %3678 = vmatpush1.bf16.msra.mxu0 0
    %3679 = vmatprep.subr.bf16.mxu0 0
    %3680 = vmatpush1.bf16.msra.mxu0 0
    %3681 = vmatprep.subr.bf16.mxu0 0
    %3682 = vmatpush1.bf16.msra.mxu0 0
    %3683 = vmatprep.mubr.bf16.mxu0 0
    %3684 = vmatmul.mubr.bf16.gmra.mrb[0].mxu0 %v3646
    %v3685 = vpop.f32.mrb[0].mxu0
    %v3686 = vadd.f32 0.0, %v3685
    %v3687 = vpop.f32.mrb[0].mxu0
    %v3688 = vpop.f32.mrb[0].mxu0
    %v3689 = vpop.f32.mrb[0].mxu0
    %3690 = vdwg.mxu0
    %v3692 = vsel %vm871, %v3642, 0
    %v3695 = vsel %vm1107, %v3410, 0
    %3697 = vmatprep.subr.bf16.mxu0 0
    %3698 = vmatpush1.bf16.msra.mxu0 %v3695
    %3699 = vmatprep.subr.bf16.mxu0 0
    %3700 = vmatpush1.bf16.msra.mxu0 0
    %3701 = vmatprep.subr.bf16.mxu0 0
    %3702 = vmatpush1.bf16.msra.mxu0 0
    %3703 = vmatprep.subr.bf16.mxu0 0
    %3704 = vmatpush1.bf16.msra.mxu0 0
    %3705 = vmatprep.subr.bf16.mxu0 0
    %3706 = vmatpush1.bf16.msra.mxu0 0
    %3707 = vmatprep.subr.bf16.mxu0 0
    %3708 = vmatpush1.bf16.msra.mxu0 0
    %3709 = vmatprep.subr.bf16.mxu0 0
    %3710 = vmatpush1.bf16.msra.mxu0 0
    %3711 = vmatprep.subr.bf16.mxu0 0
    %3712 = vmatpush1.bf16.msra.mxu0 0
    %3713 = vmatprep.subr.bf16.mxu0 0
    %3714 = vmatpush1.bf16.msra.mxu0 0
    %3715 = vmatprep.subr.bf16.mxu0 0
    %3716 = vmatpush1.bf16.msra.mxu0 0
    %3717 = vmatprep.subr.bf16.mxu0 0
    %3718 = vmatpush1.bf16.msra.mxu0 0
    %3719 = vmatprep.subr.bf16.mxu0 0
    %3720 = vmatpush1.bf16.msra.mxu0 0
    %3721 = vmatprep.subr.bf16.mxu0 0
    %3722 = vmatpush1.bf16.msra.mxu0 0
    %3723 = vmatprep.subr.bf16.mxu0 0
    %3724 = vmatpush1.bf16.msra.mxu0 0
    %3725 = vmatprep.subr.bf16.mxu0 0
    %3726 = vmatpush1.bf16.msra.mxu0 0
    %3727 = vmatprep.subr.bf16.mxu0 0
    %3728 = vmatpush1.bf16.msra.mxu0 0
    %3729 = vmatprep.mubr.bf16.mxu0 0
    %3730 = vmatmul.mubr.bf16.gmra.mrb[0].mxu0 %v3692
    %v3731 = vpop.f32.mrb[0].mxu0
    %v3732 = vadd.f32 0.0, %v3731
    %v3733 = vpop.f32.mrb[0].mxu0
    %v3734 = vpop.f32.mrb[0].mxu0
    %v3735 = vpop.f32.mrb[0].mxu0
    %3736 = vdwg.mxu0
    %v3738 = vsel %vm871, %v3643, 0
    %v3741 = vsel %vm1107, %v3411, 0
    %3743 = vmatprep.subr.bf16.mxu0 0
    %3744 = vmatpush1.bf16.msra.mxu0 %v3741
    %3745 = vmatprep.subr.bf16.mxu0 0
    %3746 = vmatpush1.bf16.msra.mxu0 0
    %3747 = vmatprep.subr.bf16.mxu0 0
    %3748 = vmatpush1.bf16.msra.mxu0 0
    %3749 = vmatprep.subr.bf16.mxu0 0
    %3750 = vmatpush1.bf16.msra.mxu0 0
    %3751 = vmatprep.subr.bf16.mxu0 0
    %3752 = vmatpush1.bf16.msra.mxu0 0
    %3753 = vmatprep.subr.bf16.mxu0 0
    %3754 = vmatpush1.bf16.msra.mxu0 0
    %3755 = vmatprep.subr.bf16.mxu0 0
    %3756 = vmatpush1.bf16.msra.mxu0 0
    %3757 = vmatprep.subr.bf16.mxu0 0
    %3758 = vmatpush1.bf16.msra.mxu0 0
    %3759 = vmatprep.subr.bf16.mxu0 0
    %3760 = vmatpush1.bf16.msra.mxu0 0
    %3761 = vmatprep.subr.bf16.mxu0 0
    %3762 = vmatpush1.bf16.msra.mxu0 0
    %3763 = vmatprep.subr.bf16.mxu0 0
    %3764 = vmatpush1.bf16.msra.mxu0 0
    %3765 = vmatprep.subr.bf16.mxu0 0
    %3766 = vmatpush1.bf16.msra.mxu0 0
    %3767 = vmatprep.subr.bf16.mxu0 0
    %3768 = vmatpush1.bf16.msra.mxu0 0
    %3769 = vmatprep.subr.bf16.mxu0 0
    %3770 = vmatpush1.bf16.msra.mxu0 0
    %3771 = vmatprep.subr.bf16.mxu0 0
    %3772 = vmatpush1.bf16.msra.mxu0 0
    %3773 = vmatprep.subr.bf16.mxu0 0
    %3774 = vmatpush1.bf16.msra.mxu0 0
    %3775 = vmatprep.mubr.bf16.mxu0 0
    %3776 = vmatmul.mubr.bf16.gmra.mrb[0].mxu0 %v3738
    %v3777 = vpop.f32.mrb[0].mxu0
    %v3778 = vadd.f32 0.0, %v3777
    %v3779 = vpop.f32.mrb[0].mxu0
    %v3780 = vpop.f32.mrb[0].mxu0
    %v3781 = vpop.f32.mrb[0].mxu0
    %3782 = vdwg.mxu0
    %v3784 = vsel %vm871, %v3644, 0
    %v3787 = vsel %vm1107, %v3412, 0
    %3789 = vmatprep.subr.bf16.mxu0 0
    %3790 = vmatpush1.bf16.msra.mxu0 %v3787
    %3791 = vmatprep.subr.bf16.mxu0 0
    %3792 = vmatpush1.bf16.msra.mxu0 0
    %3793 = vmatprep.subr.bf16.mxu0 0
    %3794 = vmatpush1.bf16.msra.mxu0 0
    %3795 = vmatprep.subr.bf16.mxu0 0
    %3796 = vmatpush1.bf16.msra.mxu0 0
    %3797 = vmatprep.subr.bf16.mxu0 0
    %3798 = vmatpush1.bf16.msra.mxu0 0
    %3799 = vmatprep.subr.bf16.mxu0 0
    %3800 = vmatpush1.bf16.msra.mxu0 0
    %3801 = vmatprep.subr.bf16.mxu0 0
    %3802 = vmatpush1.bf16.msra.mxu0 0
    %3803 = vmatprep.subr.bf16.mxu0 0
    %3804 = vmatpush1.bf16.msra.mxu0 0
    %3805 = vmatprep.subr.bf16.mxu0 0
    %3806 = vmatpush1.bf16.msra.mxu0 0
    %3807 = vmatprep.subr.bf16.mxu0 0
    %3808 = vmatpush1.bf16.msra.mxu0 0
    %3809 = vmatprep.subr.bf16.mxu0 0
    %3810 = vmatpush1.bf16.msra.mxu0 0
    %3811 = vmatprep.subr.bf16.mxu0 0
    %3812 = vmatpush1.bf16.msra.mxu0 0
    %3813 = vmatprep.subr.bf16.mxu0 0
    %3814 = vmatpush1.bf16.msra.mxu0 0
    %3815 = vmatprep.subr.bf16.mxu0 0
    %3816 = vmatpush1.bf16.msra.mxu0 0
    %3817 = vmatprep.subr.bf16.mxu0 0
    %3818 = vmatpush1.bf16.msra.mxu0 0
    %3819 = vmatprep.subr.bf16.mxu0 0
    %3820 = vmatpush1.bf16.msra.mxu0 0
    %3821 = vmatprep.mubr.bf16.mxu0 0
    %3822 = vmatmul.mubr.bf16.gmra.mrb[0].mxu0 %v3784
    %v3823 = vpop.f32.mrb[0].mxu0
    %v3824 = vadd.f32 0.0, %v3823
    %v3825 = vpop.f32.mrb[0].mxu0
    %v3826 = vpop.f32.mrb[0].mxu0
    %v3827 = vpop.f32.mrb[0].mxu0
    %3828 = vdwg.mxu0
    %v3829 = vpack.c.bf16 %v3686, %v3686
    %v3830 = vpack.c.bf16 %v3732, %v3732
    %v3831 = vpack.c.bf16 %v3778, %v3778
    %v3832 = vpack.c.bf16 %v3824, %v3824
    %v3834 = vsel %vm871, %v3829, 0
    %v3837 = vsel %vm1107, %v2653, 0
    %3839 = vmatprep.subr.bf16.mxu0 0
    %3840 = vmatpush1.bf16.msra.mxu0 %v3837
    %3841 = vmatprep.subr.bf16.mxu0 0
    %3842 = vmatpush1.bf16.msra.mxu0 0
    %3843 = vmatprep.subr.bf16.mxu0 0
    %3844 = vmatpush1.bf16.msra.mxu0 0
    %3845 = vmatprep.subr.bf16.mxu0 0
    %3846 = vmatpush1.bf16.msra.mxu0 0
    %3847 = vmatprep.subr.bf16.mxu0 0
    %3848 = vmatpush1.bf16.msra.mxu0 0
    %3849 = vmatprep.subr.bf16.mxu0 0
    %3850 = vmatpush1.bf16.msra.mxu0 0
    %3851 = vmatprep.subr.bf16.mxu0 0
    %3852 = vmatpush1.bf16.msra.mxu0 0
    %3853 = vmatprep.subr.bf16.mxu0 0
    %3854 = vmatpush1.bf16.msra.mxu0 0
    %3855 = vmatprep.subr.bf16.mxu0 0
    %3856 = vmatpush1.bf16.msra.mxu0 0
    %3857 = vmatprep.subr.bf16.mxu0 0
    %3858 = vmatpush1.bf16.msra.mxu0 0
    %3859 = vmatprep.subr.bf16.mxu0 0
    %3860 = vmatpush1.bf16.msra.mxu0 0
    %3861 = vmatprep.subr.bf16.mxu0 0
    %3862 = vmatpush1.bf16.msra.mxu0 0
    %3863 = vmatprep.subr.bf16.mxu0 0
    %3864 = vmatpush1.bf16.msra.mxu0 0
    %3865 = vmatprep.subr.bf16.mxu0 0
    %3866 = vmatpush1.bf16.msra.mxu0 0
    %3867 = vmatprep.subr.bf16.mxu0 0
    %3868 = vmatpush1.bf16.msra.mxu0 0
    %3869 = vmatprep.subr.bf16.mxu0 0
    %3870 = vmatpush1.bf16.msra.mxu0 0
    %3871 = vmatprep.mubr.bf16.mxu0 0
    %3872 = vmatmul.mubr.bf16.gmra.mrb[0].mxu0 %v3834
    %v3873 = vpop.f32.mrb[0].mxu0
    %v3874 = vadd.f32 0.0, %v3873
    %v3875 = vpop.f32.mrb[0].mxu0
    %v3876 = vpop.f32.mrb[0].mxu0
    %v3877 = vpop.f32.mrb[0].mxu0
    %3878 = vdwg.mxu0
    %v3880 = vsel %vm871, %v3830, 0
    %v3883 = vsel %vm1107, %v2654, 0
    %3885 = vmatprep.subr.bf16.mxu0 0
    %3886 = vmatpush1.bf16.msra.mxu0 %v3883
    %3887 = vmatprep.subr.bf16.mxu0 0
    %3888 = vmatpush1.bf16.msra.mxu0 0
    %3889 = vmatprep.subr.bf16.mxu0 0
    %3890 = vmatpush1.bf16.msra.mxu0 0
    %3891 = vmatprep.subr.bf16.mxu0 0
    %3892 = vmatpush1.bf16.msra.mxu0 0
    %3893 = vmatprep.subr.bf16.mxu0 0
    %3894 = vmatpush1.bf16.msra.mxu0 0
    %3895 = vmatprep.subr.bf16.mxu0 0
    %3896 = vmatpush1.bf16.msra.mxu0 0
    %3897 = vmatprep.subr.bf16.mxu0 0
    %3898 = vmatpush1.bf16.msra.mxu0 0
    %3899 = vmatprep.subr.bf16.mxu0 0
    %3900 = vmatpush1.bf16.msra.mxu0 0
    %3901 = vmatprep.subr.bf16.mxu0 0
    %3902 = vmatpush1.bf16.msra.mxu0 0
    %3903 = vmatprep.subr.bf16.mxu0 0
    %3904 = vmatpush1.bf16.msra.mxu0 0
    %3905 = vmatprep.subr.bf16.mxu0 0
    %3906 = vmatpush1.bf16.msra.mxu0 0
    %3907 = vmatprep.subr.bf16.mxu0 0
    %3908 = vmatpush1.bf16.msra.mxu0 0
    %3909 = vmatprep.subr.bf16.mxu0 0
    %3910 = vmatpush1.bf16.msra.mxu0 0
    %3911 = vmatprep.subr.bf16.mxu0 0
    %3912 = vmatpush1.bf16.msra.mxu0 0
    %3913 = vmatprep.subr.bf16.mxu0 0
    %3914 = vmatpush1.bf16.msra.mxu0 0
    %3915 = vmatprep.subr.bf16.mxu0 0
    %3916 = vmatpush1.bf16.msra.mxu0 0
    %3917 = vmatprep.mubr.bf16.mxu0 0
    %3918 = vmatmul.mubr.bf16.gmra.mrb[0].mxu0 %v3880
    %v3919 = vpop.f32.mrb[0].mxu0
    %v3920 = vadd.f32 0.0, %v3919
    %v3921 = vpop.f32.mrb[0].mxu0
    %v3922 = vpop.f32.mrb[0].mxu0
    %v3923 = vpop.f32.mrb[0].mxu0
    %3924 = vdwg.mxu0
    %v3926 = vsel %vm871, %v3831, 0
    %v3929 = vsel %vm1107, %v2655, 0
    %3931 = vmatprep.subr.bf16.mxu0 0
    %3932 = vmatpush1.bf16.msra.mxu0 %v3929
    %3933 = vmatprep.subr.bf16.mxu0 0
    %3934 = vmatpush1.bf16.msra.mxu0 0
    %3935 = vmatprep.subr.bf16.mxu0 0
    %3936 = vmatpush1.bf16.msra.mxu0 0
    %3937 = vmatprep.subr.bf16.mxu0 0
    %3938 = vmatpush1.bf16.msra.mxu0 0
    %3939 = vmatprep.subr.bf16.mxu0 0
    %3940 = vmatpush1.bf16.msra.mxu0 0
    %3941 = vmatprep.subr.bf16.mxu0 0
    %3942 = vmatpush1.bf16.msra.mxu0 0
    %3943 = vmatprep.subr.bf16.mxu0 0
    %3944 = vmatpush1.bf16.msra.mxu0 0
    %3945 = vmatprep.subr.bf16.mxu0 0
    %3946 = vmatpush1.bf16.msra.mxu0 0
    %3947 = vmatprep.subr.bf16.mxu0 0
    %3948 = vmatpush1.bf16.msra.mxu0 0
    %3949 = vmatprep.subr.bf16.mxu0 0
    %3950 = vmatpush1.bf16.msra.mxu0 0
    %3951 = vmatprep.subr.bf16.mxu0 0
    %3952 = vmatpush1.bf16.msra.mxu0 0
    %3953 = vmatprep.subr.bf16.mxu0 0
    %3954 = vmatpush1.bf16.msra.mxu0 0
    %3955 = vmatprep.subr.bf16.mxu0 0
    %3956 = vmatpush1.bf16.msra.mxu0 0
    %3957 = vmatprep.subr.bf16.mxu0 0
    %3958 = vmatpush1.bf16.msra.mxu0 0
    %3959 = vmatprep.subr.bf16.mxu0 0
    %3960 = vmatpush1.bf16.msra.mxu0 0
    %3961 = vmatprep.subr.bf16.mxu0 0
    %3962 = vmatpush1.bf16.msra.mxu0 0
    %3963 = vmatprep.mubr.bf16.mxu0 0
    %3964 = vmatmul.mubr.bf16.gmra.mrb[0].mxu0 %v3926
    %v3965 = vpop.f32.mrb[0].mxu0
    %v3966 = vadd.f32 0.0, %v3965
    %v3967 = vpop.f32.mrb[0].mxu0
    %v3968 = vpop.f32.mrb[0].mxu0
    %v3969 = vpop.f32.mrb[0].mxu0
    %3970 = vdwg.mxu0
    %v3972 = vsel %vm871, %v3832, 0
    %v3975 = vsel %vm1107, %v2656, 0
    %3977 = vmatprep.subr.bf16.mxu0 0
    %3978 = vmatpush1.bf16.msra.mxu0 %v3975
    %3979 = vmatprep.subr.bf16.mxu0 0
    %3980 = vmatpush1.bf16.msra.mxu0 0
    %3981 = vmatprep.subr.bf16.mxu0 0
    %3982 = vmatpush1.bf16.msra.mxu0 0
    %3983 = vmatprep.subr.bf16.mxu0 0
    %3984 = vmatpush1.bf16.msra.mxu0 0
    %3985 = vmatprep.subr.bf16.mxu0 0
    %3986 = vmatpush1.bf16.msra.mxu0 0
    %3987 = vmatprep.subr.bf16.mxu0 0
    %3988 = vmatpush1.bf16.msra.mxu0 0
    %3989 = vmatprep.subr.bf16.mxu0 0
    %3990 = vmatpush1.bf16.msra.mxu0 0
    %3991 = vmatprep.subr.bf16.mxu0 0
    %3992 = vmatpush1.bf16.msra.mxu0 0
    %3993 = vmatprep.subr.bf16.mxu0 0
    %3994 = vmatpush1.bf16.msra.mxu0 0
    %3995 = vmatprep.subr.bf16.mxu0 0
    %3996 = vmatpush1.bf16.msra.mxu0 0
    %3997 = vmatprep.subr.bf16.mxu0 0
    %3998 = vmatpush1.bf16.msra.mxu0 0
    %3999 = vmatprep.subr.bf16.mxu0 0
    %4000 = vmatpush1.bf16.msra.mxu0 0
    %4001 = vmatprep.subr.bf16.mxu0 0
    %4002 = vmatpush1.bf16.msra.mxu0 0
    %4003 = vmatprep.subr.bf16.mxu0 0
    %4004 = vmatpush1.bf16.msra.mxu0 0
    %4005 = vmatprep.subr.bf16.mxu0 0
    %4006 = vmatpush1.bf16.msra.mxu0 0
    %4007 = vmatprep.subr.bf16.mxu0 0
    %4008 = vmatpush1.bf16.msra.mxu0 0
    %4009 = vmatprep.mubr.bf16.mxu0 0
    %4010 = vmatmul.mubr.bf16.gmra.mrb[0].mxu0 %v3972
    %v4011 = vpop.f32.mrb[0].mxu0
    %v4012 = vadd.f32 0.0, %v4011
    %v4013 = vpop.f32.mrb[0].mxu0
    %v4014 = vpop.f32.mrb[0].mxu0
    %v4015 = vpop.f32.mrb[0].mxu0
    %4016 = vdwg.mxu0
    %v4017 = vsel %vm116, %v3874, 0.0
    %v4018 = vsel %vm116, %v3920, 0.0
    %v4019 = vadd.f32 %v4017, %v4018
    %v4020 = vsel %vm116, %v3966, 0.0
    %v4021 = vadd.f32 %v4019, %v4020
    %v4022 = vsel %vm116, %v4012, 0.0
    %v4023 = vadd.f32 %v4021, %v4022
    %v4024 = vlaneseq
    %v4025 = vshrl.u32 %v4024, 7
    %v4026 = vsub.s32 0, %v4025
    %v4027 = vrot.slane %v2657, %v4026
    %v4028 = vadd.f32 %v4023, %v4027
    %v4030 = vrot.slane %v2698, 4
    %v4032 = vsel %vm116, %v4030, 0
    %4034 = vmatprep.subr.bf16.mxu0 0
    %4035 = vmatpush1.bf16.msra.mxu0 %v2731
    %4036 = vmatprep.subr.bf16.mxu0 0
    %4037 = vmatpush1.bf16.msra.mxu0 %v2732
    %4038 = vmatprep.subr.bf16.mxu0 0
    %4039 = vmatpush1.bf16.msra.mxu0 0
    %4040 = vmatprep.subr.bf16.mxu0 0
    %4041 = vmatpush1.bf16.msra.mxu0 0
    %4042 = vmatprep.subr.bf16.mxu0 0
    %4043 = vmatpush1.bf16.msra.mxu0 0
    %4044 = vmatprep.subr.bf16.mxu0 0
    %4045 = vmatpush1.bf16.msra.mxu0 0
    %4046 = vmatprep.subr.bf16.mxu0 0
    %4047 = vmatpush1.bf16.msra.mxu0 0
    %4048 = vmatprep.subr.bf16.mxu0 0
    %4049 = vmatpush1.bf16.msra.mxu0 0
    %4050 = vmatprep.subr.bf16.mxu0 0
    %4051 = vmatpush1.bf16.msra.mxu0 0
    %4052 = vmatprep.subr.bf16.mxu0 0
    %4053 = vmatpush1.bf16.msra.mxu0 0
    %4054 = vmatprep.subr.bf16.mxu0 0
    %4055 = vmatpush1.bf16.msra.mxu0 0
    %4056 = vmatprep.subr.bf16.mxu0 0
    %4057 = vmatpush1.bf16.msra.mxu0 0
    %4058 = vmatprep.subr.bf16.mxu0 0
    %4059 = vmatpush1.bf16.msra.mxu0 0
    %4060 = vmatprep.subr.bf16.mxu0 0
    %4061 = vmatpush1.bf16.msra.mxu0 0
    %4062 = vmatprep.subr.bf16.mxu0 0
    %4063 = vmatpush1.bf16.msra.mxu0 0
    %4064 = vmatprep.subr.bf16.mxu0 0
    %4065 = vmatpush1.bf16.msra.mxu0 0
    %4066 = vmatprep.mubr.bf16.mxu0 0
    %4067 = vmatmul.mubr.bf16.gmra.mrb[0].mxu0 %v4032
    %v4068 = vpop.f32.mrb[0].mxu0
    %v4069 = vadd.f32 %v2706, %v4068
    %v4070 = vpop.f32.mrb[0].mxu0
    %v4071 = vpop.f32.mrb[0].mxu0
    %v4072 = vpop.f32.mrb[0].mxu0
    %4073 = vdwg.mxu0
    %4074 = vmatprep.subr.bf16.mxu0 0
    %4075 = vmatpush1.bf16.msra.mxu0 %v2786
    %4076 = vmatprep.subr.bf16.mxu0 0
    %4077 = vmatpush1.bf16.msra.mxu0 %v2787
    %4078 = vmatprep.subr.bf16.mxu0 0
    %4079 = vmatpush1.bf16.msra.mxu0 0
    %4080 = vmatprep.subr.bf16.mxu0 0
    %4081 = vmatpush1.bf16.msra.mxu0 0
    %4082 = vmatprep.subr.bf16.mxu0 0
    %4083 = vmatpush1.bf16.msra.mxu0 0
    %4084 = vmatprep.subr.bf16.mxu0 0
    %4085 = vmatpush1.bf16.msra.mxu0 0
    %4086 = vmatprep.subr.bf16.mxu0 0
    %4087 = vmatpush1.bf16.msra.mxu0 0
    %4088 = vmatprep.subr.bf16.mxu0 0
    %4089 = vmatpush1.bf16.msra.mxu0 0
    %4090 = vmatprep.subr.bf16.mxu0 0
    %4091 = vmatpush1.bf16.msra.mxu0 0
    %4092 = vmatprep.subr.bf16.mxu0 0
    %4093 = vmatpush1.bf16.msra.mxu0 0
    %4094 = vmatprep.subr.bf16.mxu0 0
    %4095 = vmatpush1.bf16.msra.mxu0 0
    %4096 = vmatprep.subr.bf16.mxu0 0
    %4097 = vmatpush1.bf16.msra.mxu0 0
    %4098 = vmatprep.subr.bf16.mxu0 0
    %4099 = vmatpush1.bf16.msra.mxu0 0
    %4100 = vmatprep.subr.bf16.mxu0 0
    %4101 = vmatpush1.bf16.msra.mxu0 0
    %4102 = vmatprep.subr.bf16.mxu0 0
    %4103 = vmatpush1.bf16.msra.mxu0 0
    %4104 = vmatprep.subr.bf16.mxu0 0
    %4105 = vmatpush1.bf16.msra.mxu0 0
    %4106 = vmatprep.mubr.bf16.mxu0 0
    %4107 = vmatmul.mubr.bf16.gmra.mrb[0].mxu0 %v4032
    %v4108 = vpop.f32.mrb[0].mxu0
    %v4109 = vadd.f32 %v2710, %v4108
    %v4110 = vpop.f32.mrb[0].mxu0
    %v4111 = vpop.f32.mrb[0].mxu0
    %v4112 = vpop.f32.mrb[0].mxu0
    %4113 = vdwg.mxu0
    %4114 = vmatprep.subr.bf16.mxu0 0
    %4115 = vmatpush1.bf16.msra.mxu0 %v2838
    %4116 = vmatprep.subr.bf16.mxu0 0
    %4117 = vmatpush1.bf16.msra.mxu0 %v2839
    %4118 = vmatprep.subr.bf16.mxu0 0
    %4119 = vmatpush1.bf16.msra.mxu0 0
    %4120 = vmatprep.subr.bf16.mxu0 0
    %4121 = vmatpush1.bf16.msra.mxu0 0
    %4122 = vmatprep.subr.bf16.mxu0 0
    %4123 = vmatpush1.bf16.msra.mxu0 0
    %4124 = vmatprep.subr.bf16.mxu0 0
    %4125 = vmatpush1.bf16.msra.mxu0 0
    %4126 = vmatprep.subr.bf16.mxu0 0
    %4127 = vmatpush1.bf16.msra.mxu0 0
    %4128 = vmatprep.subr.bf16.mxu0 0
    %4129 = vmatpush1.bf16.msra.mxu0 0
    %4130 = vmatprep.subr.bf16.mxu0 0
    %4131 = vmatpush1.bf16.msra.mxu0 0
    %4132 = vmatprep.subr.bf16.mxu0 0
    %4133 = vmatpush1.bf16.msra.mxu0 0
    %4134 = vmatprep.subr.bf16.mxu0 0
    %4135 = vmatpush1.bf16.msra.mxu0 0
    %4136 = vmatprep.subr.bf16.mxu0 0
    %4137 = vmatpush1.bf16.msra.mxu0 0
    %4138 = vmatprep.subr.bf16.mxu0 0
    %4139 = vmatpush1.bf16.msra.mxu0 0
    %4140 = vmatprep.subr.bf16.mxu0 0
    %4141 = vmatpush1.bf16.msra.mxu0 0
    %4142 = vmatprep.subr.bf16.mxu0 0
    %4143 = vmatpush1.bf16.msra.mxu0 0
    %4144 = vmatprep.subr.bf16.mxu0 0
    %4145 = vmatpush1.bf16.msra.mxu0 0
    %4146 = vmatprep.mubr.bf16.mxu0 0
    %4147 = vmatmul.mubr.bf16.gmra.mrb[0].mxu0 %v4032
    %v4148 = vpop.f32.mrb[0].mxu0
    %v4149 = vadd.f32 %v2714, %v4148
    %v4150 = vpop.f32.mrb[0].mxu0
    %v4151 = vpop.f32.mrb[0].mxu0
    %v4152 = vpop.f32.mrb[0].mxu0
    %4153 = vdwg.mxu0
    %4154 = vmatprep.subr.bf16.mxu0 0
    %4155 = vmatpush1.bf16.msra.mxu0 %v2890
    %4156 = vmatprep.subr.bf16.mxu0 0
    %4157 = vmatpush1.bf16.msra.mxu0 %v2891
    %4158 = vmatprep.subr.bf16.mxu0 0
    %4159 = vmatpush1.bf16.msra.mxu0 0
    %4160 = vmatprep.subr.bf16.mxu0 0
    %4161 = vmatpush1.bf16.msra.mxu0 0
    %4162 = vmatprep.subr.bf16.mxu0 0
    %4163 = vmatpush1.bf16.msra.mxu0 0
    %4164 = vmatprep.subr.bf16.mxu0 0
    %4165 = vmatpush1.bf16.msra.mxu0 0
    %4166 = vmatprep.subr.bf16.mxu0 0
    %4167 = vmatpush1.bf16.msra.mxu0 0
    %4168 = vmatprep.subr.bf16.mxu0 0
    %4169 = vmatpush1.bf16.msra.mxu0 0
    %4170 = vmatprep.subr.bf16.mxu0 0
    %4171 = vmatpush1.bf16.msra.mxu0 0
    %4172 = vmatprep.subr.bf16.mxu0 0
    %4173 = vmatpush1.bf16.msra.mxu0 0
    %4174 = vmatprep.subr.bf16.mxu0 0
    %4175 = vmatpush1.bf16.msra.mxu0 0
    %4176 = vmatprep.subr.bf16.mxu0 0
    %4177 = vmatpush1.bf16.msra.mxu0 0
    %4178 = vmatprep.subr.bf16.mxu0 0
    %4179 = vmatpush1.bf16.msra.mxu0 0
    %4180 = vmatprep.subr.bf16.mxu0 0
    %4181 = vmatpush1.bf16.msra.mxu0 0
    %4182 = vmatprep.subr.bf16.mxu0 0
    %4183 = vmatpush1.bf16.msra.mxu0 0
    %4184 = vmatprep.subr.bf16.mxu0 0
    %4185 = vmatpush1.bf16.msra.mxu0 0
    %4186 = vmatprep.mubr.bf16.mxu0 0
    %4187 = vmatmul.mubr.bf16.gmra.mrb[0].mxu0 %v4032
    %v4188 = vpop.f32.mrb[0].mxu0
    %v4189 = vadd.f32 %v2718, %v4188
    %v4190 = vpop.f32.mrb[0].mxu0
    %v4191 = vpop.f32.mrb[0].mxu0
    %v4192 = vpop.f32.mrb[0].mxu0
    %4193 = vdwg.mxu0
    %v4194 = vpack.c.bf16 %v4069, %v4069
    %v4195 = vpack.c.bf16 %v4109, %v4109
    %v4196 = vpack.c.bf16 %v4149, %v4149
    %v4197 = vpack.c.bf16 %v4189, %v4189
    %v4199 = vrot.slane %v2592, 4
    %v4201 = vsel %vm116, %v4199, 0
    %4203 = vmatprep.subr.bf16.mxu0 0
    %4204 = vmatpush1.bf16.msra.mxu0 %v2994
    %4205 = vmatprep.subr.bf16.mxu0 0
    %4206 = vmatpush1.bf16.msra.mxu0 %v2995
    %4207 = vmatprep.subr.bf16.mxu0 0
    %4208 = vmatpush1.bf16.msra.mxu0 0
    %4209 = vmatprep.subr.bf16.mxu0 0
    %4210 = vmatpush1.bf16.msra.mxu0 0
    %4211 = vmatprep.subr.bf16.mxu0 0
    %4212 = vmatpush1.bf16.msra.mxu0 0
    %4213 = vmatprep.subr.bf16.mxu0 0
    %4214 = vmatpush1.bf16.msra.mxu0 0
    %4215 = vmatprep.subr.bf16.mxu0 0
    %4216 = vmatpush1.bf16.msra.mxu0 0
    %4217 = vmatprep.subr.bf16.mxu0 0
    %4218 = vmatpush1.bf16.msra.mxu0 0
    %4219 = vmatprep.subr.bf16.mxu0 0
    %4220 = vmatpush1.bf16.msra.mxu0 0
    %4221 = vmatprep.subr.bf16.mxu0 0
    %4222 = vmatpush1.bf16.msra.mxu0 0
    %4223 = vmatprep.subr.bf16.mxu0 0
    %4224 = vmatpush1.bf16.msra.mxu0 0
    %4225 = vmatprep.subr.bf16.mxu0 0
    %4226 = vmatpush1.bf16.msra.mxu0 0
    %4227 = vmatprep.subr.bf16.mxu0 0
    %4228 = vmatpush1.bf16.msra.mxu0 0
    %4229 = vmatprep.subr.bf16.mxu0 0
    %4230 = vmatpush1.bf16.msra.mxu0 0
    %4231 = vmatprep.subr.bf16.mxu0 0
    %4232 = vmatpush1.bf16.msra.mxu0 0
    %4233 = vmatprep.subr.bf16.mxu0 0
    %4234 = vmatpush1.bf16.msra.mxu0 0
    %4235 = vmatprep.mubr.bf16.mxu0 0
    %4236 = vmatmul.mubr.bf16.gmra.mrb[0].mxu0 %v4201
    %v4237 = vpop.f32.mrb[0].mxu0
    %v4238 = vadd.f32 %v2949, %v4237
    %v4239 = vpop.f32.mrb[0].mxu0
    %v4240 = vpop.f32.mrb[0].mxu0
    %v4241 = vpop.f32.mrb[0].mxu0
    %4242 = vdwg.mxu0
    %4243 = vmatprep.subr.bf16.mxu0 0
    %4244 = vmatpush1.bf16.msra.mxu0 %v3049
    %4245 = vmatprep.subr.bf16.mxu0 0
    %4246 = vmatpush1.bf16.msra.mxu0 %v3050
    %4247 = vmatprep.subr.bf16.mxu0 0
    %4248 = vmatpush1.bf16.msra.mxu0 0
    %4249 = vmatprep.subr.bf16.mxu0 0
    %4250 = vmatpush1.bf16.msra.mxu0 0
    %4251 = vmatprep.subr.bf16.mxu0 0
    %4252 = vmatpush1.bf16.msra.mxu0 0
    %4253 = vmatprep.subr.bf16.mxu0 0
    %4254 = vmatpush1.bf16.msra.mxu0 0
    %4255 = vmatprep.subr.bf16.mxu0 0
    %4256 = vmatpush1.bf16.msra.mxu0 0
    %4257 = vmatprep.subr.bf16.mxu0 0
    %4258 = vmatpush1.bf16.msra.mxu0 0
    %4259 = vmatprep.subr.bf16.mxu0 0
    %4260 = vmatpush1.bf16.msra.mxu0 0
    %4261 = vmatprep.subr.bf16.mxu0 0
    %4262 = vmatpush1.bf16.msra.mxu0 0
    %4263 = vmatprep.subr.bf16.mxu0 0
    %4264 = vmatpush1.bf16.msra.mxu0 0
    %4265 = vmatprep.subr.bf16.mxu0 0
    %4266 = vmatpush1.bf16.msra.mxu0 0
    %4267 = vmatprep.subr.bf16.mxu0 0
    %4268 = vmatpush1.bf16.msra.mxu0 0
    %4269 = vmatprep.subr.bf16.mxu0 0
    %4270 = vmatpush1.bf16.msra.mxu0 0
    %4271 = vmatprep.subr.bf16.mxu0 0
    %4272 = vmatpush1.bf16.msra.mxu0 0
    %4273 = vmatprep.subr.bf16.mxu0 0
    %4274 = vmatpush1.bf16.msra.mxu0 0
    %4275 = vmatprep.mubr.bf16.mxu0 0
    %4276 = vmatmul.mubr.bf16.gmra.mrb[0].mxu0 %v4201
    %v4277 = vpop.f32.mrb[0].mxu0
    %v4278 = vadd.f32 %v2953, %v4277
    %v4279 = vpop.f32.mrb[0].mxu0
    %v4280 = vpop.f32.mrb[0].mxu0
    %v4281 = vpop.f32.mrb[0].mxu0
    %4282 = vdwg.mxu0
    %4283 = vmatprep.subr.bf16.mxu0 0
    %4284 = vmatpush1.bf16.msra.mxu0 %v3101
    %4285 = vmatprep.subr.bf16.mxu0 0
    %4286 = vmatpush1.bf16.msra.mxu0 %v3102
    %4287 = vmatprep.subr.bf16.mxu0 0
    %4288 = vmatpush1.bf16.msra.mxu0 0
    %4289 = vmatprep.subr.bf16.mxu0 0
    %4290 = vmatpush1.bf16.msra.mxu0 0
    %4291 = vmatprep.subr.bf16.mxu0 0
    %4292 = vmatpush1.bf16.msra.mxu0 0
    %4293 = vmatprep.subr.bf16.mxu0 0
    %4294 = vmatpush1.bf16.msra.mxu0 0
    %4295 = vmatprep.subr.bf16.mxu0 0
    %4296 = vmatpush1.bf16.msra.mxu0 0
    %4297 = vmatprep.subr.bf16.mxu0 0
    %4298 = vmatpush1.bf16.msra.mxu0 0
    %4299 = vmatprep.subr.bf16.mxu0 0
    %4300 = vmatpush1.bf16.msra.mxu0 0
    %4301 = vmatprep.subr.bf16.mxu0 0
    %4302 = vmatpush1.bf16.msra.mxu0 0
    %4303 = vmatprep.subr.bf16.mxu0 0
    %4304 = vmatpush1.bf16.msra.mxu0 0
    %4305 = vmatprep.subr.bf16.mxu0 0
    %4306 = vmatpush1.bf16.msra.mxu0 0
    %4307 = vmatprep.subr.bf16.mxu0 0
    %4308 = vmatpush1.bf16.msra.mxu0 0
    %4309 = vmatprep.subr.bf16.mxu0 0
    %4310 = vmatpush1.bf16.msra.mxu0 0
    %4311 = vmatprep.subr.bf16.mxu0 0
    %4312 = vmatpush1.bf16.msra.mxu0 0
    %4313 = vmatprep.subr.bf16.mxu0 0
    %4314 = vmatpush1.bf16.msra.mxu0 0
    %4315 = vmatprep.mubr.bf16.mxu0 0
    %4316 = vmatmul.mubr.bf16.gmra.mrb[0].mxu0 %v4201
    %v4317 = vpop.f32.mrb[0].mxu0
    %v4318 = vadd.f32 %v2957, %v4317
    %v4319 = vpop.f32.mrb[0].mxu0
    %v4320 = vpop.f32.mrb[0].mxu0
    %v4321 = vpop.f32.mrb[0].mxu0
    %4322 = vdwg.mxu0
    %4323 = vmatprep.subr.bf16.mxu0 0
    %4324 = vmatpush1.bf16.msra.mxu0 %v3153
    %4325 = vmatprep.subr.bf16.mxu0 0
    %4326 = vmatpush1.bf16.msra.mxu0 %v3154
    %4327 = vmatprep.subr.bf16.mxu0 0
    %4328 = vmatpush1.bf16.msra.mxu0 0
    %4329 = vmatprep.subr.bf16.mxu0 0
    %4330 = vmatpush1.bf16.msra.mxu0 0
    %4331 = vmatprep.subr.bf16.mxu0 0
    %4332 = vmatpush1.bf16.msra.mxu0 0
    %4333 = vmatprep.subr.bf16.mxu0 0
    %4334 = vmatpush1.bf16.msra.mxu0 0
    %4335 = vmatprep.subr.bf16.mxu0 0
    %4336 = vmatpush1.bf16.msra.mxu0 0
    %4337 = vmatprep.subr.bf16.mxu0 0
    %4338 = vmatpush1.bf16.msra.mxu0 0
    %4339 = vmatprep.subr.bf16.mxu0 0
    %4340 = vmatpush1.bf16.msra.mxu0 0
    %4341 = vmatprep.subr.bf16.mxu0 0
    %4342 = vmatpush1.bf16.msra.mxu0 0
    %4343 = vmatprep.subr.bf16.mxu0 0
    %4344 = vmatpush1.bf16.msra.mxu0 0
    %4345 = vmatprep.subr.bf16.mxu0 0
    %4346 = vmatpush1.bf16.msra.mxu0 0
    %4347 = vmatprep.subr.bf16.mxu0 0
    %4348 = vmatpush1.bf16.msra.mxu0 0
    %4349 = vmatprep.subr.bf16.mxu0 0
    %4350 = vmatpush1.bf16.msra.mxu0 0
    %4351 = vmatprep.subr.bf16.mxu0 0
    %4352 = vmatpush1.bf16.msra.mxu0 0
    %4353 = vmatprep.subr.bf16.mxu0 0
    %4354 = vmatpush1.bf16.msra.mxu0 0
    %4355 = vmatprep.mubr.bf16.mxu0 0
    %4356 = vmatmul.mubr.bf16.gmra.mrb[0].mxu0 %v4201
    %v4357 = vpop.f32.mrb[0].mxu0
    %v4358 = vadd.f32 %v2961, %v4357
    %v4359 = vpop.f32.mrb[0].mxu0
    %v4360 = vpop.f32.mrb[0].mxu0
    %v4361 = vpop.f32.mrb[0].mxu0
    %4362 = vdwg.mxu0
    %4363 = vmatprep.subr.bf16.mxu0 0
    %4364 = vmatpush1.bf16.msra.mxu0 %v3205
    %4365 = vmatprep.subr.bf16.mxu0 0
    %4366 = vmatpush1.bf16.msra.mxu0 %v3206
    %4367 = vmatprep.subr.bf16.mxu0 0
    %4368 = vmatpush1.bf16.msra.mxu0 0
    %4369 = vmatprep.subr.bf16.mxu0 0
    %4370 = vmatpush1.bf16.msra.mxu0 0
    %4371 = vmatprep.subr.bf16.mxu0 0
    %4372 = vmatpush1.bf16.msra.mxu0 0
    %4373 = vmatprep.subr.bf16.mxu0 0
    %4374 = vmatpush1.bf16.msra.mxu0 0
    %4375 = vmatprep.subr.bf16.mxu0 0
    %4376 = vmatpush1.bf16.msra.mxu0 0
    %4377 = vmatprep.subr.bf16.mxu0 0
    %4378 = vmatpush1.bf16.msra.mxu0 0
    %4379 = vmatprep.subr.bf16.mxu0 0
    %4380 = vmatpush1.bf16.msra.mxu0 0
    %4381 = vmatprep.subr.bf16.mxu0 0
    %4382 = vmatpush1.bf16.msra.mxu0 0
    %4383 = vmatprep.subr.bf16.mxu0 0
    %4384 = vmatpush1.bf16.msra.mxu0 0
    %4385 = vmatprep.subr.bf16.mxu0 0
    %4386 = vmatpush1.bf16.msra.mxu0 0
    %4387 = vmatprep.subr.bf16.mxu0 0
    %4388 = vmatpush1.bf16.msra.mxu0 0
    %4389 = vmatprep.subr.bf16.mxu0 0
    %4390 = vmatpush1.bf16.msra.mxu0 0
    %4391 = vmatprep.subr.bf16.mxu0 0
    %4392 = vmatpush1.bf16.msra.mxu0 0
    %4393 = vmatprep.subr.bf16.mxu0 0
    %4394 = vmatpush1.bf16.msra.mxu0 0
    %4395 = vmatprep.mubr.bf16.mxu0 0
    %4396 = vmatmul.mubr.bf16.gmra.mrb[0].mxu0 %v4201
    %v4397 = vpop.f32.mrb[0].mxu0
    %v4398 = vadd.f32 %v2965, %v4397
    %v4399 = vpop.f32.mrb[0].mxu0
    %v4400 = vpop.f32.mrb[0].mxu0
    %v4401 = vpop.f32.mrb[0].mxu0
    %4402 = vdwg.mxu0
    %4403 = vmatprep.subr.bf16.mxu0 0
    %4404 = vmatpush1.bf16.msra.mxu0 %v3257
    %4405 = vmatprep.subr.bf16.mxu0 0
    %4406 = vmatpush1.bf16.msra.mxu0 %v3258
    %4407 = vmatprep.subr.bf16.mxu0 0
    %4408 = vmatpush1.bf16.msra.mxu0 0
    %4409 = vmatprep.subr.bf16.mxu0 0
    %4410 = vmatpush1.bf16.msra.mxu0 0
    %4411 = vmatprep.subr.bf16.mxu0 0
    %4412 = vmatpush1.bf16.msra.mxu0 0
    %4413 = vmatprep.subr.bf16.mxu0 0
    %4414 = vmatpush1.bf16.msra.mxu0 0
    %4415 = vmatprep.subr.bf16.mxu0 0
    %4416 = vmatpush1.bf16.msra.mxu0 0
    %4417 = vmatprep.subr.bf16.mxu0 0
    %4418 = vmatpush1.bf16.msra.mxu0 0
    %4419 = vmatprep.subr.bf16.mxu0 0
    %4420 = vmatpush1.bf16.msra.mxu0 0
    %4421 = vmatprep.subr.bf16.mxu0 0
    %4422 = vmatpush1.bf16.msra.mxu0 0
    %4423 = vmatprep.subr.bf16.mxu0 0
    %4424 = vmatpush1.bf16.msra.mxu0 0
    %4425 = vmatprep.subr.bf16.mxu0 0
    %4426 = vmatpush1.bf16.msra.mxu0 0
    %4427 = vmatprep.subr.bf16.mxu0 0
    %4428 = vmatpush1.bf16.msra.mxu0 0
    %4429 = vmatprep.subr.bf16.mxu0 0
    %4430 = vmatpush1.bf16.msra.mxu0 0
    %4431 = vmatprep.subr.bf16.mxu0 0
    %4432 = vmatpush1.bf16.msra.mxu0 0
    %4433 = vmatprep.subr.bf16.mxu0 0
    %4434 = vmatpush1.bf16.msra.mxu0 0
    %4435 = vmatprep.mubr.bf16.mxu0 0
    %4436 = vmatmul.mubr.bf16.gmra.mrb[0].mxu0 %v4201
    %v4437 = vpop.f32.mrb[0].mxu0
    %v4438 = vadd.f32 %v2969, %v4437
    %v4439 = vpop.f32.mrb[0].mxu0
    %v4440 = vpop.f32.mrb[0].mxu0
    %v4441 = vpop.f32.mrb[0].mxu0
    %4442 = vdwg.mxu0
    %4443 = vmatprep.subr.bf16.mxu0 0
    %4444 = vmatpush1.bf16.msra.mxu0 %v3309
    %4445 = vmatprep.subr.bf16.mxu0 0
    %4446 = vmatpush1.bf16.msra.mxu0 %v3310
    %4447 = vmatprep.subr.bf16.mxu0 0
    %4448 = vmatpush1.bf16.msra.mxu0 0
    %4449 = vmatprep.subr.bf16.mxu0 0
    %4450 = vmatpush1.bf16.msra.mxu0 0
    %4451 = vmatprep.subr.bf16.mxu0 0
    %4452 = vmatpush1.bf16.msra.mxu0 0
    %4453 = vmatprep.subr.bf16.mxu0 0
    %4454 = vmatpush1.bf16.msra.mxu0 0
    %4455 = vmatprep.subr.bf16.mxu0 0
    %4456 = vmatpush1.bf16.msra.mxu0 0
    %4457 = vmatprep.subr.bf16.mxu0 0
    %4458 = vmatpush1.bf16.msra.mxu0 0
    %4459 = vmatprep.subr.bf16.mxu0 0
    %4460 = vmatpush1.bf16.msra.mxu0 0
    %4461 = vmatprep.subr.bf16.mxu0 0
    %4462 = vmatpush1.bf16.msra.mxu0 0
    %4463 = vmatprep.subr.bf16.mxu0 0
    %4464 = vmatpush1.bf16.msra.mxu0 0
    %4465 = vmatprep.subr.bf16.mxu0 0
    %4466 = vmatpush1.bf16.msra.mxu0 0
    %4467 = vmatprep.subr.bf16.mxu0 0
    %4468 = vmatpush1.bf16.msra.mxu0 0
    %4469 = vmatprep.subr.bf16.mxu0 0
    %4470 = vmatpush1.bf16.msra.mxu0 0
    %4471 = vmatprep.subr.bf16.mxu0 0
    %4472 = vmatpush1.bf16.msra.mxu0 0
    %4473 = vmatprep.subr.bf16.mxu0 0
    %4474 = vmatpush1.bf16.msra.mxu0 0
    %4475 = vmatprep.mubr.bf16.mxu0 0
    %4476 = vmatmul.mubr.bf16.gmra.mrb[0].mxu0 %v4201
    %v4477 = vpop.f32.mrb[0].mxu0
    %v4478 = vadd.f32 %v2973, %v4477
    %v4479 = vpop.f32.mrb[0].mxu0
    %v4480 = vpop.f32.mrb[0].mxu0
    %v4481 = vpop.f32.mrb[0].mxu0
    %4482 = vdwg.mxu0
    %4483 = vmatprep.subr.bf16.mxu0 0
    %4484 = vmatpush1.bf16.msra.mxu0 %v3361
    %4485 = vmatprep.subr.bf16.mxu0 0
    %4486 = vmatpush1.bf16.msra.mxu0 %v3362
    %4487 = vmatprep.subr.bf16.mxu0 0
    %4488 = vmatpush1.bf16.msra.mxu0 0
    %4489 = vmatprep.subr.bf16.mxu0 0
    %4490 = vmatpush1.bf16.msra.mxu0 0
    %4491 = vmatprep.subr.bf16.mxu0 0
    %4492 = vmatpush1.bf16.msra.mxu0 0
    %4493 = vmatprep.subr.bf16.mxu0 0
    %4494 = vmatpush1.bf16.msra.mxu0 0
    %4495 = vmatprep.subr.bf16.mxu0 0
    %4496 = vmatpush1.bf16.msra.mxu0 0
    %4497 = vmatprep.subr.bf16.mxu0 0
    %4498 = vmatpush1.bf16.msra.mxu0 0
    %4499 = vmatprep.subr.bf16.mxu0 0
    %4500 = vmatpush1.bf16.msra.mxu0 0
    %4501 = vmatprep.subr.bf16.mxu0 0
    %4502 = vmatpush1.bf16.msra.mxu0 0
    %4503 = vmatprep.subr.bf16.mxu0 0
    %4504 = vmatpush1.bf16.msra.mxu0 0
    %4505 = vmatprep.subr.bf16.mxu0 0
    %4506 = vmatpush1.bf16.msra.mxu0 0
    %4507 = vmatprep.subr.bf16.mxu0 0
    %4508 = vmatpush1.bf16.msra.mxu0 0
    %4509 = vmatprep.subr.bf16.mxu0 0
    %4510 = vmatpush1.bf16.msra.mxu0 0
    %4511 = vmatprep.subr.bf16.mxu0 0
    %4512 = vmatpush1.bf16.msra.mxu0 0
    %4513 = vmatprep.subr.bf16.mxu0 0
    %4514 = vmatpush1.bf16.msra.mxu0 0
    %4515 = vmatprep.mubr.bf16.mxu0 0
    %4516 = vmatmul.mubr.bf16.gmra.mrb[0].mxu0 %v4201
    %v4517 = vpop.f32.mrb[0].mxu0
    %v4518 = vadd.f32 %v2977, %v4517
    %v4519 = vpop.f32.mrb[0].mxu0
    %v4520 = vpop.f32.mrb[0].mxu0
    %v4521 = vpop.f32.mrb[0].mxu0
    %4522 = vdwg.mxu0
    %v4523 = vpack.c.bf16 %v4238, %v4238
    %v4524 = vpack.c.bf16 %v4278, %v4278
    %v4525 = vpack.c.bf16 %v4318, %v4318
    %v4526 = vpack.c.bf16 %v4358, %v4358
    %v4527 = vpack.c.bf16 %v4398, %v4398
    %v4528 = vpack.c.bf16 %v4438, %v4438
    %v4529 = vpack.c.bf16 %v4478, %v4478
    %v4530 = vpack.c.bf16 %v4518, %v4518
    %v4532 = vsel %vm871, %v4194, 0
    %v4535 = vsel %vm871, %v4523, 0
    %4537 = vmatprep.subr.bf16.mxu0 0
    %4538 = vmatpush1.bf16.xpose.msra.mxu0 %v4535
    %4539 = vmatprep.subr.bf16.mxu0 0
    %4540 = vmatpush1.bf16.xpose.msra.mxu0 0
    %4541 = vmatprep.subr.bf16.mxu0 0
    %4542 = vmatpush1.bf16.xpose.msra.mxu0 0
    %4543 = vmatprep.subr.bf16.mxu0 0
    %4544 = vmatpush1.bf16.xpose.msra.mxu0 0
    %4545 = vmatprep.subr.bf16.mxu0 0
    %4546 = vmatpush1.bf16.xpose.msra.mxu0 0
    %4547 = vmatprep.subr.bf16.mxu0 0
    %4548 = vmatpush1.bf16.xpose.msra.mxu0 0
    %4549 = vmatprep.subr.bf16.mxu0 0
    %4550 = vmatpush1.bf16.xpose.msra.mxu0 0
    %4551 = vmatprep.subr.bf16.mxu0 0
    %4552 = vmatpush1.bf16.xpose.msra.mxu0 0
    %4553 = vmatprep.subr.bf16.mxu0 0
    %4554 = vmatpush1.bf16.xpose.msra.mxu0 0
    %4555 = vmatprep.subr.bf16.mxu0 0
    %4556 = vmatpush1.bf16.xpose.msra.mxu0 0
    %4557 = vmatprep.subr.bf16.mxu0 0
    %4558 = vmatpush1.bf16.xpose.msra.mxu0 0
    %4559 = vmatprep.subr.bf16.mxu0 0
    %4560 = vmatpush1.bf16.xpose.msra.mxu0 0
    %4561 = vmatprep.subr.bf16.mxu0 0
    %4562 = vmatpush1.bf16.xpose.msra.mxu0 0
    %4563 = vmatprep.subr.bf16.mxu0 0
    %4564 = vmatpush1.bf16.xpose.msra.mxu0 0
    %4565 = vmatprep.subr.bf16.mxu0 0
    %4566 = vmatpush1.bf16.xpose.msra.mxu0 0
    %4567 = vmatprep.subr.bf16.mxu0 0
    %4568 = vmatpush1.bf16.xpose.msra.mxu0 0
    %4569 = vmatprep.mubr.bf16.mxu0 0
    %4570 = vmatmul.mubr.bf16.gmra.mrb[0].mxu0 %v4532
    %v4571 = vpop.f32.mrb[0].mxu0
    %v4572 = vadd.f32 0.0, %v4571
    %v4573 = vpop.f32.mrb[0].mxu0
    %v4574 = vpop.f32.mrb[0].mxu0
    %v4575 = vpop.f32.mrb[0].mxu0
    %4576 = vdwg.mxu0
    %v4578 = vsel %vm871, %v4195, 0
    %v4581 = vsel %vm871, %v4524, 0
    %4583 = vmatprep.subr.bf16.mxu0 0
    %4584 = vmatpush1.bf16.xpose.msra.mxu0 %v4581
    %4585 = vmatprep.subr.bf16.mxu0 0
    %4586 = vmatpush1.bf16.xpose.msra.mxu0 0
    %4587 = vmatprep.subr.bf16.mxu0 0
    %4588 = vmatpush1.bf16.xpose.msra.mxu0 0
    %4589 = vmatprep.subr.bf16.mxu0 0
    %4590 = vmatpush1.bf16.xpose.msra.mxu0 0
    %4591 = vmatprep.subr.bf16.mxu0 0
    %4592 = vmatpush1.bf16.xpose.msra.mxu0 0
    %4593 = vmatprep.subr.bf16.mxu0 0
    %4594 = vmatpush1.bf16.xpose.msra.mxu0 0
    %4595 = vmatprep.subr.bf16.mxu0 0
    %4596 = vmatpush1.bf16.xpose.msra.mxu0 0
    %4597 = vmatprep.subr.bf16.mxu0 0
    %4598 = vmatpush1.bf16.xpose.msra.mxu0 0
    %4599 = vmatprep.subr.bf16.mxu0 0
    %4600 = vmatpush1.bf16.xpose.msra.mxu0 0
    %4601 = vmatprep.subr.bf16.mxu0 0
    %4602 = vmatpush1.bf16.xpose.msra.mxu0 0
    %4603 = vmatprep.subr.bf16.mxu0 0
    %4604 = vmatpush1.bf16.xpose.msra.mxu0 0
    %4605 = vmatprep.subr.bf16.mxu0 0
    %4606 = vmatpush1.bf16.xpose.msra.mxu0 0
    %4607 = vmatprep.subr.bf16.mxu0 0
    %4608 = vmatpush1.bf16.xpose.msra.mxu0 0
    %4609 = vmatprep.subr.bf16.mxu0 0
    %4610 = vmatpush1.bf16.xpose.msra.mxu0 0
    %4611 = vmatprep.subr.bf16.mxu0 0
    %4612 = vmatpush1.bf16.xpose.msra.mxu0 0
    %4613 = vmatprep.subr.bf16.mxu0 0
    %4614 = vmatpush1.bf16.xpose.msra.mxu0 0
    %4615 = vmatprep.mubr.bf16.mxu0 0
    %4616 = vmatmul.mubr.bf16.gmra.mrb[0].mxu0 %v4578
    %v4617 = vpop.f32.mrb[0].mxu0
    %v4618 = vadd.f32 0.0, %v4617
    %v4619 = vpop.f32.mrb[0].mxu0
    %v4620 = vpop.f32.mrb[0].mxu0
    %v4621 = vpop.f32.mrb[0].mxu0
    %4622 = vdwg.mxu0
    %v4624 = vsel %vm871, %v4196, 0
    %v4627 = vsel %vm871, %v4525, 0
    %4629 = vmatprep.subr.bf16.mxu0 0
    %4630 = vmatpush1.bf16.xpose.msra.mxu0 %v4627
    %4631 = vmatprep.subr.bf16.mxu0 0
    %4632 = vmatpush1.bf16.xpose.msra.mxu0 0
    %4633 = vmatprep.subr.bf16.mxu0 0
    %4634 = vmatpush1.bf16.xpose.msra.mxu0 0
    %4635 = vmatprep.subr.bf16.mxu0 0
    %4636 = vmatpush1.bf16.xpose.msra.mxu0 0
    %4637 = vmatprep.subr.bf16.mxu0 0
    %4638 = vmatpush1.bf16.xpose.msra.mxu0 0
    %4639 = vmatprep.subr.bf16.mxu0 0
    %4640 = vmatpush1.bf16.xpose.msra.mxu0 0
    %4641 = vmatprep.subr.bf16.mxu0 0
    %4642 = vmatpush1.bf16.xpose.msra.mxu0 0
    %4643 = vmatprep.subr.bf16.mxu0 0
    %4644 = vmatpush1.bf16.xpose.msra.mxu0 0
    %4645 = vmatprep.subr.bf16.mxu0 0
    %4646 = vmatpush1.bf16.xpose.msra.mxu0 0
    %4647 = vmatprep.subr.bf16.mxu0 0
    %4648 = vmatpush1.bf16.xpose.msra.mxu0 0
    %4649 = vmatprep.subr.bf16.mxu0 0
    %4650 = vmatpush1.bf16.xpose.msra.mxu0 0
    %4651 = vmatprep.subr.bf16.mxu0 0
    %4652 = vmatpush1.bf16.xpose.msra.mxu0 0
    %4653 = vmatprep.subr.bf16.mxu0 0
    %4654 = vmatpush1.bf16.xpose.msra.mxu0 0
    %4655 = vmatprep.subr.bf16.mxu0 0
    %4656 = vmatpush1.bf16.xpose.msra.mxu0 0
    %4657 = vmatprep.subr.bf16.mxu0 0
    %4658 = vmatpush1.bf16.xpose.msra.mxu0 0
    %4659 = vmatprep.subr.bf16.mxu0 0
    %4660 = vmatpush1.bf16.xpose.msra.mxu0 0
    %4661 = vmatprep.mubr.bf16.mxu0 0
    %4662 = vmatmul.mubr.bf16.gmra.mrb[0].mxu0 %v4624
    %v4663 = vpop.f32.mrb[0].mxu0
    %v4664 = vadd.f32 0.0, %v4663
    %v4665 = vpop.f32.mrb[0].mxu0
    %v4666 = vpop.f32.mrb[0].mxu0
    %v4667 = vpop.f32.mrb[0].mxu0
    %4668 = vdwg.mxu0
    %v4670 = vsel %vm871, %v4197, 0
    %v4673 = vsel %vm871, %v4526, 0
    %4675 = vmatprep.subr.bf16.mxu0 0
    %4676 = vmatpush1.bf16.xpose.msra.mxu0 %v4673
    %4677 = vmatprep.subr.bf16.mxu0 0
    %4678 = vmatpush1.bf16.xpose.msra.mxu0 0
    %4679 = vmatprep.subr.bf16.mxu0 0
    %4680 = vmatpush1.bf16.xpose.msra.mxu0 0
    %4681 = vmatprep.subr.bf16.mxu0 0
    %4682 = vmatpush1.bf16.xpose.msra.mxu0 0
    %4683 = vmatprep.subr.bf16.mxu0 0
    %4684 = vmatpush1.bf16.xpose.msra.mxu0 0
    %4685 = vmatprep.subr.bf16.mxu0 0
    %4686 = vmatpush1.bf16.xpose.msra.mxu0 0
    %4687 = vmatprep.subr.bf16.mxu0 0
    %4688 = vmatpush1.bf16.xpose.msra.mxu0 0
    %4689 = vmatprep.subr.bf16.mxu0 0
    %4690 = vmatpush1.bf16.xpose.msra.mxu0 0
    %4691 = vmatprep.subr.bf16.mxu0 0
    %4692 = vmatpush1.bf16.xpose.msra.mxu0 0
    %4693 = vmatprep.subr.bf16.mxu0 0
    %4694 = vmatpush1.bf16.xpose.msra.mxu0 0
    %4695 = vmatprep.subr.bf16.mxu0 0
    %4696 = vmatpush1.bf16.xpose.msra.mxu0 0
    %4697 = vmatprep.subr.bf16.mxu0 0
    %4698 = vmatpush1.bf16.xpose.msra.mxu0 0
    %4699 = vmatprep.subr.bf16.mxu0 0
    %4700 = vmatpush1.bf16.xpose.msra.mxu0 0
    %4701 = vmatprep.subr.bf16.mxu0 0
    %4702 = vmatpush1.bf16.xpose.msra.mxu0 0
    %4703 = vmatprep.subr.bf16.mxu0 0
    %4704 = vmatpush1.bf16.xpose.msra.mxu0 0
    %4705 = vmatprep.subr.bf16.mxu0 0
    %4706 = vmatpush1.bf16.xpose.msra.mxu0 0
    %4707 = vmatprep.mubr.bf16.mxu0 0
    %4708 = vmatmul.mubr.bf16.gmra.mrb[0].mxu0 %v4670
    %v4709 = vpop.f32.mrb[0].mxu0
    %v4710 = vadd.f32 0.0, %v4709
    %v4711 = vpop.f32.mrb[0].mxu0
    %v4712 = vpop.f32.mrb[0].mxu0
    %v4713 = vpop.f32.mrb[0].mxu0
    %4714 = vdwg.mxu0
    %v4715 = vsel %vm871, %v4572, -inf
    %4716 = vmax.xlane.f32.xlu0 %v4715
    %v4717 = vpop.xlane.xlu0 %4716
    %v4718 = vsel %vm871, %v4618, -inf
    %4719 = vmax.xlane.f32.xlu0 %v4718
    %v4720 = vpop.xlane.xlu0 %4719
    %v4721 = vsel %vm871, %v4664, -inf
    %4722 = vmax.xlane.f32.xlu0 %v4721
    %v4723 = vpop.xlane.xlu0 %4722
    %v4724 = vsel %vm871, %v4710, -inf
    %4725 = vmax.xlane.f32.xlu0 %v4724
    %v4726 = vpop.xlane.xlu0 %4725
    %v4727 = vsub.f32 %v4572, %v4717
    %v4728 = vsub.f32 %v4618, %v4720
    %v4729 = vsub.f32 %v4664, %v4723
    %v4730 = vsub.f32 %v4710, %v4726
    %v4731 = vmul.f32 %v4727, 1.442695
    %v4732 = vpow.pop %v4731
    %v4733 = vmul.f32 %v4728, 1.442695
    %v4734 = vpow.pop %v4733
    %v4735 = vmul.f32 %v4729, 1.442695
    %v4736 = vpow.pop %v4735
    %v4737 = vmul.f32 %v4730, 1.442695
    %v4738 = vpow.pop %v4737
    %v4739 = vsel %vm871, %v4732, 0.0
    %4740 = vadd.xlane.f32.xlu0 %v4739
    %v4741 = vpop.xlane.xlu0 %4740
    %v4742 = vsel %vm871, %v4734, 0.0
    %4743 = vadd.xlane.f32.xlu0 %v4742
    %v4744 = vpop.xlane.xlu0 %4743
    %v4745 = vsel %vm871, %v4736, 0.0
    %4746 = vadd.xlane.f32.xlu0 %v4745
    %v4747 = vpop.xlane.xlu0 %4746
    %v4748 = vsel %vm871, %v4738, 0.0
    %4749 = vadd.xlane.f32.xlu0 %v4748
    %v4750 = vpop.xlane.xlu0 %4749
    %v4751 = vrcp.pop %v4741
    %v4752 = vrcp.pop %v4744
    %v4753 = vrcp.pop %v4747
    %v4754 = vrcp.pop %v4750
    %v4755 = vmul.f32 %v4732, %v4751
    %v4756 = vmul.f32 %v4734, %v4752
    %v4757 = vmul.f32 %v4736, %v4753
    %v4758 = vmul.f32 %v4738, %v4754
    %v4759 = vpack.c.bf16 %v4755, %v4755
    %v4760 = vpack.c.bf16 %v4756, %v4756
    %v4761 = vpack.c.bf16 %v4757, %v4757
    %v4762 = vpack.c.bf16 %v4758, %v4758
    %v4764 = vsel %vm871, %v4759, 0
    %v4767 = vsel %vm1107, %v4527, 0
    %4769 = vmatprep.subr.bf16.mxu0 0
    %4770 = vmatpush1.bf16.msra.mxu0 %v4767
    %4771 = vmatprep.subr.bf16.mxu0 0
    %4772 = vmatpush1.bf16.msra.mxu0 0
    %4773 = vmatprep.subr.bf16.mxu0 0
    %4774 = vmatpush1.bf16.msra.mxu0 0
    %4775 = vmatprep.subr.bf16.mxu0 0
    %4776 = vmatpush1.bf16.msra.mxu0 0
    %4777 = vmatprep.subr.bf16.mxu0 0
    %4778 = vmatpush1.bf16.msra.mxu0 0
    %4779 = vmatprep.subr.bf16.mxu0 0
    %4780 = vmatpush1.bf16.msra.mxu0 0
    %4781 = vmatprep.subr.bf16.mxu0 0
    %4782 = vmatpush1.bf16.msra.mxu0 0
    %4783 = vmatprep.subr.bf16.mxu0 0
    %4784 = vmatpush1.bf16.msra.mxu0 0
    %4785 = vmatprep.subr.bf16.mxu0 0
    %4786 = vmatpush1.bf16.msra.mxu0 0
    %4787 = vmatprep.subr.bf16.mxu0 0
    %4788 = vmatpush1.bf16.msra.mxu0 0
    %4789 = vmatprep.subr.bf16.mxu0 0
    %4790 = vmatpush1.bf16.msra.mxu0 0
    %4791 = vmatprep.subr.bf16.mxu0 0
    %4792 = vmatpush1.bf16.msra.mxu0 0
    %4793 = vmatprep.subr.bf16.mxu0 0
    %4794 = vmatpush1.bf16.msra.mxu0 0
    %4795 = vmatprep.subr.bf16.mxu0 0
    %4796 = vmatpush1.bf16.msra.mxu0 0
    %4797 = vmatprep.subr.bf16.mxu0 0
    %4798 = vmatpush1.bf16.msra.mxu0 0
    %4799 = vmatprep.subr.bf16.mxu0 0
    %4800 = vmatpush1.bf16.msra.mxu0 0
    %4801 = vmatprep.mubr.bf16.mxu0 0
    %4802 = vmatmul.mubr.bf16.gmra.mrb[0].mxu0 %v4764
    %v4803 = vpop.f32.mrb[0].mxu0
    %v4804 = vadd.f32 0.0, %v4803
    %v4805 = vpop.f32.mrb[0].mxu0
    %v4806 = vpop.f32.mrb[0].mxu0
    %v4807 = vpop.f32.mrb[0].mxu0
    %4808 = vdwg.mxu0
    %v4810 = vsel %vm871, %v4760, 0
    %v4813 = vsel %vm1107, %v4528, 0
    %4815 = vmatprep.subr.bf16.mxu0 0
    %4816 = vmatpush1.bf16.msra.mxu0 %v4813
    %4817 = vmatprep.subr.bf16.mxu0 0
    %4818 = vmatpush1.bf16.msra.mxu0 0
    %4819 = vmatprep.subr.bf16.mxu0 0
    %4820 = vmatpush1.bf16.msra.mxu0 0
    %4821 = vmatprep.subr.bf16.mxu0 0
    %4822 = vmatpush1.bf16.msra.mxu0 0
    %4823 = vmatprep.subr.bf16.mxu0 0
    %4824 = vmatpush1.bf16.msra.mxu0 0
    %4825 = vmatprep.subr.bf16.mxu0 0
    %4826 = vmatpush1.bf16.msra.mxu0 0
    %4827 = vmatprep.subr.bf16.mxu0 0
    %4828 = vmatpush1.bf16.msra.mxu0 0
    %4829 = vmatprep.subr.bf16.mxu0 0
    %4830 = vmatpush1.bf16.msra.mxu0 0
    %4831 = vmatprep.subr.bf16.mxu0 0
    %4832 = vmatpush1.bf16.msra.mxu0 0
    %4833 = vmatprep.subr.bf16.mxu0 0
    %4834 = vmatpush1.bf16.msra.mxu0 0
    %4835 = vmatprep.subr.bf16.mxu0 0
    %4836 = vmatpush1.bf16.msra.mxu0 0
    %4837 = vmatprep.subr.bf16.mxu0 0
    %4838 = vmatpush1.bf16.msra.mxu0 0
    %4839 = vmatprep.subr.bf16.mxu0 0
    %4840 = vmatpush1.bf16.msra.mxu0 0
    %4841 = vmatprep.subr.bf16.mxu0 0
    %4842 = vmatpush1.bf16.msra.mxu0 0
    %4843 = vmatprep.subr.bf16.mxu0 0
    %4844 = vmatpush1.bf16.msra.mxu0 0
    %4845 = vmatprep.subr.bf16.mxu0 0
    %4846 = vmatpush1.bf16.msra.mxu0 0
    %4847 = vmatprep.mubr.bf16.mxu0 0
    %4848 = vmatmul.mubr.bf16.gmra.mrb[0].mxu0 %v4810
    %v4849 = vpop.f32.mrb[0].mxu0
    %v4850 = vadd.f32 0.0, %v4849
    %v4851 = vpop.f32.mrb[0].mxu0
    %v4852 = vpop.f32.mrb[0].mxu0
    %v4853 = vpop.f32.mrb[0].mxu0
    %4854 = vdwg.mxu0
    %v4856 = vsel %vm871, %v4761, 0
    %v4859 = vsel %vm1107, %v4529, 0
    %4861 = vmatprep.subr.bf16.mxu0 0
    %4862 = vmatpush1.bf16.msra.mxu0 %v4859
    %4863 = vmatprep.subr.bf16.mxu0 0
    %4864 = vmatpush1.bf16.msra.mxu0 0
    %4865 = vmatprep.subr.bf16.mxu0 0
    %4866 = vmatpush1.bf16.msra.mxu0 0
    %4867 = vmatprep.subr.bf16.mxu0 0
    %4868 = vmatpush1.bf16.msra.mxu0 0
    %4869 = vmatprep.subr.bf16.mxu0 0
    %4870 = vmatpush1.bf16.msra.mxu0 0
    %4871 = vmatprep.subr.bf16.mxu0 0
    %4872 = vmatpush1.bf16.msra.mxu0 0
    %4873 = vmatprep.subr.bf16.mxu0 0
    %4874 = vmatpush1.bf16.msra.mxu0 0
    %4875 = vmatprep.subr.bf16.mxu0 0
    %4876 = vmatpush1.bf16.msra.mxu0 0
    %4877 = vmatprep.subr.bf16.mxu0 0
    %4878 = vmatpush1.bf16.msra.mxu0 0
    %4879 = vmatprep.subr.bf16.mxu0 0
    %4880 = vmatpush1.bf16.msra.mxu0 0
    %4881 = vmatprep.subr.bf16.mxu0 0
    %4882 = vmatpush1.bf16.msra.mxu0 0
    %4883 = vmatprep.subr.bf16.mxu0 0
    %4884 = vmatpush1.bf16.msra.mxu0 0
    %4885 = vmatprep.subr.bf16.mxu0 0
    %4886 = vmatpush1.bf16.msra.mxu0 0
    %4887 = vmatprep.subr.bf16.mxu0 0
    %4888 = vmatpush1.bf16.msra.mxu0 0
    %4889 = vmatprep.subr.bf16.mxu0 0
    %4890 = vmatpush1.bf16.msra.mxu0 0
    %4891 = vmatprep.subr.bf16.mxu0 0
    %4892 = vmatpush1.bf16.msra.mxu0 0
    %4893 = vmatprep.mubr.bf16.mxu0 0
    %4894 = vmatmul.mubr.bf16.gmra.mrb[0].mxu0 %v4856
    %v4895 = vpop.f32.mrb[0].mxu0
    %v4896 = vadd.f32 0.0, %v4895
    %v4897 = vpop.f32.mrb[0].mxu0
    %v4898 = vpop.f32.mrb[0].mxu0
    %v4899 = vpop.f32.mrb[0].mxu0
    %4900 = vdwg.mxu0
    %v4902 = vsel %vm871, %v4762, 0
    %v4905 = vsel %vm1107, %v4530, 0
    %4907 = vmatprep.subr.bf16.mxu0 0
    %4908 = vmatpush1.bf16.msra.mxu0 %v4905
    %4909 = vmatprep.subr.bf16.mxu0 0
    %4910 = vmatpush1.bf16.msra.mxu0 0
    %4911 = vmatprep.subr.bf16.mxu0 0
    %4912 = vmatpush1.bf16.msra.mxu0 0
    %4913 = vmatprep.subr.bf16.mxu0 0
    %4914 = vmatpush1.bf16.msra.mxu0 0
    %4915 = vmatprep.subr.bf16.mxu0 0
    %4916 = vmatpush1.bf16.msra.mxu0 0
    %4917 = vmatprep.subr.bf16.mxu0 0
    %4918 = vmatpush1.bf16.msra.mxu0 0
    %4919 = vmatprep.subr.bf16.mxu0 0
    %4920 = vmatpush1.bf16.msra.mxu0 0
    %4921 = vmatprep.subr.bf16.mxu0 0
    %4922 = vmatpush1.bf16.msra.mxu0 0
    %4923 = vmatprep.subr.bf16.mxu0 0
    %4924 = vmatpush1.bf16.msra.mxu0 0
    %4925 = vmatprep.subr.bf16.mxu0 0
    %4926 = vmatpush1.bf16.msra.mxu0 0
    %4927 = vmatprep.subr.bf16.mxu0 0
    %4928 = vmatpush1.bf16.msra.mxu0 0
    %4929 = vmatprep.subr.bf16.mxu0 0
    %4930 = vmatpush1.bf16.msra.mxu0 0
    %4931 = vmatprep.subr.bf16.mxu0 0
    %4932 = vmatpush1.bf16.msra.mxu0 0
    %4933 = vmatprep.subr.bf16.mxu0 0
    %4934 = vmatpush1.bf16.msra.mxu0 0
    %4935 = vmatprep.subr.bf16.mxu0 0
    %4936 = vmatpush1.bf16.msra.mxu0 0
    %4937 = vmatprep.subr.bf16.mxu0 0
    %4938 = vmatpush1.bf16.msra.mxu0 0
    %4939 = vmatprep.mubr.bf16.mxu0 0
    %4940 = vmatmul.mubr.bf16.gmra.mrb[0].mxu0 %v4902
    %v4941 = vpop.f32.mrb[0].mxu0
    %v4942 = vadd.f32 0.0, %v4941
    %v4943 = vpop.f32.mrb[0].mxu0
    %v4944 = vpop.f32.mrb[0].mxu0
    %v4945 = vpop.f32.mrb[0].mxu0
    %4946 = vdwg.mxu0
    %v4947 = vpack.c.bf16 %v4804, %v4804
    %v4948 = vpack.c.bf16 %v4850, %v4850
    %v4949 = vpack.c.bf16 %v4896, %v4896
    %v4950 = vpack.c.bf16 %v4942, %v4942
    %v4952 = vsel %vm871, %v4947, 0
    %4954 = vmatprep.subr.bf16.mxu0 0
    %4955 = vmatpush1.bf16.msra.mxu0 %v3837
    %4956 = vmatprep.subr.bf16.mxu0 0
    %4957 = vmatpush1.bf16.msra.mxu0 0
    %4958 = vmatprep.subr.bf16.mxu0 0
    %4959 = vmatpush1.bf16.msra.mxu0 0
    %4960 = vmatprep.subr.bf16.mxu0 0
    %4961 = vmatpush1.bf16.msra.mxu0 0
    %4962 = vmatprep.subr.bf16.mxu0 0
    %4963 = vmatpush1.bf16.msra.mxu0 0
    %4964 = vmatprep.subr.bf16.mxu0 0
    %4965 = vmatpush1.bf16.msra.mxu0 0
    %4966 = vmatprep.subr.bf16.mxu0 0
    %4967 = vmatpush1.bf16.msra.mxu0 0
    %4968 = vmatprep.subr.bf16.mxu0 0
    %4969 = vmatpush1.bf16.msra.mxu0 0
    %4970 = vmatprep.subr.bf16.mxu0 0
    %4971 = vmatpush1.bf16.msra.mxu0 0
    %4972 = vmatprep.subr.bf16.mxu0 0
    %4973 = vmatpush1.bf16.msra.mxu0 0
    %4974 = vmatprep.subr.bf16.mxu0 0
    %4975 = vmatpush1.bf16.msra.mxu0 0
    %4976 = vmatprep.subr.bf16.mxu0 0
    %4977 = vmatpush1.bf16.msra.mxu0 0
    %4978 = vmatprep.subr.bf16.mxu0 0
    %4979 = vmatpush1.bf16.msra.mxu0 0
    %4980 = vmatprep.subr.bf16.mxu0 0
    %4981 = vmatpush1.bf16.msra.mxu0 0
    %4982 = vmatprep.subr.bf16.mxu0 0
    %4983 = vmatpush1.bf16.msra.mxu0 0
    %4984 = vmatprep.subr.bf16.mxu0 0
    %4985 = vmatpush1.bf16.msra.mxu0 0
    %4986 = vmatprep.mubr.bf16.mxu0 0
    %4987 = vmatmul.mubr.bf16.gmra.mrb[0].mxu0 %v4952
    %v4988 = vpop.f32.mrb[0].mxu0
    %v4989 = vadd.f32 0.0, %v4988
    %v4990 = vpop.f32.mrb[0].mxu0
    %v4991 = vpop.f32.mrb[0].mxu0
    %v4992 = vpop.f32.mrb[0].mxu0
    %4993 = vdwg.mxu0
    %v4995 = vsel %vm871, %v4948, 0
    %4997 = vmatprep.subr.bf16.mxu0 0
    %4998 = vmatpush1.bf16.msra.mxu0 %v3883
    %4999 = vmatprep.subr.bf16.mxu0 0
    %5000 = vmatpush1.bf16.msra.mxu0 0
    %5001 = vmatprep.subr.bf16.mxu0 0
    %5002 = vmatpush1.bf16.msra.mxu0 0
    %5003 = vmatprep.subr.bf16.mxu0 0
    %5004 = vmatpush1.bf16.msra.mxu0 0
    %5005 = vmatprep.subr.bf16.mxu0 0
    %5006 = vmatpush1.bf16.msra.mxu0 0
    %5007 = vmatprep.subr.bf16.mxu0 0
    %5008 = vmatpush1.bf16.msra.mxu0 0
    %5009 = vmatprep.subr.bf16.mxu0 0
    %5010 = vmatpush1.bf16.msra.mxu0 0
    %5011 = vmatprep.subr.bf16.mxu0 0
    %5012 = vmatpush1.bf16.msra.mxu0 0
    %5013 = vmatprep.subr.bf16.mxu0 0
    %5014 = vmatpush1.bf16.msra.mxu0 0
    %5015 = vmatprep.subr.bf16.mxu0 0
    %5016 = vmatpush1.bf16.msra.mxu0 0
    %5017 = vmatprep.subr.bf16.mxu0 0
    %5018 = vmatpush1.bf16.msra.mxu0 0
    %5019 = vmatprep.subr.bf16.mxu0 0
    %5020 = vmatpush1.bf16.msra.mxu0 0
    %5021 = vmatprep.subr.bf16.mxu0 0
    %5022 = vmatpush1.bf16.msra.mxu0 0
    %5023 = vmatprep.subr.bf16.mxu0 0
    %5024 = vmatpush1.bf16.msra.mxu0 0
    %5025 = vmatprep.subr.bf16.mxu0 0
    %5026 = vmatpush1.bf16.msra.mxu0 0
    %5027 = vmatprep.subr.bf16.mxu0 0
    %5028 = vmatpush1.bf16.msra.mxu0 0
    %5029 = vmatprep.mubr.bf16.mxu0 0
    %5030 = vmatmul.mubr.bf16.gmra.mrb[0].mxu0 %v4995
    %v5031 = vpop.f32.mrb[0].mxu0
    %v5032 = vadd.f32 0.0, %v5031
    %v5033 = vpop.f32.mrb[0].mxu0
    %v5034 = vpop.f32.mrb[0].mxu0
    %v5035 = vpop.f32.mrb[0].mxu0
    %5036 = vdwg.mxu0
    %v5038 = vsel %vm871, %v4949, 0
    %5040 = vmatprep.subr.bf16.mxu0 0
    %5041 = vmatpush1.bf16.msra.mxu0 %v3929
    %5042 = vmatprep.subr.bf16.mxu0 0
    %5043 = vmatpush1.bf16.msra.mxu0 0
    %5044 = vmatprep.subr.bf16.mxu0 0
    %5045 = vmatpush1.bf16.msra.mxu0 0
    %5046 = vmatprep.subr.bf16.mxu0 0
    %5047 = vmatpush1.bf16.msra.mxu0 0
    %5048 = vmatprep.subr.bf16.mxu0 0
    %5049 = vmatpush1.bf16.msra.mxu0 0
    %5050 = vmatprep.subr.bf16.mxu0 0
    %5051 = vmatpush1.bf16.msra.mxu0 0
    %5052 = vmatprep.subr.bf16.mxu0 0
    %5053 = vmatpush1.bf16.msra.mxu0 0
    %5054 = vmatprep.subr.bf16.mxu0 0
    %5055 = vmatpush1.bf16.msra.mxu0 0
    %5056 = vmatprep.subr.bf16.mxu0 0
    %5057 = vmatpush1.bf16.msra.mxu0 0
    %5058 = vmatprep.subr.bf16.mxu0 0
    %5059 = vmatpush1.bf16.msra.mxu0 0
    %5060 = vmatprep.subr.bf16.mxu0 0
    %5061 = vmatpush1.bf16.msra.mxu0 0
    %5062 = vmatprep.subr.bf16.mxu0 0
    %5063 = vmatpush1.bf16.msra.mxu0 0
    %5064 = vmatprep.subr.bf16.mxu0 0
    %5065 = vmatpush1.bf16.msra.mxu0 0
    %5066 = vmatprep.subr.bf16.mxu0 0
    %5067 = vmatpush1.bf16.msra.mxu0 0
    %5068 = vmatprep.subr.bf16.mxu0 0
    %5069 = vmatpush1.bf16.msra.mxu0 0
    %5070 = vmatprep.subr.bf16.mxu0 0
    %5071 = vmatpush1.bf16.msra.mxu0 0
    %5072 = vmatprep.mubr.bf16.mxu0 0
    %5073 = vmatmul.mubr.bf16.gmra.mrb[0].mxu0 %v5038
    %v5074 = vpop.f32.mrb[0].mxu0
    %v5075 = vadd.f32 0.0, %v5074
    %v5076 = vpop.f32.mrb[0].mxu0
    %v5077 = vpop.f32.mrb[0].mxu0
    %v5078 = vpop.f32.mrb[0].mxu0
    %5079 = vdwg.mxu0
    %v5081 = vsel %vm871, %v4950, 0
    %5083 = vmatprep.subr.bf16.mxu0 0
    %5084 = vmatpush1.bf16.msra.mxu0 %v3975
    %5085 = vmatprep.subr.bf16.mxu0 0
    %5086 = vmatpush1.bf16.msra.mxu0 0
    %5087 = vmatprep.subr.bf16.mxu0 0
    %5088 = vmatpush1.bf16.msra.mxu0 0
    %5089 = vmatprep.subr.bf16.mxu0 0
    %5090 = vmatpush1.bf16.msra.mxu0 0
    %5091 = vmatprep.subr.bf16.mxu0 0
    %5092 = vmatpush1.bf16.msra.mxu0 0
    %5093 = vmatprep.subr.bf16.mxu0 0
    %5094 = vmatpush1.bf16.msra.mxu0 0
    %5095 = vmatprep.subr.bf16.mxu0 0
    %5096 = vmatpush1.bf16.msra.mxu0 0
    %5097 = vmatprep.subr.bf16.mxu0 0
    %5098 = vmatpush1.bf16.msra.mxu0 0
    %5099 = vmatprep.subr.bf16.mxu0 0
    %5100 = vmatpush1.bf16.msra.mxu0 0
    %5101 = vmatprep.subr.bf16.mxu0 0
    %5102 = vmatpush1.bf16.msra.mxu0 0
    %5103 = vmatprep.subr.bf16.mxu0 0
    %5104 = vmatpush1.bf16.msra.mxu0 0
    %5105 = vmatprep.subr.bf16.mxu0 0
    %5106 = vmatpush1.bf16.msra.mxu0 0
    %5107 = vmatprep.subr.bf16.mxu0 0
    %5108 = vmatpush1.bf16.msra.mxu0 0
    %5109 = vmatprep.subr.bf16.mxu0 0
    %5110 = vmatpush1.bf16.msra.mxu0 0
    %5111 = vmatprep.subr.bf16.mxu0 0
    %5112 = vmatpush1.bf16.msra.mxu0 0
    %5113 = vmatprep.subr.bf16.mxu0 0
    %5114 = vmatpush1.bf16.msra.mxu0 0
    %5115 = vmatprep.mubr.bf16.mxu0 0
    %5116 = vmatmul.mubr.bf16.gmra.mrb[0].mxu0 %v5081
    %v5117 = vpop.f32.mrb[0].mxu0
    %v5118 = vadd.f32 0.0, %v5117
    %v5119 = vpop.f32.mrb[0].mxu0
    %v5120 = vpop.f32.mrb[0].mxu0
    %v5121 = vpop.f32.mrb[0].mxu0
    %5122 = vdwg.mxu0
    %v5123 = vsel %vm116, %v4989, 0.0
    %v5124 = vsel %vm116, %v5032, 0.0
    %v5125 = vadd.f32 %v5123, %v5124
    %v5126 = vsel %vm116, %v5075, 0.0
    %v5127 = vadd.f32 %v5125, %v5126
    %v5128 = vsel %vm116, %v5118, 0.0
    %v5129 = vadd.f32 %v5127, %v5128
    %v5130 = vadd.f32 %v5129, %v4027
    %v5131 = vadd.f32 %v2588, %v4028
    %v5132 = vadd.f32 %v2589, %v5130
    %v5133 = vsel %vm116, %v5131, 0.0
    %5134 = vadd.xlane.f32.xlu0 %v5133
    %v5135 = vpop.xlane.xlu0 %5134
    %v5136 = vsel %vm116, %v5132, 0.0
    %5137 = vadd.xlane.f32.xlu0 %v5136
    %v5138 = vpop.xlane.xlu0 %5137
    %v5139 = vmul.f32 %v5135, %v123
    %v5140 = vmul.f32 %v5138, %v123
    %v5141 = vsub.f32 %v5131, %v5139
    %v5142 = vsub.f32 %v5132, %v5140
    %v5143 = vmul.f32 %v5141, %v5141
    %v5144 = vmul.f32 %v5142, %v5142
    %v5145 = vsel %vm116, %v5143, 0.0
    %5146 = vadd.xlane.f32.xlu0 %v5145
    %v5147 = vpop.xlane.xlu0 %5146
    %v5148 = vsel %vm116, %v5144, 0.0
    %5149 = vadd.xlane.f32.xlu0 %v5148
    %v5150 = vpop.xlane.xlu0 %5149
    %v5151 = vmul.f32 %v5147, %v123
    %v5152 = vmul.f32 %v5150, %v123
    %v5153 = vadd.f32 %v5151, 1e-05
    %v5154 = vadd.f32 %v5152, 1e-05
    %v5155 = vrsqrt.pop %v5153
    %v5156 = vrsqrt.pop %v5154
    %v5157 = vmul.f32 %v5141, %v5155
    %v5158 = vmul.f32 %v5142, %v5156
    %v5159 = vld [vmem:[%s3 + $0x4] sm:$0x1]
    %v5160 = vlaneseq
    %v5161 = vshrl.u32 %v5160, 7
    %v5162 = vsub.s32 0, %v5161
    %v5163 = vrot.slane %v5159, %v5162
    %v5164 = vmul.f32 %v5157, %v5163
    %v5165 = vmul.f32 %v5158, %v5163
    %v5166 = vld [vmem:[%s3 + $0x5] sm:$0x1]
    %v5167 = vlaneseq
    %v5168 = vshrl.u32 %v5167, 7
    %v5169 = vsub.s32 0, %v5168
    %v5170 = vrot.slane %v5166, %v5169
    %v5171 = vadd.f32 %v5164, %v5170
    %v5172 = vadd.f32 %v5165, %v5170
    %v5173 = vpack.c.bf16 %v5172, %v5171
    %v5174 = vld [vmem:[%s12] sm:$0xf]
    %v5175 = vld [vmem:[%s12 + $0x4] sm:$0xf]
    %v5176 = vld [vmem:[%s12 + $0x8] sm:$0xf]
    %v5177 = vld [vmem:[%s12 + $0xc] sm:$0xf]
    %v5178 = vld [vmem:[%s3 + $0x8] sm:$0x1]
    %v5179 = vlaneseq
    %v5180 = vshrl.u32 %v5179, 7
    %v5181 = vsub.s32 0, %v5180
    %v5182 = vrot.slane %v5178, %v5181
    %v5187 = vunpack.c.l.b16 %v5174
    %v5188 = vunpack.c.l.b16 %v5175
    %v5189 = vunpack.c.l.b16 %v5176
    %v5190 = vunpack.c.l.b16 %v5177
    %v5191 = vpack.c.b16 %v5188, %v5187
    %v5192 = vpack.c.b16 %v5190, %v5189
    %v5196 = vsel %vm116, %v5173, 0
    %5198 = vmatprep.subr.bf16.mxu0 0
    %5199 = vmatpush1.bf16.msra.mxu0 %v5191
    %5200 = vmatprep.subr.bf16.mxu0 0
    %5201 = vmatpush1.bf16.msra.mxu0 %v5192
    %5202 = vmatprep.subr.bf16.mxu0 0
    %5203 = vmatpush1.bf16.msra.mxu0 0
    %5204 = vmatprep.subr.bf16.mxu0 0
    %5205 = vmatpush1.bf16.msra.mxu0 0
    %5206 = vmatprep.subr.bf16.mxu0 0
    %5207 = vmatpush1.bf16.msra.mxu0 0
    %5208 = vmatprep.subr.bf16.mxu0 0
    %5209 = vmatpush1.bf16.msra.mxu0 0
    %5210 = vmatprep.subr.bf16.mxu0 0
    %5211 = vmatpush1.bf16.msra.mxu0 0
    %5212 = vmatprep.subr.bf16.mxu0 0
    %5213 = vmatpush1.bf16.msra.mxu0 0
    %5214 = vmatprep.subr.bf16.mxu0 0
    %5215 = vmatpush1.bf16.msra.mxu0 0
    %5216 = vmatprep.subr.bf16.mxu0 0
    %5217 = vmatpush1.bf16.msra.mxu0 0
    %5218 = vmatprep.subr.bf16.mxu0 0
    %5219 = vmatpush1.bf16.msra.mxu0 0
    %5220 = vmatprep.subr.bf16.mxu0 0
    %5221 = vmatpush1.bf16.msra.mxu0 0
    %5222 = vmatprep.subr.bf16.mxu0 0
    %5223 = vmatpush1.bf16.msra.mxu0 0
    %5224 = vmatprep.subr.bf16.mxu0 0
    %5225 = vmatpush1.bf16.msra.mxu0 0
    %5226 = vmatprep.subr.bf16.mxu0 0
    %5227 = vmatpush1.bf16.msra.mxu0 0
    %5228 = vmatprep.subr.bf16.mxu0 0
    %5229 = vmatpush1.bf16.msra.mxu0 0
    %5230 = vmatprep.mubr.bf16.mxu0 0
    %5231 = vmatmul.mubr.bf16.gmra.mrb[0].mxu0 %v5196
    %v5232 = vpop.f32.mrb[0].mxu0
    %v5233 = vadd.f32 %v5182, %v5232
    %v5234 = vpop.f32.mrb[0].mxu0
    %v5235 = vpop.f32.mrb[0].mxu0
    %v5236 = vadd.f32 %v5182, %v5235
    %v5237 = vpop.f32.mrb[0].mxu0
    %5238 = vdwg.mxu0
    %v5239 = vmul.f32 %v5233, 0.5
    %v5240 = vmul.f32 %v5236, 0.5
    %v5241 = vmul.f32 %v5233, 0.044715
    %v5242 = vmul.f32 %v5236, 0.044715
    %v5243 = vmul.f32 %v5241, %v5233
    %v5244 = vmul.f32 %v5242, %v5236
    %v5245 = vmul.f32 %v5243, %v5233
    %v5246 = vmul.f32 %v5244, %v5236
    %v5247 = vadd.f32 %v5233, %v5245
    %v5248 = vadd.f32 %v5236, %v5246
    %v5249 = vmul.f32 %v5247, 0.7978846
    %v5250 = vmul.f32 %v5248, 0.7978846
    %v5251 = vtanh.pop %v5249
    %v5252 = vtanh.pop %v5250
    %v5253 = vadd.f32 %v5251, 1.0
    %v5254 = vadd.f32 %v5252, 1.0
    %v5255 = vmul.f32 %v5239, %v5253
    %v5256 = vmul.f32 %v5240, %v5254
    %v5257 = vpack.c.bf16 %v5256, %v5255
    %v5258 = vld [vmem:[%s13] sm:$0xf]
    %v5259 = vld [vmem:[%s13 + $0x4] sm:$0xf]
    %v5260 = vld [vmem:[%s13 + $0x8] sm:$0xf]
    %v5261 = vld [vmem:[%s13 + $0xc] sm:$0xf]
    %v5262 = vld [vmem:[%s13 + $0x10] sm:$0xf]
    %v5263 = vld [vmem:[%s13 + $0x14] sm:$0xf]
    %v5264 = vld [vmem:[%s13 + $0x18] sm:$0xf]
    %v5265 = vld [vmem:[%s13 + $0x1c] sm:$0xf]
    %v5266 = vld [vmem:[%s13 + $0x20] sm:$0xf]
    %v5267 = vld [vmem:[%s13 + $0x24] sm:$0xf]
    %v5268 = vld [vmem:[%s13 + $0x28] sm:$0xf]
    %v5269 = vld [vmem:[%s13 + $0x2c] sm:$0xf]
    %v5270 = vld [vmem:[%s13 + $0x30] sm:$0xf]
    %v5271 = vld [vmem:[%s13 + $0x34] sm:$0xf]
    %v5272 = vld [vmem:[%s13 + $0x38] sm:$0xf]
    %v5273 = vld [vmem:[%s13 + $0x3c] sm:$0xf]
    %v5290 = vunpack.c.l.b16 %v5258
    %v5291 = vunpack.c.l.b16 %v5259
    %v5292 = vunpack.c.l.b16 %v5260
    %v5293 = vunpack.c.l.b16 %v5261
    %v5294 = vunpack.c.l.b16 %v5262
    %v5295 = vunpack.c.l.b16 %v5263
    %v5296 = vunpack.c.l.b16 %v5264
    %v5297 = vunpack.c.l.b16 %v5265
    %v5298 = vunpack.c.l.b16 %v5266
    %v5299 = vunpack.c.l.b16 %v5267
    %v5300 = vunpack.c.l.b16 %v5268
    %v5301 = vunpack.c.l.b16 %v5269
    %v5302 = vunpack.c.l.b16 %v5270
    %v5303 = vunpack.c.l.b16 %v5271
    %v5304 = vunpack.c.l.b16 %v5272
    %v5305 = vunpack.c.l.b16 %v5273
    %v5306 = vpack.c.b16 %v5291, %v5290
    %v5307 = vpack.c.b16 %v5293, %v5292
    %v5308 = vpack.c.b16 %v5295, %v5294
    %v5309 = vpack.c.b16 %v5297, %v5296
    %v5310 = vpack.c.b16 %v5299, %v5298
    %v5311 = vpack.c.b16 %v5301, %v5300
    %v5312 = vpack.c.b16 %v5303, %v5302
    %v5313 = vpack.c.b16 %v5305, %v5304
    %5322 = vmatprep.subr.bf16.mxu0 0
    %5323 = vmatpush1.bf16.msra.mxu0 %v5306
    %5324 = vmatprep.subr.bf16.mxu0 0
    %5325 = vmatpush1.bf16.msra.mxu0 %v5307
    %5326 = vmatprep.subr.bf16.mxu0 0
    %5327 = vmatpush1.bf16.msra.mxu0 %v5308
    %5328 = vmatprep.subr.bf16.mxu0 0
    %5329 = vmatpush1.bf16.msra.mxu0 %v5309
    %5330 = vmatprep.subr.bf16.mxu0 0
    %5331 = vmatpush1.bf16.msra.mxu0 %v5310
    %5332 = vmatprep.subr.bf16.mxu0 0
    %5333 = vmatpush1.bf16.msra.mxu0 %v5311
    %5334 = vmatprep.subr.bf16.mxu0 0
    %5335 = vmatpush1.bf16.msra.mxu0 %v5312
    %5336 = vmatprep.subr.bf16.mxu0 0
    %5337 = vmatpush1.bf16.msra.mxu0 %v5313
    %5338 = vmatprep.subr.bf16.mxu0 0
    %5339 = vmatpush1.bf16.msra.mxu0 0
    %5340 = vmatprep.subr.bf16.mxu0 0
    %5341 = vmatpush1.bf16.msra.mxu0 0
    %5342 = vmatprep.subr.bf16.mxu0 0
    %5343 = vmatpush1.bf16.msra.mxu0 0
    %5344 = vmatprep.subr.bf16.mxu0 0
    %5345 = vmatpush1.bf16.msra.mxu0 0
    %5346 = vmatprep.subr.bf16.mxu0 0
    %5347 = vmatpush1.bf16.msra.mxu0 0
    %5348 = vmatprep.subr.bf16.mxu0 0
    %5349 = vmatpush1.bf16.msra.mxu0 0
    %5350 = vmatprep.subr.bf16.mxu0 0
    %5351 = vmatpush1.bf16.msra.mxu0 0
    %5352 = vmatprep.subr.bf16.mxu0 0
    %5353 = vmatpush1.bf16.msra.mxu0 0
    %5354 = vmatprep.mubr.bf16.mxu0 0
    %5355 = vmatmul.mubr.bf16.gmra.mrb[0].mxu0 %v5257
    %v5356 = vpop.f32.mrb[0].mxu0
    %v5357 = vadd.f32 0.0, %v5356
    %v5358 = vpop.f32.mrb[0].mxu0
    %v5359 = vpop.f32.mrb[0].mxu0
    %v5360 = vadd.f32 0.0, %v5359
    %v5361 = vpop.f32.mrb[0].mxu0
    %5362 = vdwg.mxu0
    %v5363 = vadd.f32 %v5131, %v5357
    %v5364 = vadd.f32 %v5132, %v5360
    %v5365 = vld [vmem:[%s3 + $0x9] sm:$0x1]
    %v5366 = vlaneseq
    %v5367 = vshrl.u32 %v5366, 7
    %v5368 = vsub.s32 0, %v5367
    %v5369 = vrot.slane %v5365, %v5368
    %v5370 = vadd.f32 %v5363, %v5369
    %v5371 = vadd.f32 %v5364, %v5369
    %5372 = vst.msk [vmem:[#allocation2] sm:$0xff] %vm116, %v5370
    %5373 = vst.msk [vmem:[#allocation2 + $0x8] sm:$0xff] %vm116, %v5371
    // Predicated region
    $region58: #{tpu_custom_call.1} parent=1 // pred_check
      _
    $region59: #{tpu_custom_call.1} parent=1 // pred_check_branch
      %5375 = sbr.rel (0) target = $region61
    $region60: #{tpu_custom_call.1} parent=1 // pred_region
      %s5377 = ssub.s32 256, 256
      %5378 = vsyncadd [#allocation3], %s5377
      %s5379 = sshll.u32 [#allocation2], 4
      %s5380 = int_to_ptr.vmem [resolvable:$true] %s5379
      %5385 = dma.vmem_to_hbm [thread:$0]  %s5380, 256, %s14, [#allocation3], 128, 128, 8
    $region61: #{tpu_custom_call.1} parent=1 // pred_fallthru
      _
    // Predicated region
    $region62: #{tpu_custom_call.1} parent=1 // pred_check
      _
    $region63: #{tpu_custom_call.1} parent=1 // pred_check_branch
      %5387 = sbr.rel (0) target = $region65
    $region64: #{tpu_custom_call.1} parent=1 // pred_region
      %5388 = dma.done [#allocation3], 256
    $region65: #{tpu_custom_call.1} parent=1 // pred_fallthru
      _
    %5389 = vsyncpa [#allocation3], 1

</llo_original>
